<compile_context>
chip_gen: v7x
topology: tpu7x:2x2x1
jax: 0.10.0
libtpu: 0.0.40
codegen_flags: <defaults>
</compile_context>

<pallas_src>
import functools

import numpy as np
import jax
import jax.numpy as jnp
from jax import lax
from jax.experimental import pallas as pl
from jax.experimental.pallas import tpu as pltpu

EPS = 1e-5     # nn.InstanceNorm2d default eps
MARGIN = 32    # slack lanes on each side of a flattened padded row (>= wp+1)


# --------------------------------------------------------------------------
# Static geometry / constant selection matrices (built with numpy at trace time)
# --------------------------------------------------------------------------
def _level_geometry(h):
    """Geometry of one level whose conv input is (h x h)."""
    wp = h + 2                  # zero-padded width
    L = wp * wp                 # flattened padded image length
    assert MARGIN >= wp + 1     # every 3x3 tap slice must stay in-bounds
    return dict(h=h, wp=wp, l=L, lpad=L + 2 * MARGIN, lv=L - wp - 1)


def _interior_mask(g):
    """(1, L) mask of valid (non-padding) positions in the flat padded layout."""
    p = np.arange(g["l"])
    hh, ww = p // g["wp"], p % g["wp"]
    m = ((hh >= 1) & (hh <= g["h"]) & (ww >= 1) & (ww <= g["h"]))
    return m.astype(np.float32)[None, :]


def _interior_select(g):
    """(L, H*W) 0/1: flat padded position -> row-major image index."""
    H, wp = g["h"], g["wp"]
    t = np.zeros((g["l"], H * H), np.float32)
    for y in range(H):
        for x in range(H):
            t[(y + 1) * wp + (x + 1), y * H + x] = 1.0
    return t


def _pool_scatter(g_src, g_dst):
    """(Lv_src, L_dst) 0/1: pick 2x2-maxpooled entries and scatter them straight
    into the NEXT level's flat padded interior layout (borders -> exact 0)."""
    Hs = g_src["h"]
    s = np.zeros((g_src["lv"], g_dst["l"]), np.float32)
    for i in range(Hs // 2):
        for j in range(Hs // 2):
            p = (2 * i + 1) * g_src["wp"] + (2 * j + 1)
            q = (i + 1) * g_dst["wp"] + (j + 1)
            s[p, q] = 1.0
    return s


def _pool_select(g_src):
    """(Lv_src, (H/2)*(W/2)) 0/1: pooled entries in row-major order."""
    Hh = g_src["h"] // 2
    s = np.zeros((g_src["lv"], Hh * Hh), np.float32)
    for i in range(Hh):
        for j in range(Hh):
            s[(2 * i + 1) * g_src["wp"] + (2 * j + 1), i * Hh + j] = 1.0
    return s


# --------------------------------------------------------------------------
# Fused encoder kernel (one image per grid step, everything stays in VMEM)
# --------------------------------------------------------------------------
def _make_encoder_kernel(geoms, chans, levels, d_out):
    n_in = 1 + 4 * levels + (levels - 1) + 2
    n_out = levels                      # (levels-1) feature maps + combined tail slab
    hw_last = geoms[-1]["h"] ** 2
    cout_last = chans[-1][1]

    def kernel(*refs):
        in_refs = refs[:n_in]
        out_refs = refs[n_in:n_in + n_out]
        scratch = refs[n_in + n_out:]

        x_ref = in_refs[0]
        idx = 1
        wa, wb, masks, tsel, pools = [], [], [], [], []
        for l in range(levels):
            wa.append(in_refs[idx]); wb.append(in_refs[idx + 1])
            masks.append(in_refs[idx + 2]); tsel.append(in_refs[idx + 3])
            idx += 4
            if l < levels - 1:
                pools.append(in_refs[idx]); idx += 1
        gb_ref, bb_ref = in_refs[idx], in_refs[idx + 1]

        lvl_outs = out_refs[:levels - 1]
        tail_ref = out_refs[levels - 1]           # (1, cout_last*HW_last + D)
        bufB = list(scratch[:levels])             # conv2 inputs, per level
        bufA = list(scratch[levels:])             # conv1 inputs of level l+1 (pooled)

        def conv_in_relu(src, w_ref, maskb, g):
            """Fused 3x3 conv (single dot, K=9*cin) + InstanceNorm + ReLU.
            Returns (cout, L) in flat padded coords with padding positions == 0.
            Margin lanes of `src` may hold arbitrary garbage: they only feed the
            (masked-out) padding-ring outputs and are excluded via jnp.where."""
            wp, L = g["wp"], g["l"]
            taps = []
            for kh in range(3):
                for kw in range(3):
                    d = (kh - 1) * wp + (kw - 1)
                    taps.append(src[:, MARGIN + d:MARGIN + d + L])   # (cin, L)
            xstk = jnp.concatenate(taps, axis=0)                     # (9*cin, L)
            acc = jnp.dot(w_ref[...], xstk,
                          preferred_element_type=jnp.float32)        # (cout, L)
            inv = 1.0 / float(g["h"] * g["h"])
            mu = jnp.sum(jnp.where(maskb, acc, 0.0),
                         axis=1, keepdims=True) * inv                # per-channel mean
            cen = jnp.where(maskb, acc - mu, 0.0)
            var = jnp.sum(cen * cen, axis=1, keepdims=True) * inv    # biased variance
            return jnp.maximum(cen * lax.rsqrt(var + EPS), 0.0)

        def pool_view(a, g):
            """Elementwise max of the 4 shifted slices; pooled values live at the
            (2i+1, 2j+1) padded positions of the returned (cout, Lv) view."""
            wp, lv = g["wp"], g["lv"]
            return jnp.maximum(jnp.maximum(a[:, 0:lv], a[:, 1:1 + lv]),
                               jnp.maximum(a[:, wp:wp + lv], a[:, wp + 1:wp + 1 + lv]))

        cur = x_ref                                                  # (cin0, lpad0)
        for l in range(levels):
            g = geoms[l]
            maskb = masks[l][...] > 0.5
            a = conv_in_relu(cur, wa[l], maskb, g)                   # ConvNormRelu 1
            bufB[l][:, MARGIN:MARGIN + g["l"]] = a                   # margins never needed
            a = conv_in_relu(bufB[l], wb[l], maskb, g)               # ConvNormRelu 2
            asel = jnp.dot(a, tsel[l][...],
                           preferred_element_type=jnp.float32)       # (cout, H*W)
            m = pool_view(a, g)                                      # MaxPool2d(2,2)
            if l < levels - 1:
                lvl_outs[l][...] = asel                              # lane-dense (cout, HW)
                # pooled map scattered straight into the next level's padded interior
                bufA[l][:, MARGIN:MARGIN + geoms[l + 1]["l"]] = jnp.dot(
                    m, pools[l][...], preferred_element_type=jnp.float32)
                cur = bufA[l]
            else:
                # last level: lane-dense combined slab [flattened feature map | bottleneck]
                for c in range(cout_last):
                    tail_ref[:, c * hw_last:(c + 1) * hw_last] = asel[c:c + 1, :]
                # maxpool + NCHW flatten + Linear folded into ONE dot
                m_cat = jnp.concatenate(
                    [m[c:c + 1, :] for c in range(cout_last)], axis=1)   # (1, cout*Lv)
                bvec = jnp.dot(m_cat, gb_ref[...],
                               preferred_element_type=jnp.float32) + bb_ref[...]
                tail_ref[:, cout_last * hw_last:cout_last * hw_last + d_out] = bvec

    return kernel


# --------------------------------------------------------------------------
# Wrapper: single pallas_call for the whole encoder
# --------------------------------------------------------------------------
def encoder_forward(x_nchw, params, levels):
    f32 = jnp.float32
    N, cin0, H0, W0 = x_nchw.shape
    assert H0 == W0

    geoms = [_level_geometry(H0 // 2 ** l) for l in range(levels)]
    chans, cin = [], cin0
    for l in range(levels):
        cout = params["convblock%d" % (l + 1)]["w1"].shape[0]
        chans.append((cin, cout))
        cin = cout
    cout_last = chans[-1][1]
    D = params["bottleneck"]["b"].shape[0]
    hw_last = geoms[-1]["h"] ** 2
    tail_w = cout_last * hw_last + D

    # ---- flatten + pad the input once (tiny; happens before the single kernel)
    g0 = geoms[0]
    xp = jnp.pad(x_nchw.astype(f32), ((0, 0), (0, 0), (1, 1), (1, 1)))
    xflat = jnp.pad(xp.reshape(N, cin0, g0["l"]), ((0, 0), (0, 0), (MARGIN, MARGIN)))

    def _full_spec(shape):
        nd = len(shape)
        return pl.BlockSpec(shape, lambda n, _nd=nd: (0,) * _nd)

    # ---- kernel inputs: conv weights pre-fused to (cout, 9*cin) + constant matrices
    inputs = [xflat]
    in_specs = [pl.BlockSpec((None, cin0, g0["lpad"]), lambda n: (n, 0, 0))]
    for l in range(levels):
        g = geoms[l]
        ci, co = chans[l]
        p = params["convblock%d" % (l + 1)]
        # (cout, cin, 3, 3) -> (cout, 3, 3, cin) -> (cout, 9*cin); column = tap*cin + ci
        wa = jnp.transpose(p["w1"].astype(f32), (0, 2, 3, 1)).reshape(co, 9 * ci)
        wb = jnp.transpose(p["w2"].astype(f32), (0, 2, 3, 1)).reshape(co, 9 * co)
        mask = jnp.asarray(_interior_mask(g))
        tsel = jnp.asarray(_interior_select(g))
        inputs += [wa, wb, mask, tsel]
        in_specs += [_full_spec((co, 9 * ci)), _full_spec((co, 9 * co)),
                     _full_spec((1, g["l"])), _full_spec((g["l"], g["h"] ** 2))]
        if l < levels - 1:
            s = jnp.asarray(_pool_scatter(g, geoms[l + 1]))
            inputs.append(s)
            in_specs.append(_full_spec((g["lv"], geoms[l + 1]["l"])))

    # bottleneck: fold (last maxpool selection + NCHW flatten) into a flat Linear weight
    g_last = geoms[-1]
    hh = g_last["h"] // 2
    sel = jnp.asarray(_pool_select(g_last))                          # (Lv, hh*hh)
    wbot_r = params["bottleneck"]["w"].astype(f32).reshape(D, cout_last, hh * hh)
    gmat = jnp.stack([jnp.dot(sel, wbot_r[:, c, :].T,
                              precision=lax.Precision.HIGHEST)
                      for c in range(cout_last)], axis=0)            # (C, Lv, D)
    gflat = gmat.reshape(cout_last * g_last["lv"], D)                # rows = c*Lv + q
    bbot = params["bottleneck"]["b"].astype(f32).reshape(1, D)
    inputs += [gflat, bbot]
    in_specs += [_full_spec((cout_last * g_last["lv"], D)), _full_spec((1, D))]

    # ---- outputs: per-level lane-dense blocks + one combined lane-dense tail slab
    out_shape = tuple(
        [jax.ShapeDtypeStruct((N, chans[l][1], geoms[l]["h"] ** 2), f32)
         for l in range(levels - 1)]
        + [jax.ShapeDtypeStruct((N, 1, tail_w), f32)])
    out_specs = (
        [pl.BlockSpec((None, chans[l][1], geoms[l]["h"] ** 2),
                      lambda n: (n, 0, 0)) for l in range(levels - 1)]
        + [pl.BlockSpec((None, 1, tail_w), lambda n: (n, 0, 0))])

    # ---- VMEM scratch: flat padded activations (never zero-initialized; margins
    #      may hold garbage, which is harmless thanks to the jnp.where statistics)
    scratch = [pltpu.VMEM((chans[l][1], geoms[l]["lpad"]), f32)
               for l in range(levels)]
    scratch += [pltpu.VMEM((chans[l][1], geoms[l + 1]["lpad"]), f32)
                for l in range(levels - 1)]

    outs = pl.pallas_call(
        _make_encoder_kernel(geoms, chans, levels, D),
        out_shape=out_shape,
        grid_spec=pltpu.PrefetchScalarGridSpec(
            num_scalar_prefetch=0,
            grid=(N,),
            in_specs=in_specs,
            out_specs=out_specs,
            scratch_shapes=scratch),
        compiler_params=pltpu.CompilerParams(
            dimension_semantics=("parallel",)),
    )(*inputs)

    encoder_outputs = [
        outs[l].reshape(N, chans[l][1], geoms[l]["h"], geoms[l]["h"])
        for l in range(levels - 1)]
    tail = outs[levels - 1]
    encoder_outputs.append(
        tail[:, 0, :cout_last * hw_last].reshape(
            N, cout_last, geoms[-1]["h"], geoms[-1]["h"]))
    bottleneck_out = tail[:, 0, cout_last * hw_last:]
    return encoder_outputs, bottleneck_out


# --------------------------------------------------------------------------
# Pure-JAX reference of the PyTorch module (validation only)
# --------------------------------------------------------------------------
def encoder_reference(x, params, levels):
    hi = lax.Precision.HIGHEST
    h = x.astype(jnp.float32)
    outs = []
    for i in range(levels):
        p = params["convblock%d" % (i + 1)]
        for w, b in ((p["w1"], p["b1"]), (p["w2"], p["b2"])):
            h = lax.conv_general_dilated(
                h, w.astype(jnp.float32), (1, 1), ((1, 1), (1, 1)),
                dimension_numbers=("NCHW", "OIHW", "NCHW"), precision=hi)
            h = h + b[None, :, None, None]
            mu = jnp.mean(h, axis=(2, 3), keepdims=True)
            var = jnp.mean(jnp.square(h - mu), axis=(2, 3), keepdims=True)
            h = jnp.maximum((h - mu) * lax.rsqrt(var + EPS), 0.0)
        outs.append(h)
        n, c, hh, ww = h.shape
        h = jnp.max(h.reshape(n, c, hh // 2, 2, ww // 2, 2), axis=(3, 5))
    flat = h.reshape(h.shape[0], -1)
    out = jnp.dot(flat, params["bottleneck"]["w"].T.astype(jnp.float32),
                  precision=hi) + params["bottleneck"]["b"]
    return outs, out


# --------------------------------------------------------------------------
# Deterministic parameter init (shapes follow Encoder.__init__)
# --------------------------------------------------------------------------
def init_params(key, in_channels, feature_maps, levels, input_size, bottleneck_dim):
    params = {}
    cin = in_channels
    for i in range(levels):
        cout = feature_maps // 2 ** i
        key, k1, k2, k3, k4 = jax.random.split(key, 5)
        params["convblock%d" % (i + 1)] = dict(
            w1=0.1 * jax.random.normal(k1, (cout, cin, 3, 3), jnp.float32),
            b1=0.1 * jax.random.normal(k2, (cout,), jnp.float32),
            w2=0.1 * jax.random.normal(k3, (cout, cout, 3, 3), jnp.float32),
            b2=0.1 * jax.random.normal(k4, (cout,), jnp.float32),
        )
        cin = cout
    f_in = (feature_maps // 2 ** (levels - 1)
            * (input_size // 2 ** (levels - 1)) ** 2)
    key, k1, k2 = jax.random.split(key, 3)
    params["bottleneck"] = dict(
        w=0.1 * jax.random.normal(k1, (2 * bottleneck_dim, f_in), jnp.float32),
        b=0.1 * jax.random.normal(k2, (2 * bottleneck_dim,), jnp.float32),
    )
    return params


if __name__ == "__main__":
    INPUT_SIZE = 8      # module arg; actual spatial input is 2*input_size (see note)
    LEVELS = 2
    FEATURE_MAPS = 8
    IN_CHANNELS = 1
    BOTTLENECK_DIM = 2

    key = jax.random.PRNGKey(0)
    key, kx = jax.random.split(key)
    x = jax.random.normal(kx, (2, IN_CHANNELS, 2 * INPUT_SIZE, 2 * INPUT_SIZE),
                          jnp.float32)

    params = init_params(key, IN_CHANNELS, FEATURE_MAPS, LEVELS,
                         INPUT_SIZE, BOTTLENECK_DIM)

    fwd = jax.jit(functools.partial(encoder_forward, levels=LEVELS))
    encoder_outputs, bottleneck_out = fwd(x, params)
    jax.block_until_ready(encoder_outputs)
    jax.block_until_ready(bottleneck_out)

    assert encoder_outputs[0].shape == (2, FEATURE_MAPS, 16, 16)
    assert encoder_outputs[1].shape == (2, FEATURE_MAPS // 2, 8, 8)
    assert bottleneck_out.shape == (2, 2 * BOTTLENECK_DIM)

    # numerical check against a pure-JAX replica of the PyTorch forward
    ref_enc, ref_b = jax.jit(functools.partial(encoder_reference, levels=LEVELS))(
        x, params)
    for got, ref in zip(encoder_outputs, ref_enc):
        assert jnp.allclose(got, ref, atol=1e-2, rtol=1e-2), \
            float(jnp.max(jnp.abs(got - ref)))
    assert jnp.allclose(bottleneck_out, ref_b, atol=1e-2, rtol=1e-2), \
        float(jnp.max(jnp.abs(bottleneck_out - ref_b)))

    print("KERNEL_OK")
</pallas_src>

<mosaic_0001>
module attributes {stable_mosaic.version = 11 : i64} {
  func.func @kernel(%arg0: i32, %arg1: memref<1x1x388xf32, #tpu.memory_space<vmem>>, %arg2: memref<8x9xf32, #tpu.memory_space<vmem>>, %arg3: memref<8x72xf32, #tpu.memory_space<vmem>>, %arg4: memref<1x324xf32, #tpu.memory_space<vmem>>, %arg5: memref<324x256xf32, #tpu.memory_space<vmem>>, %arg6: memref<305x100xf32, #tpu.memory_space<vmem>>, %arg7: memref<4x72xf32, #tpu.memory_space<vmem>>, %arg8: memref<4x36xf32, #tpu.memory_space<vmem>>, %arg9: memref<1x100xf32, #tpu.memory_space<vmem>>, %arg10: memref<100x64xf32, #tpu.memory_space<vmem>>, %arg11: memref<356x4xf32, #tpu.memory_space<vmem>>, %arg12: memref<1x4xf32, #tpu.memory_space<vmem>>, %arg13: memref<1x8x256xf32, #tpu.memory_space<vmem>>, %arg14: memref<1x1x260xf32, #tpu.memory_space<vmem>>, %arg15: memref<8x388xf32, #tpu.memory_space<vmem>>, %arg16: memref<4x164xf32, #tpu.memory_space<vmem>>, %arg17: memref<8x164xf32, #tpu.memory_space<vmem>>) attributes {dimension_semantics = [#tpu.dimension_semantics<parallel>], iteration_bounds = array<i64: 2>, scalar_prefetch = 0 : i64, scratch_operands = 3 : i64, tpu.core_type = #tpu.core_type<tc>, window_params = [{transform_indices = @transform_0, window_bounds = array<i64: 1, 1, 388>}, {pipeline_mode = #tpu.pipeline_mode<synchronous>, transform_indices = @transform_1, window_bounds = array<i64: 8, 9>}, {pipeline_mode = #tpu.pipeline_mode<synchronous>, transform_indices = @transform_2, window_bounds = array<i64: 8, 72>}, {pipeline_mode = #tpu.pipeline_mode<synchronous>, transform_indices = @transform_3, window_bounds = array<i64: 1, 324>}, {pipeline_mode = #tpu.pipeline_mode<synchronous>, transform_indices = @transform_4, window_bounds = array<i64: 324, 256>}, {pipeline_mode = #tpu.pipeline_mode<synchronous>, transform_indices = @transform_5, window_bounds = array<i64: 305, 100>}, {pipeline_mode = #tpu.pipeline_mode<synchronous>, transform_indices = @transform_6, window_bounds = array<i64: 4, 72>}, {pipeline_mode = #tpu.pipeline_mode<synchronous>, transform_indices = @transform_7, window_bounds = array<i64: 4, 36>}, {pipeline_mode = #tpu.pipeline_mode<synchronous>, transform_indices = @transform_8, window_bounds = array<i64: 1, 100>}, {pipeline_mode = #tpu.pipeline_mode<synchronous>, transform_indices = @transform_9, window_bounds = array<i64: 100, 64>}, {pipeline_mode = #tpu.pipeline_mode<synchronous>, transform_indices = @transform_10, window_bounds = array<i64: 356, 4>}, {pipeline_mode = #tpu.pipeline_mode<synchronous>, transform_indices = @transform_11, window_bounds = array<i64: 1, 4>}, {transform_indices = @transform_12, window_bounds = array<i64: 1, 8, 256>}, {transform_indices = @transform_13, window_bounds = array<i64: 1, 1, 260>}]} {
    %c0 = arith.constant 0 : index
    %c0_0 = arith.constant 0 : index
    %0 = vector.load %arg4[%c0, %c0_0] : memref<1x324xf32, #tpu.memory_space<vmem>>, vector<1x324xf32>
    %cst = arith.constant 5.000000e-01 : f32
    %1 = vector.broadcast %cst : f32 to vector<1x324xf32>
    %2 = arith.cmpf ogt, %0, %1 : vector<1x324xf32>
    %c0_1 = arith.constant 0 : index
    %c0_2 = arith.constant 0 : index
    %c13 = arith.constant 13 : index
    %3 = vector.load %arg1[%c0_1, %c0_2, %c13] : memref<1x1x388xf32, #tpu.memory_space<vmem>>, vector<1x1x324xf32>
    %4 = vector.shape_cast %3 : vector<1x1x324xf32> to vector<1x324xf32>
    %c0_3 = arith.constant 0 : index
    %c0_4 = arith.constant 0 : index
    %c14 = arith.constant 14 : index
    %5 = vector.load %arg1[%c0_3, %c0_4, %c14] : memref<1x1x388xf32, #tpu.memory_space<vmem>>, vector<1x1x324xf32>
    %6 = vector.shape_cast %5 : vector<1x1x324xf32> to vector<1x324xf32>
    %c0_5 = arith.constant 0 : index
    %c0_6 = arith.constant 0 : index
    %c15 = arith.constant 15 : index
    %7 = vector.load %arg1[%c0_5, %c0_6, %c15] : memref<1x1x388xf32, #tpu.memory_space<vmem>>, vector<1x1x324xf32>
    %8 = vector.shape_cast %7 : vector<1x1x324xf32> to vector<1x324xf32>
    %c0_7 = arith.constant 0 : index
    %c0_8 = arith.constant 0 : index
    %c31 = arith.constant 31 : index
    %9 = vector.load %arg1[%c0_7, %c0_8, %c31] : memref<1x1x388xf32, #tpu.memory_space<vmem>>, vector<1x1x324xf32>
    %10 = vector.shape_cast %9 : vector<1x1x324xf32> to vector<1x324xf32>
    %c0_9 = arith.constant 0 : index
    %c0_10 = arith.constant 0 : index
    %c32 = arith.constant 32 : index
    %11 = vector.load %arg1[%c0_9, %c0_10, %c32] : memref<1x1x388xf32, #tpu.memory_space<vmem>>, vector<1x1x324xf32>
    %12 = vector.shape_cast %11 : vector<1x1x324xf32> to vector<1x324xf32>
    %c0_11 = arith.constant 0 : index
    %c0_12 = arith.constant 0 : index
    %c33 = arith.constant 33 : index
    %13 = vector.load %arg1[%c0_11, %c0_12, %c33] : memref<1x1x388xf32, #tpu.memory_space<vmem>>, vector<1x1x324xf32>
    %14 = vector.shape_cast %13 : vector<1x1x324xf32> to vector<1x324xf32>
    %c0_13 = arith.constant 0 : index
    %c0_14 = arith.constant 0 : index
    %c49 = arith.constant 49 : index
    %15 = vector.load %arg1[%c0_13, %c0_14, %c49] : memref<1x1x388xf32, #tpu.memory_space<vmem>>, vector<1x1x324xf32>
    %16 = vector.shape_cast %15 : vector<1x1x324xf32> to vector<1x324xf32>
    %c0_15 = arith.constant 0 : index
    %c0_16 = arith.constant 0 : index
    %c50 = arith.constant 50 : index
    %17 = vector.load %arg1[%c0_15, %c0_16, %c50] : memref<1x1x388xf32, #tpu.memory_space<vmem>>, vector<1x1x324xf32>
    %18 = vector.shape_cast %17 : vector<1x1x324xf32> to vector<1x324xf32>
    %c0_17 = arith.constant 0 : index
    %c0_18 = arith.constant 0 : index
    %c51 = arith.constant 51 : index
    %19 = vector.load %arg1[%c0_17, %c0_18, %c51] : memref<1x1x388xf32, #tpu.memory_space<vmem>>, vector<1x1x324xf32>
    %20 = vector.shape_cast %19 : vector<1x1x324xf32> to vector<1x324xf32>
    %21 = tpu.concatenate %4, %6, %8, %10, %12, %14, %16, %18, %20 in 0 : vector<1x324xf32>, vector<1x324xf32>, vector<1x324xf32>, vector<1x324xf32>, vector<1x324xf32>, vector<1x324xf32>, vector<1x324xf32>, vector<1x324xf32>, vector<1x324xf32> -> vector<9x324xf32>
    %c0_19 = arith.constant 0 : index
    %c0_20 = arith.constant 0 : index
    %22 = vector.load %arg2[%c0_19, %c0_20] : memref<8x9xf32, #tpu.memory_space<vmem>>, vector<8x9xf32>
    %cst_21 = arith.constant dense<0.000000e+00> : vector<8x324xf32>
    %23 = tpu.matmul %22, %21, %cst_21 {dimension_numbers = #tpu.dot_dimension_numbers<[1], [0], [0], [1], [0, 0, 1, 1], [], []>} : vector<8x9xf32>, vector<9x324xf32>, vector<8x324xf32> -> vector<8x324xf32>
    %cst_22 = arith.constant 0.000000e+00 : f32
    %24 = vector.shape_cast %2 : vector<1x324xi1> to vector<1x324xi1>
    %25 = vector.broadcast %24 : vector<1x324xi1> to vector<8x324xi1>
    %26 = vector.broadcast %cst_22 : f32 to vector<8x324xf32>
    %27 = arith.select %25, %23, %26 : vector<8x324xi1>, vector<8x324xf32>
    %cst_23 = arith.constant dense<0.000000e+00> : vector<8xf32>
    %28 = vector.multi_reduction <add>, %27, %cst_23 [1] : vector<8x324xf32> to vector<8xf32>
    %29 = vector.shape_cast %28 : vector<8xf32> to vector<8x1xf32>
    %cst_24 = arith.constant 3.906250e-03 : f32
    %30 = vector.broadcast %cst_24 : f32 to vector<8x1xf32>
    %31 = arith.mulf %29, %30 : vector<8x1xf32>
    %32 = vector.broadcast %31 : vector<8x1xf32> to vector<8x324xf32>
    %33 = arith.subf %23, %32 : vector<8x324xf32>
    %cst_25 = arith.constant 0.000000e+00 : f32
    %34 = vector.shape_cast %2 : vector<1x324xi1> to vector<1x324xi1>
    %35 = vector.broadcast %34 : vector<1x324xi1> to vector<8x324xi1>
    %36 = vector.broadcast %cst_25 : f32 to vector<8x324xf32>
    %37 = arith.select %35, %33, %36 : vector<8x324xi1>, vector<8x324xf32>
    %38 = arith.mulf %37, %37 : vector<8x324xf32>
    %cst_26 = arith.constant dense<0.000000e+00> : vector<8xf32>
    %39 = vector.multi_reduction <add>, %38, %cst_26 [1] : vector<8x324xf32> to vector<8xf32>
    %40 = vector.shape_cast %39 : vector<8xf32> to vector<8x1xf32>
    %cst_27 = arith.constant 3.906250e-03 : f32
    %41 = vector.broadcast %cst_27 : f32 to vector<8x1xf32>
    %42 = arith.mulf %40, %41 : vector<8x1xf32>
    %cst_28 = arith.constant 9.99999974E-6 : f32
    %43 = vector.broadcast %cst_28 : f32 to vector<8x1xf32>
    %44 = arith.addf %42, %43 : vector<8x1xf32>
    %45 = math.rsqrt %44 : vector<8x1xf32>
    %46 = vector.broadcast %45 : vector<8x1xf32> to vector<8x324xf32>
    %47 = arith.mulf %37, %46 : vector<8x324xf32>
    %cst_29 = arith.constant 0.000000e+00 : f32
    %48 = vector.broadcast %cst_29 : f32 to vector<8x324xf32>
    %49 = arith.maximumf %47, %48 : vector<8x324xf32>
    %c0_30 = arith.constant 0 : index
    %c32_31 = arith.constant 32 : index
    %50 = vector.load %arg15[%c0_30, %c32_31] : memref<8x388xf32, #tpu.memory_space<vmem>>, vector<8x324xf32>
    tpu.vector_store %arg15[%c0_30, %c32_31], %49 {strides = array<i32>} : memref<8x388xf32, #tpu.memory_space<vmem>>, vector<8x324xf32>,
    %c0_32 = arith.constant 0 : index
    %c13_33 = arith.constant 13 : index
    %51 = vector.load %arg15[%c0_32, %c13_33] : memref<8x388xf32, #tpu.memory_space<vmem>>, vector<8x324xf32>
    %c0_34 = arith.constant 0 : index
    %c14_35 = arith.constant 14 : index
    %52 = vector.load %arg15[%c0_34, %c14_35] : memref<8x388xf32, #tpu.memory_space<vmem>>, vector<8x324xf32>
    %c0_36 = arith.constant 0 : index
    %c15_37 = arith.constant 15 : index
    %53 = vector.load %arg15[%c0_36, %c15_37] : memref<8x388xf32, #tpu.memory_space<vmem>>, vector<8x324xf32>
    %c0_38 = arith.constant 0 : index
    %c31_39 = arith.constant 31 : index
    %54 = vector.load %arg15[%c0_38, %c31_39] : memref<8x388xf32, #tpu.memory_space<vmem>>, vector<8x324xf32>
    %c0_40 = arith.constant 0 : index
    %c32_41 = arith.constant 32 : index
    %55 = vector.load %arg15[%c0_40, %c32_41] : memref<8x388xf32, #tpu.memory_space<vmem>>, vector<8x324xf32>
    %c0_42 = arith.constant 0 : index
    %c33_43 = arith.constant 33 : index
    %56 = vector.load %arg15[%c0_42, %c33_43] : memref<8x388xf32, #tpu.memory_space<vmem>>, vector<8x324xf32>
    %c0_44 = arith.constant 0 : index
    %c49_45 = arith.constant 49 : index
    %57 = vector.load %arg15[%c0_44, %c49_45] : memref<8x388xf32, #tpu.memory_space<vmem>>, vector<8x324xf32>
    %c0_46 = arith.constant 0 : index
    %c50_47 = arith.constant 50 : index
    %58 = vector.load %arg15[%c0_46, %c50_47] : memref<8x388xf32, #tpu.memory_space<vmem>>, vector<8x324xf32>
    %c0_48 = arith.constant 0 : index
    %c51_49 = arith.constant 51 : index
    %59 = vector.load %arg15[%c0_48, %c51_49] : memref<8x388xf32, #tpu.memory_space<vmem>>, vector<8x324xf32>
    %60 = tpu.concatenate %51, %52, %53, %54, %55, %56, %57, %58, %59 in 0 : vector<8x324xf32>, vector<8x324xf32>, vector<8x324xf32>, vector<8x324xf32>, vector<8x324xf32>, vector<8x324xf32>, vector<8x324xf32>, vector<8x324xf32>, vector<8x324xf32> -> vector<72x324xf32>
    %c0_50 = arith.constant 0 : index
    %c0_51 = arith.constant 0 : index
    %61 = vector.load %arg3[%c0_50, %c0_51] : memref<8x72xf32, #tpu.memory_space<vmem>>, vector<8x72xf32>
    %cst_52 = arith.constant dense<0.000000e+00> : vector<8x324xf32>
    %62 = tpu.matmul %61, %60, %cst_52 {dimension_numbers = #tpu.dot_dimension_numbers<[1], [0], [0], [1], [0, 0, 1, 1], [], []>} : vector<8x72xf32>, vector<72x324xf32>, vector<8x324xf32> -> vector<8x324xf32>
    %cst_53 = arith.constant 0.000000e+00 : f32
    %63 = vector.shape_cast %2 : vector<1x324xi1> to vector<1x324xi1>
    %64 = vector.broadcast %63 : vector<1x324xi1> to vector<8x324xi1>
    %65 = vector.broadcast %cst_53 : f32 to vector<8x324xf32>
    %66 = arith.select %64, %62, %65 : vector<8x324xi1>, vector<8x324xf32>
    %cst_54 = arith.constant dense<0.000000e+00> : vector<8xf32>
    %67 = vector.multi_reduction <add>, %66, %cst_54 [1] : vector<8x324xf32> to vector<8xf32>
    %68 = vector.shape_cast %67 : vector<8xf32> to vector<8x1xf32>
    %cst_55 = arith.constant 3.906250e-03 : f32
    %69 = vector.broadcast %cst_55 : f32 to vector<8x1xf32>
    %70 = arith.mulf %68, %69 : vector<8x1xf32>
    %71 = vector.broadcast %70 : vector<8x1xf32> to vector<8x324xf32>
    %72 = arith.subf %62, %71 : vector<8x324xf32>
    %cst_56 = arith.constant 0.000000e+00 : f32
    %73 = vector.shape_cast %2 : vector<1x324xi1> to vector<1x324xi1>
    %74 = vector.broadcast %73 : vector<1x324xi1> to vector<8x324xi1>
    %75 = vector.broadcast %cst_56 : f32 to vector<8x324xf32>
    %76 = arith.select %74, %72, %75 : vector<8x324xi1>, vector<8x324xf32>
    %77 = arith.mulf %76, %76 : vector<8x324xf32>
    %cst_57 = arith.constant dense<0.000000e+00> : vector<8xf32>
    %78 = vector.multi_reduction <add>, %77, %cst_57 [1] : vector<8x324xf32> to vector<8xf32>
    %79 = vector.shape_cast %78 : vector<8xf32> to vector<8x1xf32>
    %cst_58 = arith.constant 3.906250e-03 : f32
    %80 = vector.broadcast %cst_58 : f32 to vector<8x1xf32>
    %81 = arith.mulf %79, %80 : vector<8x1xf32>
    %cst_59 = arith.constant 9.99999974E-6 : f32
    %82 = vector.broadcast %cst_59 : f32 to vector<8x1xf32>
    %83 = arith.addf %81, %82 : vector<8x1xf32>
    %84 = math.rsqrt %83 : vector<8x1xf32>
    %85 = vector.broadcast %84 : vector<8x1xf32> to vector<8x324xf32>
    %86 = arith.mulf %76, %85 : vector<8x324xf32>
    %cst_60 = arith.constant 0.000000e+00 : f32
    %87 = vector.broadcast %cst_60 : f32 to vector<8x324xf32>
    %88 = arith.maximumf %86, %87 : vector<8x324xf32>
    %c0_61 = arith.constant 0 : index
    %c0_62 = arith.constant 0 : index
    %89 = vector.load %arg5[%c0_61, %c0_62] : memref<324x256xf32, #tpu.memory_space<vmem>>, vector<324x256xf32>
    %cst_63 = arith.constant dense<0.000000e+00> : vector<8x256xf32>
    %90 = tpu.matmul %88, %89, %cst_63 {dimension_numbers = #tpu.dot_dimension_numbers<[1], [0], [0], [1], [0, 0, 1, 1], [], []>} : vector<8x324xf32>, vector<324x256xf32>, vector<8x256xf32> -> vector<8x256xf32>
    %91 = vector.extract_strided_slice %88 {offsets = [0, 0], sizes = [8, 305], strides = [1, 1]} : vector<8x324xf32> to vector<8x305xf32>
    %92 = vector.extract_strided_slice %88 {offsets = [0, 1], sizes = [8, 305], strides = [1, 1]} : vector<8x324xf32> to vector<8x305xf32>
    %93 = arith.maximumf %91, %92 : vector<8x305xf32>
    %94 = vector.extract_strided_slice %88 {offsets = [0, 18], sizes = [8, 305], strides = [1, 1]} : vector<8x324xf32> to vector<8x305xf32>
    %95 = vector.extract_strided_slice %88 {offsets = [0, 19], sizes = [8, 305], strides = [1, 1]} : vector<8x324xf32> to vector<8x305xf32>
    %96 = arith.maximumf %94, %95 : vector<8x305xf32>
    %97 = arith.maximumf %93, %96 : vector<8x305xf32>
    %c0_64 = arith.constant 0 : index
    %c0_65 = arith.constant 0 : index
    %c0_66 = arith.constant 0 : index
    %98 = vector.load %arg13[%c0_64, %c0_65, %c0_66] : memref<1x8x256xf32, #tpu.memory_space<vmem>>, vector<1x8x256xf32>
    %99 = vector.shape_cast %98 : vector<1x8x256xf32> to vector<8x256xf32>
    %100 = vector.shape_cast %90 : vector<8x256xf32> to vector<1x8x256xf32>
    tpu.vector_store %arg13[%c0_64, %c0_65, %c0_66], %100 {strides = array<i32>} : memref<1x8x256xf32, #tpu.memory_space<vmem>>, vector<1x8x256xf32>,
    %c0_67 = arith.constant 0 : index
    %c0_68 = arith.constant 0 : index
    %101 = vector.load %arg6[%c0_67, %c0_68] : memref<305x100xf32, #tpu.memory_space<vmem>>, vector<305x100xf32>
    %cst_69 = arith.constant dense<0.000000e+00> : vector<8x100xf32>
    %102 = tpu.matmul %97, %101, %cst_69 {dimension_numbers = #tpu.dot_dimension_numbers<[1], [0], [0], [1], [0, 0, 1, 1], [], []>} : vector<8x305xf32>, vector<305x100xf32>, vector<8x100xf32> -> vector<8x100xf32>
    %c0_70 = arith.constant 0 : index
    %c32_71 = arith.constant 32 : index
    %103 = vector.load %arg17[%c0_70, %c32_71] : memref<8x164xf32, #tpu.memory_space<vmem>>, vector<8x100xf32>
    tpu.vector_store %arg17[%c0_70, %c32_71], %102 {strides = array<i32>} : memref<8x164xf32, #tpu.memory_space<vmem>>, vector<8x100xf32>,
    %c0_72 = arith.constant 0 : index
    %c0_73 = arith.constant 0 : index
    %104 = vector.load %arg9[%c0_72, %c0_73] : memref<1x100xf32, #tpu.memory_space<vmem>>, vector<1x100xf32>
    %cst_74 = arith.constant 5.000000e-01 : f32
    %105 = vector.broadcast %cst_74 : f32 to vector<1x100xf32>
    %106 = arith.cmpf ogt, %104, %105 : vector<1x100xf32>
    %c0_75 = arith.constant 0 : index
    %c21 = arith.constant 21 : index
    %107 = vector.load %arg17[%c0_75, %c21] : memref<8x164xf32, #tpu.memory_space<vmem>>, vector<8x100xf32>
    %c0_76 = arith.constant 0 : index
    %c22 = arith.constant 22 : index
    %108 = vector.load %arg17[%c0_76, %c22] : memref<8x164xf32, #tpu.memory_space<vmem>>, vector<8x100xf32>
    %c0_77 = arith.constant 0 : index
    %c23 = arith.constant 23 : index
    %109 = vector.load %arg17[%c0_77, %c23] : memref<8x164xf32, #tpu.memory_space<vmem>>, vector<8x100xf32>
    %c0_78 = arith.constant 0 : index
    %c31_79 = arith.constant 31 : index
    %110 = vector.load %arg17[%c0_78, %c31_79] : memref<8x164xf32, #tpu.memory_space<vmem>>, vector<8x100xf32>
    %c0_80 = arith.constant 0 : index
    %c32_81 = arith.constant 32 : index
    %111 = vector.load %arg17[%c0_80, %c32_81] : memref<8x164xf32, #tpu.memory_space<vmem>>, vector<8x100xf32>
    %c0_82 = arith.constant 0 : index
    %c33_83 = arith.constant 33 : index
    %112 = vector.load %arg17[%c0_82, %c33_83] : memref<8x164xf32, #tpu.memory_space<vmem>>, vector<8x100xf32>
    %c0_84 = arith.constant 0 : index
    %c41 = arith.constant 41 : index
    %113 = vector.load %arg17[%c0_84, %c41] : memref<8x164xf32, #tpu.memory_space<vmem>>, vector<8x100xf32>
    %c0_85 = arith.constant 0 : index
    %c42 = arith.constant 42 : index
    %114 = vector.load %arg17[%c0_85, %c42] : memref<8x164xf32, #tpu.memory_space<vmem>>, vector<8x100xf32>
    %c0_86 = arith.constant 0 : index
    %c43 = arith.constant 43 : index
    %115 = vector.load %arg17[%c0_86, %c43] : memref<8x164xf32, #tpu.memory_space<vmem>>, vector<8x100xf32>
    %116 = tpu.concatenate %107, %108, %109, %110, %111, %112, %113, %114, %115 in 0 : vector<8x100xf32>, vector<8x100xf32>, vector<8x100xf32>, vector<8x100xf32>, vector<8x100xf32>, vector<8x100xf32>, vector<8x100xf32>, vector<8x100xf32>, vector<8x100xf32> -> vector<72x100xf32>
    %c0_87 = arith.constant 0 : index
    %c0_88 = arith.constant 0 : index
    %117 = vector.load %arg7[%c0_87, %c0_88] : memref<4x72xf32, #tpu.memory_space<vmem>>, vector<4x72xf32>
    %cst_89 = arith.constant dense<0.000000e+00> : vector<4x100xf32>
    %118 = tpu.matmul %117, %116, %cst_89 {dimension_numbers = #tpu.dot_dimension_numbers<[1], [0], [0], [1], [0, 0, 1, 1], [], []>} : vector<4x72xf32>, vector<72x100xf32>, vector<4x100xf32> -> vector<4x100xf32>
    %cst_90 = arith.constant 0.000000e+00 : f32
    %119 = vector.shape_cast %106 : vector<1x100xi1> to vector<1x100xi1>
    %120 = vector.broadcast %119 : vector<1x100xi1> to vector<4x100xi1>
    %121 = vector.broadcast %cst_90 : f32 to vector<4x100xf32>
    %122 = arith.select %120, %118, %121 : vector<4x100xi1>, vector<4x100xf32>
    %cst_91 = arith.constant dense<0.000000e+00> : vector<4xf32>
    %123 = vector.multi_reduction <add>, %122, %cst_91 [1] : vector<4x100xf32> to vector<4xf32>
    %124 = vector.shape_cast %123 : vector<4xf32> to vector<4x1xf32>
    %cst_92 = arith.constant 1.562500e-02 : f32
    %125 = vector.broadcast %cst_92 : f32 to vector<4x1xf32>
    %126 = arith.mulf %124, %125 : vector<4x1xf32>
    %127 = vector.broadcast %126 : vector<4x1xf32> to vector<4x100xf32>
    %128 = arith.subf %118, %127 : vector<4x100xf32>
    %cst_93 = arith.constant 0.000000e+00 : f32
    %129 = vector.shape_cast %106 : vector<1x100xi1> to vector<1x100xi1>
    %130 = vector.broadcast %129 : vector<1x100xi1> to vector<4x100xi1>
    %131 = vector.broadcast %cst_93 : f32 to vector<4x100xf32>
    %132 = arith.select %130, %128, %131 : vector<4x100xi1>, vector<4x100xf32>
    %133 = arith.mulf %132, %132 : vector<4x100xf32>
    %cst_94 = arith.constant dense<0.000000e+00> : vector<4xf32>
    %134 = vector.multi_reduction <add>, %133, %cst_94 [1] : vector<4x100xf32> to vector<4xf32>
    %135 = vector.shape_cast %134 : vector<4xf32> to vector<4x1xf32>
    %cst_95 = arith.constant 1.562500e-02 : f32
    %136 = vector.broadcast %cst_95 : f32 to vector<4x1xf32>
    %137 = arith.mulf %135, %136 : vector<4x1xf32>
    %cst_96 = arith.constant 9.99999974E-6 : f32
    %138 = vector.broadcast %cst_96 : f32 to vector<4x1xf32>
    %139 = arith.addf %137, %138 : vector<4x1xf32>
    %140 = math.rsqrt %139 : vector<4x1xf32>
    %141 = vector.broadcast %140 : vector<4x1xf32> to vector<4x100xf32>
    %142 = arith.mulf %132, %141 : vector<4x100xf32>
    %cst_97 = arith.constant 0.000000e+00 : f32
    %143 = vector.broadcast %cst_97 : f32 to vector<4x100xf32>
    %144 = arith.maximumf %142, %143 : vector<4x100xf32>
    %c0_98 = arith.constant 0 : index
    %c32_99 = arith.constant 32 : index
    %145 = vector.load %arg16[%c0_98, %c32_99] : memref<4x164xf32, #tpu.memory_space<vmem>>, vector<4x100xf32>
    tpu.vector_store %arg16[%c0_98, %c32_99], %144 {strides = array<i32>} : memref<4x164xf32, #tpu.memory_space<vmem>>, vector<4x100xf32>,
    %c0_100 = arith.constant 0 : index
    %c21_101 = arith.constant 21 : index
    %146 = vector.load %arg16[%c0_100, %c21_101] : memref<4x164xf32, #tpu.memory_space<vmem>>, vector<4x100xf32>
    %c0_102 = arith.constant 0 : index
    %c22_103 = arith.constant 22 : index
    %147 = vector.load %arg16[%c0_102, %c22_103] : memref<4x164xf32, #tpu.memory_space<vmem>>, vector<4x100xf32>
    %c0_104 = arith.constant 0 : index
    %c23_105 = arith.constant 23 : index
    %148 = vector.load %arg16[%c0_104, %c23_105] : memref<4x164xf32, #tpu.memory_space<vmem>>, vector<4x100xf32>
    %c0_106 = arith.constant 0 : index
    %c31_107 = arith.constant 31 : index
    %149 = vector.load %arg16[%c0_106, %c31_107] : memref<4x164xf32, #tpu.memory_space<vmem>>, vector<4x100xf32>
    %c0_108 = arith.constant 0 : index
    %c32_109 = arith.constant 32 : index
    %150 = vector.load %arg16[%c0_108, %c32_109] : memref<4x164xf32, #tpu.memory_space<vmem>>, vector<4x100xf32>
    %c0_110 = arith.constant 0 : index
    %c33_111 = arith.constant 33 : index
    %151 = vector.load %arg16[%c0_110, %c33_111] : memref<4x164xf32, #tpu.memory_space<vmem>>, vector<4x100xf32>
    %c0_112 = arith.constant 0 : index
    %c41_113 = arith.constant 41 : index
    %152 = vector.load %arg16[%c0_112, %c41_113] : memref<4x164xf32, #tpu.memory_space<vmem>>, vector<4x100xf32>
    %c0_114 = arith.constant 0 : index
    %c42_115 = arith.constant 42 : index
    %153 = vector.load %arg16[%c0_114, %c42_115] : memref<4x164xf32, #tpu.memory_space<vmem>>, vector<4x100xf32>
    %c0_116 = arith.constant 0 : index
    %c43_117 = arith.constant 43 : index
    %154 = vector.load %arg16[%c0_116, %c43_117] : memref<4x164xf32, #tpu.memory_space<vmem>>, vector<4x100xf32>
    %155 = tpu.concatenate %146, %147, %148, %149, %150, %151, %152, %153, %154 in 0 : vector<4x100xf32>, vector<4x100xf32>, vector<4x100xf32>, vector<4x100xf32>, vector<4x100xf32>, vector<4x100xf32>, vector<4x100xf32>, vector<4x100xf32>, vector<4x100xf32> -> vector<36x100xf32>
    %c0_118 = arith.constant 0 : index
    %c0_119 = arith.constant 0 : index
    %156 = vector.load %arg8[%c0_118, %c0_119] : memref<4x36xf32, #tpu.memory_space<vmem>>, vector<4x36xf32>
    %cst_120 = arith.constant dense<0.000000e+00> : vector<4x100xf32>
    %157 = tpu.matmul %156, %155, %cst_120 {dimension_numbers = #tpu.dot_dimension_numbers<[1], [0], [0], [1], [0, 0, 1, 1], [], []>} : vector<4x36xf32>, vector<36x100xf32>, vector<4x100xf32> -> vector<4x100xf32>
    %cst_121 = arith.constant 0.000000e+00 : f32
    %158 = vector.shape_cast %106 : vector<1x100xi1> to vector<1x100xi1>
    %159 = vector.broadcast %158 : vector<1x100xi1> to vector<4x100xi1>
    %160 = vector.broadcast %cst_121 : f32 to vector<4x100xf32>
    %161 = arith.select %159, %157, %160 : vector<4x100xi1>, vector<4x100xf32>
    %cst_122 = arith.constant dense<0.000000e+00> : vector<4xf32>
    %162 = vector.multi_reduction <add>, %161, %cst_122 [1] : vector<4x100xf32> to vector<4xf32>
    %163 = vector.shape_cast %162 : vector<4xf32> to vector<4x1xf32>
    %cst_123 = arith.constant 1.562500e-02 : f32
    %164 = vector.broadcast %cst_123 : f32 to vector<4x1xf32>
    %165 = arith.mulf %163, %164 : vector<4x1xf32>
    %166 = vector.broadcast %165 : vector<4x1xf32> to vector<4x100xf32>
    %167 = arith.subf %157, %166 : vector<4x100xf32>
    %cst_124 = arith.constant 0.000000e+00 : f32
    %168 = vector.shape_cast %106 : vector<1x100xi1> to vector<1x100xi1>
    %169 = vector.broadcast %168 : vector<1x100xi1> to vector<4x100xi1>
    %170 = vector.broadcast %cst_124 : f32 to vector<4x100xf32>
    %171 = arith.select %169, %167, %170 : vector<4x100xi1>, vector<4x100xf32>
    %172 = arith.mulf %171, %171 : vector<4x100xf32>
    %cst_125 = arith.constant dense<0.000000e+00> : vector<4xf32>
    %173 = vector.multi_reduction <add>, %172, %cst_125 [1] : vector<4x100xf32> to vector<4xf32>
    %174 = vector.shape_cast %173 : vector<4xf32> to vector<4x1xf32>
    %cst_126 = arith.constant 1.562500e-02 : f32
    %175 = vector.broadcast %cst_126 : f32 to vector<4x1xf32>
    %176 = arith.mulf %174, %175 : vector<4x1xf32>
    %cst_127 = arith.constant 9.99999974E-6 : f32
    %177 = vector.broadcast %cst_127 : f32 to vector<4x1xf32>
    %178 = arith.addf %176, %177 : vector<4x1xf32>
    %179 = math.rsqrt %178 : vector<4x1xf32>
    %180 = vector.broadcast %179 : vector<4x1xf32> to vector<4x100xf32>
    %181 = arith.mulf %171, %180 : vector<4x100xf32>
    %cst_128 = arith.constant 0.000000e+00 : f32
    %182 = vector.broadcast %cst_128 : f32 to vector<4x100xf32>
    %183 = arith.maximumf %181, %182 : vector<4x100xf32>
    %c0_129 = arith.constant 0 : index
    %c0_130 = arith.constant 0 : index
    %184 = vector.load %arg10[%c0_129, %c0_130] : memref<100x64xf32, #tpu.memory_space<vmem>>, vector<100x64xf32>
    %cst_131 = arith.constant dense<0.000000e+00> : vector<4x64xf32>
    %185 = tpu.matmul %183, %184, %cst_131 {dimension_numbers = #tpu.dot_dimension_numbers<[1], [0], [0], [1], [0, 0, 1, 1], [], []>} : vector<4x100xf32>, vector<100x64xf32>, vector<4x64xf32> -> vector<4x64xf32>
    %186 = vector.extract_strided_slice %183 {offsets = [0, 0], sizes = [4, 89], strides = [1, 1]} : vector<4x100xf32> to vector<4x89xf32>
    %187 = vector.extract_strided_slice %183 {offsets = [0, 1], sizes = [4, 89], strides = [1, 1]} : vector<4x100xf32> to vector<4x89xf32>
    %188 = arith.maximumf %186, %187 : vector<4x89xf32>
    %189 = vector.extract_strided_slice %183 {offsets = [0, 10], sizes = [4, 89], strides = [1, 1]} : vector<4x100xf32> to vector<4x89xf32>
    %190 = vector.extract_strided_slice %183 {offsets = [0, 11], sizes = [4, 89], strides = [1, 1]} : vector<4x100xf32> to vector<4x89xf32>
    %191 = arith.maximumf %189, %190 : vector<4x89xf32>
    %192 = arith.maximumf %188, %191 : vector<4x89xf32>
    %193 = vector.extract_strided_slice %185 {offsets = [0, 0], sizes = [1, 64], strides = [1, 1]} : vector<4x64xf32> to vector<1x64xf32>
    %c0_132 = arith.constant 0 : index
    %c0_133 = arith.constant 0 : index
    %c0_134 = arith.constant 0 : index
    %194 = vector.load %arg14[%c0_132, %c0_133, %c0_134] : memref<1x1x260xf32, #tpu.memory_space<vmem>>, vector<1x1x64xf32>
    %195 = vector.shape_cast %194 : vector<1x1x64xf32> to vector<1x64xf32>
    %196 = vector.shape_cast %193 : vector<1x64xf32> to vector<1x1x64xf32>
    tpu.vector_store %arg14[%c0_132, %c0_133, %c0_134], %196 {strides = array<i32>} : memref<1x1x260xf32, #tpu.memory_space<vmem>>, vector<1x1x64xf32>,
    %197 = vector.extract_strided_slice %185 {offsets = [1, 0], sizes = [1, 64], strides = [1, 1]} : vector<4x64xf32> to vector<1x64xf32>
    %c0_135 = arith.constant 0 : index
    %c0_136 = arith.constant 0 : index
    %c64 = arith.constant 64 : index
    %198 = vector.load %arg14[%c0_135, %c0_136, %c64] : memref<1x1x260xf32, #tpu.memory_space<vmem>>, vector<1x1x64xf32>
    %199 = vector.shape_cast %198 : vector<1x1x64xf32> to vector<1x64xf32>
    %200 = vector.shape_cast %197 : vector<1x64xf32> to vector<1x1x64xf32>
    tpu.vector_store %arg14[%c0_135, %c0_136, %c64], %200 {strides = array<i32>} : memref<1x1x260xf32, #tpu.memory_space<vmem>>, vector<1x1x64xf32>,
    %201 = vector.extract_strided_slice %185 {offsets = [2, 0], sizes = [1, 64], strides = [1, 1]} : vector<4x64xf32> to vector<1x64xf32>
    %c0_137 = arith.constant 0 : index
    %c0_138 = arith.constant 0 : index
    %c128 = arith.constant 128 : index
    %202 = vector.load %arg14[%c0_137, %c0_138, %c128] : memref<1x1x260xf32, #tpu.memory_space<vmem>>, vector<1x1x64xf32>
    %203 = vector.shape_cast %202 : vector<1x1x64xf32> to vector<1x64xf32>
    %204 = vector.shape_cast %201 : vector<1x64xf32> to vector<1x1x64xf32>
    tpu.vector_store %arg14[%c0_137, %c0_138, %c128], %204 {strides = array<i32>} : memref<1x1x260xf32, #tpu.memory_space<vmem>>, vector<1x1x64xf32>,
    %205 = vector.extract_strided_slice %185 {offsets = [3, 0], sizes = [1, 64], strides = [1, 1]} : vector<4x64xf32> to vector<1x64xf32>
    %c0_139 = arith.constant 0 : index
    %c0_140 = arith.constant 0 : index
    %c192 = arith.constant 192 : index
    %206 = vector.load %arg14[%c0_139, %c0_140, %c192] : memref<1x1x260xf32, #tpu.memory_space<vmem>>, vector<1x1x64xf32>
    %207 = vector.shape_cast %206 : vector<1x1x64xf32> to vector<1x64xf32>
    %208 = vector.shape_cast %205 : vector<1x64xf32> to vector<1x1x64xf32>
    tpu.vector_store %arg14[%c0_139, %c0_140, %c192], %208 {strides = array<i32>} : memref<1x1x260xf32, #tpu.memory_space<vmem>>, vector<1x1x64xf32>,
    %209 = vector.extract_strided_slice %192 {offsets = [0, 0], sizes = [1, 89], strides = [1, 1]} : vector<4x89xf32> to vector<1x89xf32>
    %210 = vector.extract_strided_slice %192 {offsets = [1, 0], sizes = [1, 89], strides = [1, 1]} : vector<4x89xf32> to vector<1x89xf32>
    %211 = vector.extract_strided_slice %192 {offsets = [2, 0], sizes = [1, 89], strides = [1, 1]} : vector<4x89xf32> to vector<1x89xf32>
    %212 = vector.extract_strided_slice %192 {offsets = [3, 0], sizes = [1, 89], strides = [1, 1]} : vector<4x89xf32> to vector<1x89xf32>
    %213 = tpu.concatenate %209, %210, %211, %212 in 1 : vector<1x89xf32>, vector<1x89xf32>, vector<1x89xf32>, vector<1x89xf32> -> vector<1x356xf32>
    %c0_141 = arith.constant 0 : index
    %c0_142 = arith.constant 0 : index
    %214 = vector.load %arg11[%c0_141, %c0_142] : memref<356x4xf32, #tpu.memory_space<vmem>>, vector<356x4xf32>
    %cst_143 = arith.constant dense<0.000000e+00> : vector<1x4xf32>
    %215 = tpu.matmul %213, %214, %cst_143 {dimension_numbers = #tpu.dot_dimension_numbers<[1], [0], [0], [1], [0, 0, 1, 1], [], []>} : vector<1x356xf32>, vector<356x4xf32>, vector<1x4xf32> -> vector<1x4xf32>
    %c0_144 = arith.constant 0 : index
    %c0_145 = arith.constant 0 : index
    %216 = vector.load %arg12[%c0_144, %c0_145] : memref<1x4xf32, #tpu.memory_space<vmem>>, vector<1x4xf32>
    %217 = arith.addf %215, %216 : vector<1x4xf32>
    %c0_146 = arith.constant 0 : index
    %c0_147 = arith.constant 0 : index
    %c256 = arith.constant 256 : index
    %218 = vector.load %arg14[%c0_146, %c0_147, %c256] : memref<1x1x260xf32, #tpu.memory_space<vmem>>, vector<1x1x4xf32>
    %219 = vector.shape_cast %218 : vector<1x1x4xf32> to vector<1x4xf32>
    %220 = vector.shape_cast %217 : vector<1x4xf32> to vector<1x1x4xf32>
    tpu.vector_store %arg14[%c0_146, %c0_147, %c256], %220 {strides = array<i32>} : memref<1x1x260xf32, #tpu.memory_space<vmem>>, vector<1x1x4xf32>,
    return
  }
  func.func @transform_0(%arg0: i32) -> (i32, i32, i32) {
    %c0_i32 = arith.constant 0 : i32
    %c0_i32_0 = arith.constant 0 : i32
    %c0_i32_1 = arith.constant 0 : i32
    return %arg0, %c0_i32, %c0_i32_0 : i32, i32, i32
  }
  func.func @transform_1(%arg0: i32) -> (i32, i32) {
    %c0_i32 = arith.constant 0 : i32
    %c0_i32_0 = arith.constant 0 : i32
    %c0_i32_1 = arith.constant 0 : i32
    return %c0_i32, %c0_i32_0 : i32, i32
  }
  func.func @transform_2(%arg0: i32) -> (i32, i32) {
    %c0_i32 = arith.constant 0 : i32
    %c0_i32_0 = arith.constant 0 : i32
    %c0_i32_1 = arith.constant 0 : i32
    return %c0_i32, %c0_i32_0 : i32, i32
  }
  func.func @transform_3(%arg0: i32) -> (i32, i32) {
    %c0_i32 = arith.constant 0 : i32
    %c0_i32_0 = arith.constant 0 : i32
    %c0_i32_1 = arith.constant 0 : i32
    return %c0_i32, %c0_i32_0 : i32, i32
  }
  func.func @transform_4(%arg0: i32) -> (i32, i32) {
    %c0_i32 = arith.constant 0 : i32
    %c0_i32_0 = arith.constant 0 : i32
    %c0_i32_1 = arith.constant 0 : i32
    return %c0_i32, %c0_i32_0 : i32, i32
  }
  func.func @transform_5(%arg0: i32) -> (i32, i32) {
    %c0_i32 = arith.constant 0 : i32
    %c0_i32_0 = arith.constant 0 : i32
    %c0_i32_1 = arith.constant 0 : i32
    return %c0_i32, %c0_i32_0 : i32, i32
  }
  func.func @transform_6(%arg0: i32) -> (i32, i32) {
    %c0_i32 = arith.constant 0 : i32
    %c0_i32_0 = arith.constant 0 : i32
    %c0_i32_1 = arith.constant 0 : i32
    return %c0_i32, %c0_i32_0 : i32, i32
  }
  func.func @transform_7(%arg0: i32) -> (i32, i32) {
    %c0_i32 = arith.constant 0 : i32
    %c0_i32_0 = arith.constant 0 : i32
    %c0_i32_1 = arith.constant 0 : i32
    return %c0_i32, %c0_i32_0 : i32, i32
  }
  func.func @transform_8(%arg0: i32) -> (i32, i32) {
    %c0_i32 = arith.constant 0 : i32
    %c0_i32_0 = arith.constant 0 : i32
    %c0_i32_1 = arith.constant 0 : i32
    return %c0_i32, %c0_i32_0 : i32, i32
  }
  func.func @transform_9(%arg0: i32) -> (i32, i32) {
    %c0_i32 = arith.constant 0 : i32
    %c0_i32_0 = arith.constant 0 : i32
    %c0_i32_1 = arith.constant 0 : i32
    return %c0_i32, %c0_i32_0 : i32, i32
  }
  func.func @transform_10(%arg0: i32) -> (i32, i32) {
    %c0_i32 = arith.constant 0 : i32
    %c0_i32_0 = arith.constant 0 : i32
    %c0_i32_1 = arith.constant 0 : i32
    return %c0_i32, %c0_i32_0 : i32, i32
  }
  func.func @transform_11(%arg0: i32) -> (i32, i32) {
    %c0_i32 = arith.constant 0 : i32
    %c0_i32_0 = arith.constant 0 : i32
    %c0_i32_1 = arith.constant 0 : i32
    return %c0_i32, %c0_i32_0 : i32, i32
  }
  func.func @transform_12(%arg0: i32) -> (i32, i32, i32) {
    %c0_i32 = arith.constant 0 : i32
    %c0_i32_0 = arith.constant 0 : i32
    %c0_i32_1 = arith.constant 0 : i32
    return %arg0, %c0_i32, %c0_i32_0 : i32, i32, i32
  }
  func.func @transform_13(%arg0: i32) -> (i32, i32, i32) {
    %c0_i32 = arith.constant 0 : i32
    %c0_i32_0 = arith.constant 0 : i32
    %c0_i32_1 = arith.constant 0 : i32
    return %arg0, %c0_i32, %c0_i32_0 : i32, i32, i32
  }
}

</mosaic_0001>

<llo_original>
// kernel: squeeze.10
$region0: #{squeeze.10}
  %s0 = inlined_call_operand.vmem [shape: f32[2,256], index: 0, kind: input, shape index: {}]
  %s1 = inlined_call_operand.hbm [shape: f32[2,4,8,8], index: 1, kind: output, shape index: {}]
  $region1: #{squeeze.10} parent=0
    #allocation0 [shape = 'u8[32768]{0}', space=vmem, size = 0x8000, scoped, tag = 'operand span for operand 1']
    #allocation1 [shape = 's32[1]{0}', space=sflag, size = 0x4, scoped, tag = 'scoped memory for squeeze.10']
    #allocation2 [shape = 'u8[8192]{0}', space=vmem, size = 0x2000, scoped, tag = 'scoped mem for input reshape']
    %2 = vsyncpa [#allocation1], 0
    %s4 = sshllo.u32 0, 2
    %s5 = scalar_lea.vmem %s0, 2
    %v6 = vld [vmem:[%s5] sm:%s4]
    %s7 = scalar_lea.vmem [#allocation2], 8
    %8 = vst [vmem:[%s7] sm:%s4] %v6
    %v9 = vld [vmem:[%s0] sm:%s4]
    %10 = vst [vmem:[#allocation2] sm:%s4] %v9
    %v11 = vld [vmem:[#allocation2] sm:$0x3]
    %vm12 = vcmask 64512
    %13 = vst.msk [vmem:[#allocation0] sm:$0x1] %vm12, %v11
    %s14 = scalar_lea.vmem [#allocation0], 31
    %15 = vst.msk [vmem:[%s14] sm:$0x2] %vm12, %v11
    %s16 = scalar_lea.vmem [#allocation2], 8
    %v17 = vld [vmem:[%s16] sm:$0x3]
    %vm18 = vcmask 64512
    %s19 = scalar_lea.vmem [#allocation0], 16
    %20 = vst.msk [vmem:[%s19] sm:$0x1] %vm18, %v17
    %s21 = scalar_lea.vmem [#allocation0], 47
    %22 = vst.msk [vmem:[%s21] sm:$0x2] %vm18, %v17
    %v23 = vld.sshfl [vmem:[#allocation2] sm:$0xff pattern:$0x99999180]
    %24 = vrot.lane.b32.xlu0 %v23, 120
    %v25 = vpop.permute.xlu0 %24
    %vm26 = vcmask 64512
    %s27 = scalar_lea.vmem [#allocation0], 1
    %28 = vst.msk [vmem:[%s27] ss:$16 sm:$0x3] %vm26, %v25
    %s29 = scalar_lea.vmem [#allocation0], 1
    %30 = vst.msk [vmem:[%s29] ss:$16 sm:$0xc] %vm26, %v25
    %v31 = vld.sshfl [vmem:[#allocation2] sm:$0xff pattern:$0x99999180]
    %32 = vrot.lane.b32.xlu0 %v31, 112
    %v33 = vpop.permute.xlu0 %32
    %vm34 = vcmask 64512
    %s35 = scalar_lea.vmem [#allocation0], 2
    %36 = vst.msk [vmem:[%s35] ss:$16 sm:$0x3] %vm34, %v33
    %s37 = scalar_lea.vmem [#allocation0], 2
    %38 = vst.msk [vmem:[%s37] ss:$16 sm:$0xc] %vm34, %v33
    %v39 = vld.sshfl [vmem:[#allocation2] sm:$0xff pattern:$0x99999180]
    %40 = vrot.lane.b32.xlu0 %v39, 104
    %v41 = vpop.permute.xlu0 %40
    %vm42 = vcmask 64512
    %s43 = scalar_lea.vmem [#allocation0], 3
    %44 = vst.msk [vmem:[%s43] ss:$16 sm:$0x3] %vm42, %v41
    %s45 = scalar_lea.vmem [#allocation0], 3
    %46 = vst.msk [vmem:[%s45] ss:$16 sm:$0xc] %vm42, %v41
    %v47 = vld.sshfl [vmem:[#allocation2] sm:$0xff pattern:$0x99999180]
    %48 = vrot.lane.b32.xlu0 %v47, 96
    %v49 = vpop.permute.xlu0 %48
    %vm50 = vcmask 64512
    %s51 = scalar_lea.vmem [#allocation0], 4
    %52 = vst.msk [vmem:[%s51] ss:$16 sm:$0x3] %vm50, %v49
    %s53 = scalar_lea.vmem [#allocation0], 4
    %54 = vst.msk [vmem:[%s53] ss:$16 sm:$0xc] %vm50, %v49
    %v55 = vld.sshfl [vmem:[#allocation2] sm:$0xff pattern:$0x99999180]
    %56 = vrot.lane.b32.xlu0 %v55, 88
    %v57 = vpop.permute.xlu0 %56
    %vm58 = vcmask 64512
    %s59 = scalar_lea.vmem [#allocation0], 5
    %60 = vst.msk [vmem:[%s59] ss:$16 sm:$0x3] %vm58, %v57
    %s61 = scalar_lea.vmem [#allocation0], 5
    %62 = vst.msk [vmem:[%s61] ss:$16 sm:$0xc] %vm58, %v57
    %v63 = vld.sshfl [vmem:[#allocation2] sm:$0xff pattern:$0x99999180]
    %64 = vrot.lane.b32.xlu0 %v63, 80
    %v65 = vpop.permute.xlu0 %64
    %vm66 = vcmask 64512
    %s67 = scalar_lea.vmem [#allocation0], 6
    %68 = vst.msk [vmem:[%s67] ss:$16 sm:$0x3] %vm66, %v65
    %s69 = scalar_lea.vmem [#allocation0], 6
    %70 = vst.msk [vmem:[%s69] ss:$16 sm:$0xc] %vm66, %v65
    %v71 = vld.sshfl [vmem:[#allocation2] sm:$0xff pattern:$0x99999180]
    %72 = vrot.lane.b32.xlu0 %v71, 72
    %v73 = vpop.permute.xlu0 %72
    %vm74 = vcmask 64512
    %s75 = scalar_lea.vmem [#allocation0], 7
    %76 = vst.msk [vmem:[%s75] ss:$16 sm:$0x3] %vm74, %v73
    %s77 = scalar_lea.vmem [#allocation0], 7
    %78 = vst.msk [vmem:[%s77] ss:$16 sm:$0xc] %vm74, %v73
    %v79 = vld.sshfl [vmem:[#allocation2] sm:$0xff pattern:$0x99999180]
    %80 = vrot.lane.b32.xlu0 %v79, 64
    %v81 = vpop.permute.xlu0 %80
    %vm82 = vcmask 64512
    %s83 = scalar_lea.vmem [#allocation0], 8
    %84 = vst.msk [vmem:[%s83] ss:$16 sm:$0x3] %vm82, %v81
    %s85 = scalar_lea.vmem [#allocation0], 8
    %86 = vst.msk [vmem:[%s85] ss:$16 sm:$0xc] %vm82, %v81
    %v87 = vld.sshfl [vmem:[#allocation2] sm:$0xff pattern:$0x99999180]
    %88 = vrot.lane.b32.xlu0 %v87, 56
    %v89 = vpop.permute.xlu0 %88
    %vm90 = vcmask 64512
    %s91 = scalar_lea.vmem [#allocation0], 9
    %92 = vst.msk [vmem:[%s91] ss:$16 sm:$0x3] %vm90, %v89
    %s93 = scalar_lea.vmem [#allocation0], 9
    %94 = vst.msk [vmem:[%s93] ss:$16 sm:$0xc] %vm90, %v89
    %v95 = vld.sshfl [vmem:[#allocation2] sm:$0xff pattern:$0x99999180]
    %96 = vrot.lane.b32.xlu0 %v95, 48
    %v97 = vpop.permute.xlu0 %96
    %vm98 = vcmask 64512
    %s99 = scalar_lea.vmem [#allocation0], 10
    %100 = vst.msk [vmem:[%s99] ss:$16 sm:$0x3] %vm98, %v97
    %s101 = scalar_lea.vmem [#allocation0], 10
    %102 = vst.msk [vmem:[%s101] ss:$16 sm:$0xc] %vm98, %v97
    %v103 = vld.sshfl [vmem:[#allocation2] sm:$0xff pattern:$0x99999180]
    %104 = vrot.lane.b32.xlu0 %v103, 40
    %v105 = vpop.permute.xlu0 %104
    %vm106 = vcmask 64512
    %s107 = scalar_lea.vmem [#allocation0], 11
    %108 = vst.msk [vmem:[%s107] ss:$16 sm:$0x3] %vm106, %v105
    %s109 = scalar_lea.vmem [#allocation0], 11
    %110 = vst.msk [vmem:[%s109] ss:$16 sm:$0xc] %vm106, %v105
    %v111 = vld.sshfl [vmem:[#allocation2] sm:$0xff pattern:$0x99999180]
    %112 = vrot.lane.b32.xlu0 %v111, 32
    %v113 = vpop.permute.xlu0 %112
    %vm114 = vcmask 64512
    %s115 = scalar_lea.vmem [#allocation0], 12
    %116 = vst.msk [vmem:[%s115] ss:$16 sm:$0x3] %vm114, %v113
    %s117 = scalar_lea.vmem [#allocation0], 12
    %118 = vst.msk [vmem:[%s117] ss:$16 sm:$0xc] %vm114, %v113
    %v119 = vld.sshfl [vmem:[#allocation2] sm:$0xff pattern:$0x99999180]
    %120 = vrot.lane.b32.xlu0 %v119, 24
    %v121 = vpop.permute.xlu0 %120
    %vm122 = vcmask 64512
    %s123 = scalar_lea.vmem [#allocation0], 13
    %124 = vst.msk [vmem:[%s123] ss:$16 sm:$0x3] %vm122, %v121
    %s125 = scalar_lea.vmem [#allocation0], 13
    %126 = vst.msk [vmem:[%s125] ss:$16 sm:$0xc] %vm122, %v121
    %v127 = vld.sshfl [vmem:[#allocation2] sm:$0xff pattern:$0x99999180]
    %128 = vrot.lane.b32.xlu0 %v127, 16
    %v129 = vpop.permute.xlu0 %128
    %vm130 = vcmask 64512
    %s131 = scalar_lea.vmem [#allocation0], 14
    %132 = vst.msk [vmem:[%s131] ss:$16 sm:$0x3] %vm130, %v129
    %s133 = scalar_lea.vmem [#allocation0], 14
    %134 = vst.msk [vmem:[%s133] ss:$16 sm:$0xc] %vm130, %v129
    %v135 = vld.sshfl [vmem:[#allocation2] sm:$0xff pattern:$0x99999180]
    %136 = vrot.lane.b32.xlu0 %v135, 8
    %v137 = vpop.permute.xlu0 %136
    %vm138 = vcmask 64512
    %s139 = scalar_lea.vmem [#allocation0], 15
    %140 = vst.msk [vmem:[%s139] ss:$16 sm:$0x3] %vm138, %v137
    %s141 = scalar_lea.vmem [#allocation0], 15
    %142 = vst.msk [vmem:[%s141] ss:$16 sm:$0xc] %vm138, %v137
    %s144 = ssub.s32 1024, 1024
    %145 = vsyncadd [#allocation1], %s144
    %s147 = sshll.u32 [#allocation0], 4
    %s148 = int_to_ptr.vmem [resolvable:$true] %s147
    %150 = dma.vmem_to_hbm [thread:$0]  %s148, 1024, %s1, [#allocation1]
    %151 = dma.done [#allocation1], 1024
    %152 = vsyncpa [#allocation1], 1

// kernel: encoder_forward.1
$region0: #{encoder_forward.1}
  #allocation0 [shape = 'u32[]', space=smem, size = 0x4, offset = 0x4, fixed_abs, tag = 'smem constant byte address 0x4 - core index']
  #allocation1 [shape = 'u32[144,128]{1,0:T(1,128)}', space=vmem, size = 0x12000, scoped, tag = 'internal scratch']
  #allocation2 [shape = 'f32[8,388]{1,0:T(8,128)}', space=vmem, size = 0x4000, scoped, tag = 'scratch operand']
  #allocation3 [shape = 'f32[4,164]{1,0:T(4,128)}', space=vmem, size = 0x1000, scoped, tag = 'scratch operand']
  #allocation4 [shape = 'f32[8,164]{1,0:T(8,128)}', space=vmem, size = 0x2000, scoped, tag = 'scratch operand']
  %s0 = inlined_call_operand.vmem [shape: f32[2,1,388], index: 0, kind: input, shape index: {}]
  %s1 = inlined_call_operand.vmem [shape: f32[8,9], index: 1, kind: input, shape index: {}]
  %s2 = inlined_call_operand.vmem [shape: f32[8,72], index: 2, kind: input, shape index: {}]
  %s3 = inlined_call_operand.vmem [shape: f32[1,324], index: 3, kind: input, shape index: {}]
  %s4 = inlined_call_operand.vmem [shape: f32[324,256], index: 4, kind: input, shape index: {}]
  %s5 = inlined_call_operand.vmem [shape: f32[305,100], index: 5, kind: input, shape index: {}]
  %s6 = inlined_call_operand.vmem [shape: f32[4,72], index: 6, kind: input, shape index: {}]
  %s7 = inlined_call_operand.vmem [shape: f32[4,36], index: 7, kind: input, shape index: {}]
  %s8 = inlined_call_operand.vmem [shape: f32[1,100], index: 8, kind: input, shape index: {}]
  %s9 = inlined_call_operand.vmem [shape: f32[100,64], index: 9, kind: input, shape index: {}]
  %s10 = inlined_call_operand.vmem [shape: f32[356,4], index: 10, kind: input, shape index: {}]
  %s11 = inlined_call_operand.vmem [shape: f32[1,4], index: 11, kind: input, shape index: {}]
  %s12 = inlined_call_operand.vmem [shape: f32[2,8,256], index: 12, kind: output, shape index: {0}]
  %s13 = inlined_call_operand.vmem [shape: f32[2,1,260], index: 13, kind: output, shape index: {1}]
  %14 = xla_tuple %s12, %s13
  %s15 = sld [smem:[#allocation0]]
  $region89: #{encoder_forward.1} parent=0
    _
  %s17 = ssub.s32 1, %s15
  %s18 = scalar_select 0, %s17, %s15
  loop: start=0, step=1, limit=4
  $region2: #{encoder_forward.1} parent=0 // loop_pre_header
    _
  $region3: #{encoder_forward.1} parent=0 // loop_header
    %s20 = sphi 0, %s24
    %p21 = scmp.ge.s32.totalorder %s20, 4
    %s30 = sphi 0, %s32
    %s33 = sphi 0, %s30
    %s34 = sphi 0, %s33
    %s50 = sphi 0, %s34
    %s54 = sphi 0, %s54
    %s56 = sphi 0, %s54
    %s57 = sphi 0, %s56
    %s71 = sphi 0, %s57
    %s75 = sphi 0, %s75
    %s77 = sphi 0, %s75
    %s78 = sphi 0, %s77
    %s92 = sphi 0, %s78
    %s96 = sphi 0, %s96
    %s98 = sphi 0, %s96
    %s99 = sphi 0, %s98
    %s113 = sphi 0, %s99
    %s117 = sphi 0, %s117
    %s119 = sphi 0, %s117
    %s120 = sphi 0, %s119
    %s134 = sphi 0, %s120
    %s138 = sphi 0, %s138
    %s140 = sphi 0, %s138
    %s141 = sphi 0, %s140
    %s155 = sphi 0, %s141
    %s159 = sphi 0, %s159
    %s161 = sphi 0, %s159
    %s162 = sphi 0, %s161
    %s176 = sphi 0, %s162
    %s180 = sphi 0, %s180
    %s182 = sphi 0, %s180
    %s183 = sphi 0, %s182
    %s197 = sphi 0, %s183
    %s201 = sphi 0, %s201
    %s203 = sphi 0, %s201
    %s204 = sphi 0, %s203
    %s218 = sphi 0, %s204
    %s222 = sphi 0, %s222
    %s224 = sphi 0, %s222
    %s225 = sphi 0, %s224
    %s239 = sphi 0, %s225
    %s243 = sphi 0, %s243
    %s245 = sphi 0, %s243
    %s246 = sphi 0, %s245
    %s260 = sphi 0, %s246
    %s264 = sphi 0, %s264
    %s266 = sphi 0, %s264
    %s267 = sphi 0, %s266
    %s281 = sphi 0, %s267
    %s287 = sphi 0, %s289
    %s290 = sphi 0, %s287
    %s291 = sphi 0, %s290
    %s307 = sphi 0, %s291
    %s313 = sphi 0, %s315
    %s316 = sphi 0, %s313
    %s317 = sphi 0, %s316
    %s333 = sphi 0, %s317
  $region4: #{encoder_forward.1} parent=0 // loop_header_branch
    %23 = sbr.rel (%p21) target = $region8
  $region5: #{encoder_forward.1} parent=0 // loop_body
    %s25 = ssub.s32 %s20, 1
    %s26 = ssub.s32 %s20, 2
    %s27 = sadd.s32 %s20, 1
    %s28 = ssub.s32 %s20, %s27
    %p29 = scmp.eq.s32.totalorder %s28, 0
    %s31 = sadd.s32 %s30, 1
    %s32 = scalar_select %p29, %s30, %s31
    %p35 = pneg %p29
    %p36 = scmp.eq.s32.totalorder %s20, 1
    %p37 = por %p35, %p36
    %p38 = scmp.ne.s32.totalorder %s30, %s33
    %p39 = scmp.eq.s32.totalorder %s20, 0
    %p40 = por %p38, %p39
    %p41 = scmp.ne.s32.totalorder %s30, %s33
    %p42 = scmp.eq.s32.totalorder %s25, 1
    %p43 = por %p41, %p42
    %p44 = scmp.ne.s32.totalorder %s33, %s34
    %p45 = scmp.eq.s32.totalorder %s25, 0
    %p46 = por %p44, %p45
    %p47 = scmp.ne.s32.totalorder %s33, %s34
    %p48 = scmp.eq.s32.totalorder %s26, 1
    %p49 = por %p47, %p48
    %p51 = scmp.ne.s32.totalorder %s34, %s50
    %p52 = scmp.eq.s32.totalorder %s26, 0
    %p53 = por %p51, %p52
    %s55 = sadd.s32 %s54, 1
    %p58 = scmp.eq.s32.totalorder %s20, 1
    %p59 = scmp.ne.s32.totalorder %s54, %s56
    %p60 = scmp.eq.s32.totalorder %s20, 0
    %p61 = por %p59, %p60
    %p62 = scmp.ne.s32.totalorder %s54, %s56
    %p63 = scmp.eq.s32.totalorder %s25, 1
    %p64 = por %p62, %p63
    %p65 = scmp.ne.s32.totalorder %s56, %s57
    %p66 = scmp.eq.s32.totalorder %s25, 0
    %p67 = por %p65, %p66
    %p68 = scmp.ne.s32.totalorder %s56, %s57
    %p69 = scmp.eq.s32.totalorder %s26, 1
    %p70 = por %p68, %p69
    %p72 = scmp.ne.s32.totalorder %s57, %s71
    %p73 = scmp.eq.s32.totalorder %s26, 0
    %p74 = por %p72, %p73
    %s76 = sadd.s32 %s75, 1
    %p79 = scmp.eq.s32.totalorder %s20, 1
    %p80 = scmp.ne.s32.totalorder %s75, %s77
    %p81 = scmp.eq.s32.totalorder %s20, 0
    %p82 = por %p80, %p81
    %p83 = scmp.ne.s32.totalorder %s75, %s77
    %p84 = scmp.eq.s32.totalorder %s25, 1
    %p85 = por %p83, %p84
    %p86 = scmp.ne.s32.totalorder %s77, %s78
    %p87 = scmp.eq.s32.totalorder %s25, 0
    %p88 = por %p86, %p87
    %p89 = scmp.ne.s32.totalorder %s77, %s78
    %p90 = scmp.eq.s32.totalorder %s26, 1
    %p91 = por %p89, %p90
    %p93 = scmp.ne.s32.totalorder %s78, %s92
    %p94 = scmp.eq.s32.totalorder %s26, 0
    %p95 = por %p93, %p94
    %s97 = sadd.s32 %s96, 1
    %p100 = scmp.eq.s32.totalorder %s20, 1
    %p101 = scmp.ne.s32.totalorder %s96, %s98
    %p102 = scmp.eq.s32.totalorder %s20, 0
    %p103 = por %p101, %p102
    %p104 = scmp.ne.s32.totalorder %s96, %s98
    %p105 = scmp.eq.s32.totalorder %s25, 1
    %p106 = por %p104, %p105
    %p107 = scmp.ne.s32.totalorder %s98, %s99
    %p108 = scmp.eq.s32.totalorder %s25, 0
    %p109 = por %p107, %p108
    %p110 = scmp.ne.s32.totalorder %s98, %s99
    %p111 = scmp.eq.s32.totalorder %s26, 1
    %p112 = por %p110, %p111
    %p114 = scmp.ne.s32.totalorder %s99, %s113
    %p115 = scmp.eq.s32.totalorder %s26, 0
    %p116 = por %p114, %p115
    %s118 = sadd.s32 %s117, 1
    %p121 = scmp.eq.s32.totalorder %s20, 1
    %p122 = scmp.ne.s32.totalorder %s117, %s119
    %p123 = scmp.eq.s32.totalorder %s20, 0
    %p124 = por %p122, %p123
    %p125 = scmp.ne.s32.totalorder %s117, %s119
    %p126 = scmp.eq.s32.totalorder %s25, 1
    %p127 = por %p125, %p126
    %p128 = scmp.ne.s32.totalorder %s119, %s120
    %p129 = scmp.eq.s32.totalorder %s25, 0
    %p130 = por %p128, %p129
    %p131 = scmp.ne.s32.totalorder %s119, %s120
    %p132 = scmp.eq.s32.totalorder %s26, 1
    %p133 = por %p131, %p132
    %p135 = scmp.ne.s32.totalorder %s120, %s134
    %p136 = scmp.eq.s32.totalorder %s26, 0
    %p137 = por %p135, %p136
    %s139 = sadd.s32 %s138, 1
    %p142 = scmp.eq.s32.totalorder %s20, 1
    %p143 = scmp.ne.s32.totalorder %s138, %s140
    %p144 = scmp.eq.s32.totalorder %s20, 0
    %p145 = por %p143, %p144
    %p146 = scmp.ne.s32.totalorder %s138, %s140
    %p147 = scmp.eq.s32.totalorder %s25, 1
    %p148 = por %p146, %p147
    %p149 = scmp.ne.s32.totalorder %s140, %s141
    %p150 = scmp.eq.s32.totalorder %s25, 0
    %p151 = por %p149, %p150
    %p152 = scmp.ne.s32.totalorder %s140, %s141
    %p153 = scmp.eq.s32.totalorder %s26, 1
    %p154 = por %p152, %p153
    %p156 = scmp.ne.s32.totalorder %s141, %s155
    %p157 = scmp.eq.s32.totalorder %s26, 0
    %p158 = por %p156, %p157
    %s160 = sadd.s32 %s159, 1
    %p163 = scmp.eq.s32.totalorder %s20, 1
    %p164 = scmp.ne.s32.totalorder %s159, %s161
    %p165 = scmp.eq.s32.totalorder %s20, 0
    %p166 = por %p164, %p165
    %p167 = scmp.ne.s32.totalorder %s159, %s161
    %p168 = scmp.eq.s32.totalorder %s25, 1
    %p169 = por %p167, %p168
    %p170 = scmp.ne.s32.totalorder %s161, %s162
    %p171 = scmp.eq.s32.totalorder %s25, 0
    %p172 = por %p170, %p171
    %p173 = scmp.ne.s32.totalorder %s161, %s162
    %p174 = scmp.eq.s32.totalorder %s26, 1
    %p175 = por %p173, %p174
    %p177 = scmp.ne.s32.totalorder %s162, %s176
    %p178 = scmp.eq.s32.totalorder %s26, 0
    %p179 = por %p177, %p178
    %s181 = sadd.s32 %s180, 1
    %p184 = scmp.eq.s32.totalorder %s20, 1
    %p185 = scmp.ne.s32.totalorder %s180, %s182
    %p186 = scmp.eq.s32.totalorder %s20, 0
    %p187 = por %p185, %p186
    %p188 = scmp.ne.s32.totalorder %s180, %s182
    %p189 = scmp.eq.s32.totalorder %s25, 1
    %p190 = por %p188, %p189
    %p191 = scmp.ne.s32.totalorder %s182, %s183
    %p192 = scmp.eq.s32.totalorder %s25, 0
    %p193 = por %p191, %p192
    %p194 = scmp.ne.s32.totalorder %s182, %s183
    %p195 = scmp.eq.s32.totalorder %s26, 1
    %p196 = por %p194, %p195
    %p198 = scmp.ne.s32.totalorder %s183, %s197
    %p199 = scmp.eq.s32.totalorder %s26, 0
    %p200 = por %p198, %p199
    %s202 = sadd.s32 %s201, 1
    %p205 = scmp.eq.s32.totalorder %s20, 1
    %p206 = scmp.ne.s32.totalorder %s201, %s203
    %p207 = scmp.eq.s32.totalorder %s20, 0
    %p208 = por %p206, %p207
    %p209 = scmp.ne.s32.totalorder %s201, %s203
    %p210 = scmp.eq.s32.totalorder %s25, 1
    %p211 = por %p209, %p210
    %p212 = scmp.ne.s32.totalorder %s203, %s204
    %p213 = scmp.eq.s32.totalorder %s25, 0
    %p214 = por %p212, %p213
    %p215 = scmp.ne.s32.totalorder %s203, %s204
    %p216 = scmp.eq.s32.totalorder %s26, 1
    %p217 = por %p215, %p216
    %p219 = scmp.ne.s32.totalorder %s204, %s218
    %p220 = scmp.eq.s32.totalorder %s26, 0
    %p221 = por %p219, %p220
    %s223 = sadd.s32 %s222, 1
    %p226 = scmp.eq.s32.totalorder %s20, 1
    %p227 = scmp.ne.s32.totalorder %s222, %s224
    %p228 = scmp.eq.s32.totalorder %s20, 0
    %p229 = por %p227, %p228
    %p230 = scmp.ne.s32.totalorder %s222, %s224
    %p231 = scmp.eq.s32.totalorder %s25, 1
    %p232 = por %p230, %p231
    %p233 = scmp.ne.s32.totalorder %s224, %s225
    %p234 = scmp.eq.s32.totalorder %s25, 0
    %p235 = por %p233, %p234
    %p236 = scmp.ne.s32.totalorder %s224, %s225
    %p237 = scmp.eq.s32.totalorder %s26, 1
    %p238 = por %p236, %p237
    %p240 = scmp.ne.s32.totalorder %s225, %s239
    %p241 = scmp.eq.s32.totalorder %s26, 0
    %p242 = por %p240, %p241
    %s244 = sadd.s32 %s243, 1
    %p247 = scmp.eq.s32.totalorder %s20, 1
    %p248 = scmp.ne.s32.totalorder %s243, %s245
    %p249 = scmp.eq.s32.totalorder %s20, 0
    %p250 = por %p248, %p249
    %p251 = scmp.ne.s32.totalorder %s243, %s245
    %p252 = scmp.eq.s32.totalorder %s25, 1
    %p253 = por %p251, %p252
    %p254 = scmp.ne.s32.totalorder %s245, %s246
    %p255 = scmp.eq.s32.totalorder %s25, 0
    %p256 = por %p254, %p255
    %p257 = scmp.ne.s32.totalorder %s245, %s246
    %p258 = scmp.eq.s32.totalorder %s26, 1
    %p259 = por %p257, %p258
    %p261 = scmp.ne.s32.totalorder %s246, %s260
    %p262 = scmp.eq.s32.totalorder %s26, 0
    %p263 = por %p261, %p262
    %s265 = sadd.s32 %s264, 1
    %p268 = scmp.eq.s32.totalorder %s20, 1
    %p269 = scmp.ne.s32.totalorder %s264, %s266
    %p270 = scmp.eq.s32.totalorder %s20, 0
    %p271 = por %p269, %p270
    %p272 = scmp.ne.s32.totalorder %s264, %s266
    %p273 = scmp.eq.s32.totalorder %s25, 1
    %p274 = por %p272, %p273
    %p275 = scmp.ne.s32.totalorder %s266, %s267
    %p276 = scmp.eq.s32.totalorder %s25, 0
    %p277 = por %p275, %p276
    %p278 = scmp.ne.s32.totalorder %s266, %s267
    %p279 = scmp.eq.s32.totalorder %s26, 1
    %p280 = por %p278, %p279
    %p282 = scmp.ne.s32.totalorder %s267, %s281
    %p283 = scmp.eq.s32.totalorder %s26, 0
    %p284 = por %p282, %p283
    %s285 = ssub.s32 %s20, %s27
    %p286 = scmp.eq.s32.totalorder %s285, 0
    %s288 = sadd.s32 %s287, 1
    %s289 = scalar_select %p286, %s287, %s288
    %p292 = pneg %p286
    %p293 = scmp.eq.s32.totalorder %s20, 1
    %p294 = por %p292, %p293
    %p295 = scmp.ne.s32.totalorder %s287, %s290
    %p296 = scmp.eq.s32.totalorder %s20, 0
    %p297 = por %p295, %p296
    %p298 = scmp.ne.s32.totalorder %s287, %s290
    %p299 = scmp.eq.s32.totalorder %s25, 1
    %p300 = por %p298, %p299
    %p301 = scmp.ne.s32.totalorder %s290, %s291
    %p302 = scmp.eq.s32.totalorder %s25, 0
    %p303 = por %p301, %p302
    %p304 = scmp.ne.s32.totalorder %s290, %s291
    %p305 = scmp.eq.s32.totalorder %s26, 1
    %p306 = por %p304, %p305
    %p308 = scmp.ne.s32.totalorder %s291, %s307
    %p309 = scmp.eq.s32.totalorder %s26, 0
    %p310 = por %p308, %p309
    %s311 = ssub.s32 %s20, %s27
    %p312 = scmp.eq.s32.totalorder %s311, 0
    %s314 = sadd.s32 %s313, 1
    %s315 = scalar_select %p312, %s313, %s314
    %p318 = pneg %p312
    %p319 = scmp.eq.s32.totalorder %s20, 1
    %p320 = por %p318, %p319
    %p321 = scmp.ne.s32.totalorder %s313, %s316
    %p322 = scmp.eq.s32.totalorder %s20, 0
    %p323 = por %p321, %p322
    %p324 = scmp.ne.s32.totalorder %s313, %s316
    %p325 = scmp.eq.s32.totalorder %s25, 1
    %p326 = por %p324, %p325
    %p327 = scmp.ne.s32.totalorder %s316, %s317
    %p328 = scmp.eq.s32.totalorder %s25, 0
    %p329 = por %p327, %p328
    %p330 = scmp.ne.s32.totalorder %s316, %s317
    %p331 = scmp.eq.s32.totalorder %s26, 1
    %p332 = por %p330, %p331
    %p334 = scmp.ne.s32.totalorder %s317, %s333
    %p335 = scmp.eq.s32.totalorder %s26, 0
    %p336 = por %p334, %p335
    %p337 = scmp.le.s32.totalorder 1, %s20
    %p338 = scmp.lt.s32.totalorder %s20, 3
    %p339 = pnand %p337, %p338
    %p340 = pneg %p339
    // Predicated region
    $region9: #{encoder_forward.1} parent=5 // pred_check
      _
    $region10: #{encoder_forward.1} parent=5 // pred_check_branch
      %342 = sbr.rel (%p339) target = $region12
    $region11: #{encoder_forward.1} parent=5 // pred_region
      %s343 = ssub.s32 %s20, 1
      // Predicated region
      $region13: #{encoder_forward.1} parent=11 // pred_check
        %p344 = pneg %p67
      $region14: #{encoder_forward.1} parent=11 // pred_check_branch
        %346 = sbr.rel (%p344) target = $region16
      $region15: #{encoder_forward.1} parent=11 // pred_region
        _
      $region16: #{encoder_forward.1} parent=11 // pred_fallthru
        _
      // Predicated region
      $region17: #{encoder_forward.1} parent=11 // pred_check
        %p347 = pneg %p88
      $region18: #{encoder_forward.1} parent=11 // pred_check_branch
        %349 = sbr.rel (%p347) target = $region20
      $region19: #{encoder_forward.1} parent=11 // pred_region
        _
      $region20: #{encoder_forward.1} parent=11 // pred_fallthru
        _
      // Predicated region
      $region21: #{encoder_forward.1} parent=11 // pred_check
        %p350 = pneg %p109
      $region22: #{encoder_forward.1} parent=11 // pred_check_branch
        %352 = sbr.rel (%p350) target = $region24
      $region23: #{encoder_forward.1} parent=11 // pred_region
        _
      $region24: #{encoder_forward.1} parent=11 // pred_fallthru
        _
      // Predicated region
      $region25: #{encoder_forward.1} parent=11 // pred_check
        %p353 = pneg %p130
      $region26: #{encoder_forward.1} parent=11 // pred_check_branch
        %355 = sbr.rel (%p353) target = $region28
      $region27: #{encoder_forward.1} parent=11 // pred_region
        _
      $region28: #{encoder_forward.1} parent=11 // pred_fallthru
        _
      // Predicated region
      $region29: #{encoder_forward.1} parent=11 // pred_check
        %p356 = pneg %p151
      $region30: #{encoder_forward.1} parent=11 // pred_check_branch
        %358 = sbr.rel (%p356) target = $region32
      $region31: #{encoder_forward.1} parent=11 // pred_region
        _
      $region32: #{encoder_forward.1} parent=11 // pred_fallthru
        _
      // Predicated region
      $region33: #{encoder_forward.1} parent=11 // pred_check
        %p359 = pneg %p172
      $region34: #{encoder_forward.1} parent=11 // pred_check_branch
        %361 = sbr.rel (%p359) target = $region36
      $region35: #{encoder_forward.1} parent=11 // pred_region
        _
      $region36: #{encoder_forward.1} parent=11 // pred_fallthru
        _
      // Predicated region
      $region37: #{encoder_forward.1} parent=11 // pred_check
        %p362 = pneg %p193
      $region38: #{encoder_forward.1} parent=11 // pred_check_branch
        %364 = sbr.rel (%p362) target = $region40
      $region39: #{encoder_forward.1} parent=11 // pred_region
        _
      $region40: #{encoder_forward.1} parent=11 // pred_fallthru
        _
      // Predicated region
      $region41: #{encoder_forward.1} parent=11 // pred_check
        %p365 = pneg %p214
      $region42: #{encoder_forward.1} parent=11 // pred_check_branch
        %367 = sbr.rel (%p365) target = $region44
      $region43: #{encoder_forward.1} parent=11 // pred_region
        _
      $region44: #{encoder_forward.1} parent=11 // pred_fallthru
        _
      // Predicated region
      $region45: #{encoder_forward.1} parent=11 // pred_check
        %p368 = pneg %p235
      $region46: #{encoder_forward.1} parent=11 // pred_check_branch
        %370 = sbr.rel (%p368) target = $region48
      $region47: #{encoder_forward.1} parent=11 // pred_region
        _
      $region48: #{encoder_forward.1} parent=11 // pred_fallthru
        _
      // Predicated region
      $region49: #{encoder_forward.1} parent=11 // pred_check
        %p371 = pneg %p256
      $region50: #{encoder_forward.1} parent=11 // pred_check_branch
        %373 = sbr.rel (%p371) target = $region52
      $region51: #{encoder_forward.1} parent=11 // pred_region
        _
      $region52: #{encoder_forward.1} parent=11 // pred_fallthru
        _
      // Predicated region
      $region53: #{encoder_forward.1} parent=11 // pred_check
        %p374 = pneg %p277
      $region54: #{encoder_forward.1} parent=11 // pred_check_branch
        %376 = sbr.rel (%p374) target = $region56
      $region55: #{encoder_forward.1} parent=11 // pred_region
        _
      $region56: #{encoder_forward.1} parent=11 // pred_fallthru
        _
    $region12: #{encoder_forward.1} parent=5 // pred_fallthru
      _
    %p377 = scmp.lt.s32.totalorder %s20, 2
    // Predicated region
    $region57: #{encoder_forward.1} parent=5 // pred_check
      %p378 = pneg %p377
    $region58: #{encoder_forward.1} parent=5 // pred_check_branch
      %380 = sbr.rel (%p378) target = $region60
    $region59: #{encoder_forward.1} parent=5 // pred_region
      // Predicated region
      $region61: #{encoder_forward.1} parent=59 // pred_check
        %p381 = pneg %p40
      $region62: #{encoder_forward.1} parent=59 // pred_check_branch
        %383 = sbr.rel (%p381) target = $region64
      $region63: #{encoder_forward.1} parent=59 // pred_region
        %p384 = scmp.lt.s32.totalorder %s20, 1
        %s385 = scalar_select %p384, %s20, 1
        %s386 = smul.addr %s385, 4
        %s387 = scalar_lea.vmem %s0, %s386
      $region64: #{encoder_forward.1} parent=59 // pred_fallthru
        _
    $region60: #{encoder_forward.1} parent=5 // pred_fallthru
      _
    %p388 = scmp.le.s32.totalorder 1, %s20
    %p389 = scmp.lt.s32.totalorder %s20, 3
    %p390 = pnand %p388, %p389
    %p391 = pneg %p390
    // Predicated region
    $region65: #{encoder_forward.1} parent=5 // pred_check
      _
    $region66: #{encoder_forward.1} parent=5 // pred_check_branch
      %393 = sbr.rel (%p390) target = $region68
    $region67: #{encoder_forward.1} parent=5 // pred_region
      %s394 = ssub.s32 %s20, 1
      %p395 = scmp.lt.s32.totalorder %s25, 1
      %s396 = scalar_select %p395, %s25, 1
      %s397 = smul.addr %s396, 4
      %s398 = scalar_lea.vmem %s0, %s397
      %p399 = pneg %p46
      %p400 = pneg %p43
      %p401 = pneg %p67
      %p402 = pneg %p64
      %p403 = pneg %p88
      %p404 = pneg %p85
      %p405 = pneg %p109
      %p406 = pneg %p106
      %p407 = pneg %p130
      %p408 = pneg %p127
      %p409 = pneg %p151
      %p410 = pneg %p148
      %p411 = pneg %p172
      %p412 = pneg %p169
      %p413 = pneg %p193
      %p414 = pneg %p190
      %p415 = pneg %p214
      %p416 = pneg %p211
      %p417 = pneg %p235
      %p418 = pneg %p232
      %p419 = pneg %p256
      %p420 = pneg %p253
      %p421 = pneg %p277
      %p422 = pneg %p274
      %p423 = pneg %p303
      %p424 = pneg %p300
      %p425 = scmp.lt.s32.totalorder %s25, 1
      %s426 = scalar_select %p425, %s25, 1
      %s427 = smul.addr %s426, 2
      %s428 = smul.addr %s427, 8
      %s429 = scalar_lea.vmem %s12, %s428
      %p430 = pneg %p329
      %p431 = pneg %p326
      %p432 = scmp.lt.s32.totalorder %s25, 1
      %s433 = scalar_select %p432, %s25, 1
      %s434 = smul.addr %s433, 3
      %s435 = scalar_lea.vmem %s13, %s434
      %p436 = scmp.lt.s32.totalorder %s25, 1
      %s437 = scalar_select %p436, %s25, 1
      %s438 = smul.addr %s437, 4
      %s439 = scalar_lea.vmem %s0, %s438
      %p440 = scmp.lt.s32.totalorder %s25, 1
      %s441 = scalar_select %p440, %s25, 1
      %s442 = smul.addr %s441, 2
      %s443 = smul.addr %s442, 8
      %s444 = scalar_lea.vmem %s12, %s443
      %p445 = scmp.lt.s32.totalorder %s25, 1
      %s446 = scalar_select %p445, %s25, 1
      %s447 = smul.addr %s446, 3
      %s448 = scalar_lea.vmem %s13, %s447
      %v449 = vld [vmem:[%s3] sm:$0x7]
      %vm450 = vcmp.gt.f32.partialorder %v449, 0.5
      %v451 = vld [vmem:[%s439] sm:$0x7]
      %v453 = vlaneseq
      %v454 = vshrl.u32 %v453, 7
      %v455 = vsub.s32 0, %v454
      %v456 = vrot.slane %v451, %v455
      %v457 = vlaneseq
      %v458 = vshrl.u32 %v457, 7
      %v459 = vsub.s32 1, %v458
      %v460 = vrot.slane %v451, %v459
      %v461 = vlaneseq
      %v462 = vshrl.u32 %v461, 7
      %v463 = vsub.s32 2, %v462
      %v464 = vrot.slane %v451, %v463
      %468 = vrot.lane.b32.xlu0 %v456, 127
      %v469 = vpop.permute.xlu0 %468
      %470 = vrot.lane.b32.xlu0 %v460, 127
      %v471 = vpop.permute.xlu0 %470
      %472 = vrot.lane.b32.xlu0 %v464, 127
      %v473 = vpop.permute.xlu0 %472
      %vm474 = vcmask 1039360
      %v475 = vsel %vm474, %v469, %v471
      %v476 = vsel %vm474, %v471, %v473
      %480 = vrot.lane.b32.xlu0 %v456, 126
      %v481 = vpop.permute.xlu0 %480
      %482 = vrot.lane.b32.xlu0 %v460, 126
      %v483 = vpop.permute.xlu0 %482
      %484 = vrot.lane.b32.xlu0 %v464, 126
      %v485 = vpop.permute.xlu0 %484
      %vm486 = vcmask 1031168
      %v487 = vsel %vm486, %v481, %v483
      %v488 = vsel %vm486, %v483, %v485
      %492 = vrot.lane.b32.xlu0 %v456, 110
      %v493 = vpop.permute.xlu0 %492
      %494 = vrot.lane.b32.xlu0 %v460, 110
      %v495 = vpop.permute.xlu0 %494
      %496 = vrot.lane.b32.xlu0 %v464, 110
      %v497 = vpop.permute.xlu0 %496
      %vm498 = vcmask 900096
      %v499 = vsel %vm498, %v493, %v495
      %v500 = vsel %vm498, %v495, %v497
      %504 = vrot.lane.b32.xlu0 %v456, 109
      %v505 = vpop.permute.xlu0 %504
      %506 = vrot.lane.b32.xlu0 %v460, 109
      %v507 = vpop.permute.xlu0 %506
      %508 = vrot.lane.b32.xlu0 %v464, 109
      %v509 = vpop.permute.xlu0 %508
      %vm510 = vcmask 891904
      %v511 = vsel %vm510, %v505, %v507
      %v512 = vsel %vm510, %v507, %v509
      %516 = vrot.lane.b32.xlu0 %v456, 108
      %v517 = vpop.permute.xlu0 %516
      %518 = vrot.lane.b32.xlu0 %v460, 108
      %v519 = vpop.permute.xlu0 %518
      %520 = vrot.lane.b32.xlu0 %v464, 108
      %v521 = vpop.permute.xlu0 %520
      %vm522 = vcmask 883712
      %v523 = vsel %vm522, %v517, %v519
      %v524 = vsel %vm522, %v519, %v521
      %528 = vrot.lane.b32.xlu0 %v456, 92
      %v529 = vpop.permute.xlu0 %528
      %530 = vrot.lane.b32.xlu0 %v460, 92
      %v531 = vpop.permute.xlu0 %530
      %532 = vrot.lane.b32.xlu0 %v464, 92
      %v533 = vpop.permute.xlu0 %532
      %vm534 = vcmask 752640
      %v535 = vsel %vm534, %v529, %v531
      %v536 = vsel %vm534, %v531, %v533
      %540 = vrot.lane.b32.xlu0 %v456, 91
      %v541 = vpop.permute.xlu0 %540
      %542 = vrot.lane.b32.xlu0 %v460, 91
      %v543 = vpop.permute.xlu0 %542
      %544 = vrot.lane.b32.xlu0 %v464, 91
      %v545 = vpop.permute.xlu0 %544
      %vm546 = vcmask 744448
      %v547 = vsel %vm546, %v541, %v543
      %v548 = vsel %vm546, %v543, %v545
      %552 = vrot.lane.b32.xlu0 %v456, 90
      %v553 = vpop.permute.xlu0 %552
      %554 = vrot.lane.b32.xlu0 %v460, 90
      %v555 = vpop.permute.xlu0 %554
      %556 = vrot.lane.b32.xlu0 %v464, 90
      %v557 = vpop.permute.xlu0 %556
      %vm558 = vcmask 736256
      %v559 = vsel %vm558, %v553, %v555
      %v560 = vsel %vm558, %v555, %v557
      %vm561 = vcmask 1040384
      %v562 = vsel %vm561, %v456, %v475
      %v563 = vsel %vm561, %v460, %v476
      %v564 = vsel %vm561, %v464, %v473
      %vm565 = vcmask 1041408
      %v566 = vsel %vm565, %v562, %v487
      %v567 = vsel %vm565, %v563, %v488
      %v568 = vsel %vm565, %v564, %v485
      %vm569 = vcmask 1042432
      %v570 = vsel %vm569, %v566, %v499
      %v571 = vsel %vm569, %v567, %v500
      %v572 = vsel %vm569, %v568, %v497
      %vm573 = vcmask 1043456
      %v574 = vsel %vm573, %v570, %v511
      %v575 = vsel %vm573, %v571, %v512
      %v576 = vsel %vm573, %v572, %v509
      %vm577 = vcmask 1044480
      %v578 = vsel %vm577, %v574, %v523
      %v579 = vsel %vm577, %v575, %v524
      %v580 = vsel %vm577, %v576, %v521
      %vm581 = vcmask 1045504
      %v582 = vsel %vm581, %v578, %v535
      %v583 = vsel %vm581, %v579, %v536
      %v584 = vsel %vm581, %v580, %v533
      %vm585 = vcmask 1046528
      %v586 = vsel %vm585, %v582, %v547
      %v587 = vsel %vm585, %v583, %v548
      %v588 = vsel %vm585, %v584, %v545
      %v589 = vld [vmem:[%s1] sm:$0xff]
      %593 = vrot.lane.b32.xlu0 %v586, 115
      %v594 = vpop.permute.xlu0 %593
      %595 = vrot.lane.b32.xlu0 %v587, 115
      %v596 = vpop.permute.xlu0 %595
      %597 = vrot.lane.b32.xlu0 %v588, 115
      %v598 = vpop.permute.xlu0 %597
      %599 = vrot.lane.b32.xlu0 %v559, 115
      %v600 = vpop.permute.xlu0 %599
      %601 = vrot.lane.b32.xlu0 %v560, 115
      %v602 = vpop.permute.xlu0 %601
      %603 = vrot.lane.b32.xlu0 %v557, 115
      %v604 = vpop.permute.xlu0 %603
      %vm605 = vcmask 941056
      %v606 = vsel %vm605, %v594, %v596
      %v607 = vsel %vm605, %v596, %v598
      %v608 = vsel %vm605, %v600, %v602
      %v609 = vsel %vm605, %v602, %v604
      %vm613 = vcmask 72704
      %v615 = vsel %vm613, %v589, 0
      %v617 = vsel %vm561, %v608, 0
      %v619 = vsel %vm561, %v609, 0
      %v621 = vsel %vm561, %v604, 0
      %623 = vmatprep.subr.mxu0 %v607
      %624 = vmatpush1.msra.mxu0 %v606
      %625 = vmatprep.subr.mxu0 %v619
      %626 = vmatpush1.msra.mxu0 %v617
      %627 = vmatprep.subr.mxu0 0.0
      %628 = vmatpush1.msra.mxu0 0.0
      %629 = vmatprep.subr.mxu0 0.0
      %630 = vmatpush1.msra.mxu0 0.0
      %631 = vmatprep.subr.mxu0 0.0
      %632 = vmatpush1.msra.mxu0 0.0
      %633 = vmatprep.subr.mxu0 0.0
      %634 = vmatpush1.msra.mxu0 0.0
      %635 = vmatprep.subr.mxu0 0.0
      %636 = vmatpush1.msra.mxu0 0.0
      %637 = vmatprep.subr.mxu0 0.0
      %638 = vmatpush1.msra.mxu0 0.0
      %639 = vmatprep.subr.mxu0 0.0
      %640 = vmatpush1.msra.mxu0 0.0
      %641 = vmatprep.subr.mxu0 0.0
      %642 = vmatpush1.msra.mxu0 0.0
      %643 = vmatprep.subr.mxu0 0.0
      %644 = vmatpush1.msra.mxu0 0.0
      %645 = vmatprep.subr.mxu0 0.0
      %646 = vmatpush1.msra.mxu0 0.0
      %647 = vmatprep.subr.mxu0 0.0
      %648 = vmatpush1.msra.mxu0 0.0
      %649 = vmatprep.subr.mxu0 0.0
      %650 = vmatpush1.msra.mxu0 0.0
      %651 = vmatprep.subr.mxu0 0.0
      %652 = vmatpush1.msra.mxu0 0.0
      %653 = vmatprep.subr.mxu0 0.0
      %654 = vmatpush1.msra.mxu0 0.0
      %655 = vmatprep.subr.mxu0 0.0
      %656 = vmatpush1.msra.mxu0 0.0
      %657 = vmatprep.subr.mxu0 0.0
      %658 = vmatpush1.msra.mxu0 0.0
      %659 = vmatprep.subr.mxu0 0.0
      %660 = vmatpush1.msra.mxu0 0.0
      %661 = vmatprep.subr.mxu0 0.0
      %662 = vmatpush1.msra.mxu0 0.0
      %663 = vmatprep.subr.mxu0 0.0
      %664 = vmatpush1.msra.mxu0 0.0
      %665 = vmatprep.subr.mxu0 0.0
      %666 = vmatpush1.msra.mxu0 0.0
      %667 = vmatprep.subr.mxu0 0.0
      %668 = vmatpush1.msra.mxu0 0.0
      %669 = vmatprep.subr.mxu0 0.0
      %670 = vmatpush1.msra.mxu0 0.0
      %671 = vmatprep.subr.mxu0 0.0
      %672 = vmatpush1.msra.mxu0 0.0
      %673 = vmatprep.subr.mxu0 0.0
      %674 = vmatpush1.msra.mxu0 0.0
      %675 = vmatprep.subr.mxu0 0.0
      %676 = vmatpush1.msra.mxu0 0.0
      %677 = vmatprep.subr.mxu0 0.0
      %678 = vmatpush1.msra.mxu0 0.0
      %679 = vmatprep.subr.mxu0 0.0
      %680 = vmatpush1.msra.mxu0 0.0
      %681 = vmatprep.subr.mxu0 0.0
      %682 = vmatpush1.msra.mxu0 0.0
      %683 = vmatprep.subr.mxu0 0.0
      %684 = vmatpush1.msra.mxu0 0.0
      %685 = vmatprep.subr.mxu0 0.0
      %686 = vmatpush1.msra.mxu0 0.0
      %687 = vmatprep.mubr.f32.mxu0 0.0
      %688 = vmatmul.mubr.f32.gmra.mrb[0].mxu0 %v615
      %v689 = vpop.f32.mrb[0].mxu0
      %v690 = vadd.f32 0.0, %v689
      %v691 = vpop.f32.mrb[0].mxu0
      %v692 = vadd.f32 0.0, %v691
      %693 = vdwg.mxu0
      %694 = vmatprep.subr.mxu0 0.0
      %695 = vmatpush1.msra.mxu0 %v598
      %696 = vmatprep.subr.mxu0 0.0
      %697 = vmatpush1.msra.mxu0 %v621
      %698 = vmatprep.subr.mxu0 0.0
      %699 = vmatpush1.msra.mxu0 0.0
      %700 = vmatprep.subr.mxu0 0.0
      %701 = vmatpush1.msra.mxu0 0.0
      %702 = vmatprep.subr.mxu0 0.0
      %703 = vmatpush1.msra.mxu0 0.0
      %704 = vmatprep.subr.mxu0 0.0
      %705 = vmatpush1.msra.mxu0 0.0
      %706 = vmatprep.subr.mxu0 0.0
      %707 = vmatpush1.msra.mxu0 0.0
      %708 = vmatprep.subr.mxu0 0.0
      %709 = vmatpush1.msra.mxu0 0.0
      %710 = vmatprep.subr.mxu0 0.0
      %711 = vmatpush1.msra.mxu0 0.0
      %712 = vmatprep.subr.mxu0 0.0
      %713 = vmatpush1.msra.mxu0 0.0
      %714 = vmatprep.subr.mxu0 0.0
      %715 = vmatpush1.msra.mxu0 0.0
      %716 = vmatprep.subr.mxu0 0.0
      %717 = vmatpush1.msra.mxu0 0.0
      %718 = vmatprep.subr.mxu0 0.0
      %719 = vmatpush1.msra.mxu0 0.0
      %720 = vmatprep.subr.mxu0 0.0
      %721 = vmatpush1.msra.mxu0 0.0
      %722 = vmatprep.subr.mxu0 0.0
      %723 = vmatpush1.msra.mxu0 0.0
      %724 = vmatprep.subr.mxu0 0.0
      %725 = vmatpush1.msra.mxu0 0.0
      %726 = vmatprep.subr.mxu0 0.0
      %727 = vmatpush1.msra.mxu0 0.0
      %728 = vmatprep.subr.mxu0 0.0
      %729 = vmatpush1.msra.mxu0 0.0
      %730 = vmatprep.subr.mxu0 0.0
      %731 = vmatpush1.msra.mxu0 0.0
      %732 = vmatprep.subr.mxu0 0.0
      %733 = vmatpush1.msra.mxu0 0.0
      %734 = vmatprep.subr.mxu0 0.0
      %735 = vmatpush1.msra.mxu0 0.0
      %736 = vmatprep.subr.mxu0 0.0
      %737 = vmatpush1.msra.mxu0 0.0
      %738 = vmatprep.subr.mxu0 0.0
      %739 = vmatpush1.msra.mxu0 0.0
      %740 = vmatprep.subr.mxu0 0.0
      %741 = vmatpush1.msra.mxu0 0.0
      %742 = vmatprep.subr.mxu0 0.0
      %743 = vmatpush1.msra.mxu0 0.0
      %744 = vmatprep.subr.mxu0 0.0
      %745 = vmatpush1.msra.mxu0 0.0
      %746 = vmatprep.subr.mxu0 0.0
      %747 = vmatpush1.msra.mxu0 0.0
      %748 = vmatprep.subr.mxu0 0.0
      %749 = vmatpush1.msra.mxu0 0.0
      %750 = vmatprep.subr.mxu0 0.0
      %751 = vmatpush1.msra.mxu0 0.0
      %752 = vmatprep.subr.mxu0 0.0
      %753 = vmatpush1.msra.mxu0 0.0
      %754 = vmatprep.subr.mxu0 0.0
      %755 = vmatpush1.msra.mxu0 0.0
      %756 = vmatprep.subr.mxu0 0.0
      %757 = vmatpush1.msra.mxu0 0.0
      %758 = vmatprep.mubr.f32.mxu0 0.0
      %759 = vmatmul.mubr.f32.gmra.mrb[0].mxu0 %v615
      %v760 = vpop.f32.mrb[0].mxu0
      %v761 = vadd.f32 0.0, %v760
      %v762 = vpop.f32.mrb[0].mxu0
      %763 = vdwg.mxu0
      %v764 = vsel %vm450, 1, 0
      %v765 = vlaneseq
      %v766 = vshrl.u32 %v765, 7
      %v767 = vsub.s32 0, %v766
      %v768 = vrot.slane %v764, %v767
      %v769 = vlaneseq
      %v770 = vshrl.u32 %v769, 7
      %v771 = vsub.s32 1, %v770
      %v772 = vrot.slane %v764, %v771
      %v773 = vlaneseq
      %v774 = vshrl.u32 %v773, 7
      %v775 = vsub.s32 2, %v774
      %v776 = vrot.slane %v764, %v775
      %vm777 = vcmp.eq.s32.totalorder %v768, 1
      %vm778 = vcmp.eq.s32.totalorder %v772, 1
      %vm779 = vcmp.eq.s32.totalorder %v776, 1
      %v780 = vsel %vm777, %v690, 0.0
      %v781 = vsel %vm778, %v692, 0.0
      %v782 = vsel %vm779, %v761, 0.0
      %v783 = vadd.f32 %v780, %v781
      %vm784 = vcmask 556032
      %v785 = vsel %vm784, %v782, 0.0
      %v786 = vadd.f32 %v783, %v785
      %787 = vadd.xlane.f32.xlu0 %v786
      %v788 = vpop.xlane.xlu0 %787
      %v789 = vmul.f32 %v788, 0.00390625
      %v790 = vsub.f32 %v690, %v789
      %v791 = vsub.f32 %v692, %v789
      %v792 = vsub.f32 %v761, %v789
      %v793 = vsel %vm777, %v790, 0.0
      %v794 = vsel %vm778, %v791, 0.0
      %v795 = vsel %vm779, %v792, 0.0
      %v796 = vmul.f32 %v793, %v793
      %v797 = vmul.f32 %v794, %v794
      %v798 = vmul.f32 %v795, %v795
      %v799 = vadd.f32 %v796, %v797
      %v800 = vsel %vm784, %v798, 0.0
      %v801 = vadd.f32 %v799, %v800
      %802 = vadd.xlane.f32.xlu0 %v801
      %v803 = vpop.xlane.xlu0 %802
      %v804 = vmul.f32 %v803, 0.00390625
      %v805 = vadd.f32 %v804, 1e-05
      %v806 = vrsqrt.pop %v805
      %v807 = vmul.f32 %v793, %v806
      %v808 = vmul.f32 %v794, %v806
      %v809 = vmul.f32 %v795, %v806
      %v810 = vmax.f32 %v807, 0.0
      %v811 = vmax.f32 %v808, 0.0
      %v812 = vmax.f32 %v809, 0.0
      %816 = vrot.lane.b32.xlu0 %v810, 32
      %v817 = vpop.permute.xlu0 %816
      %818 = vrot.lane.b32.xlu0 %v811, 32
      %v819 = vpop.permute.xlu0 %818
      %820 = vrot.lane.b32.xlu0 %v812, 32
      %v821 = vpop.permute.xlu0 %820
      %vm822 = vcmask 261120
      %v823 = vsel %vm822, %v817, %v819
      %v824 = vsel %vm822, %v819, %v821
      %vm828 = vcmask 1047808
      %829 = vst.msk [vmem:[#allocation2] sm:$0xff] %vm828, %v817
      %830 = vst [vmem:[#allocation2 + $0x8] sm:$0xff] %v823
      %vm831 = vcmask 818176
      %832 = vst.msk [vmem:[#allocation2 + $0x10] sm:$0xff] %vm831, %v824
      %v833 = vld [vmem:[#allocation2] sm:$0xff]
      %v834 = vld [vmem:[#allocation2 + $0x8] sm:$0xff]
      %v835 = vld [vmem:[#allocation2 + $0x10] sm:$0xff]
      %839 = vrot.lane.b32.xlu0 %v833, 127
      %v840 = vpop.permute.xlu0 %839
      %841 = vrot.lane.b32.xlu0 %v834, 127
      %v842 = vpop.permute.xlu0 %841
      %843 = vrot.lane.b32.xlu0 %v835, 127
      %v844 = vpop.permute.xlu0 %843
      %v845 = vsel %vm474, %v840, %v842
      %v846 = vsel %vm474, %v842, %v844
      %847 = vrot.lane.b32.xlu0 %v833, 126
      %v848 = vpop.permute.xlu0 %847
      %849 = vrot.lane.b32.xlu0 %v834, 126
      %v850 = vpop.permute.xlu0 %849
      %851 = vrot.lane.b32.xlu0 %v835, 126
      %v852 = vpop.permute.xlu0 %851
      %v853 = vsel %vm486, %v848, %v850
      %v854 = vsel %vm486, %v850, %v852
      %855 = vrot.lane.b32.xlu0 %v833, 110
      %v856 = vpop.permute.xlu0 %855
      %857 = vrot.lane.b32.xlu0 %v834, 110
      %v858 = vpop.permute.xlu0 %857
      %859 = vrot.lane.b32.xlu0 %v835, 110
      %v860 = vpop.permute.xlu0 %859
      %v861 = vsel %vm498, %v856, %v858
      %v862 = vsel %vm498, %v858, %v860
      %863 = vrot.lane.b32.xlu0 %v833, 109
      %v864 = vpop.permute.xlu0 %863
      %865 = vrot.lane.b32.xlu0 %v834, 109
      %v866 = vpop.permute.xlu0 %865
      %867 = vrot.lane.b32.xlu0 %v835, 109
      %v868 = vpop.permute.xlu0 %867
      %v869 = vsel %vm510, %v864, %v866
      %v870 = vsel %vm510, %v866, %v868
      %871 = vrot.lane.b32.xlu0 %v833, 108
      %v872 = vpop.permute.xlu0 %871
      %873 = vrot.lane.b32.xlu0 %v834, 108
      %v874 = vpop.permute.xlu0 %873
      %875 = vrot.lane.b32.xlu0 %v835, 108
      %v876 = vpop.permute.xlu0 %875
      %v877 = vsel %vm522, %v872, %v874
      %v878 = vsel %vm522, %v874, %v876
      %879 = vrot.lane.b32.xlu0 %v833, 92
      %v880 = vpop.permute.xlu0 %879
      %881 = vrot.lane.b32.xlu0 %v834, 92
      %v882 = vpop.permute.xlu0 %881
      %883 = vrot.lane.b32.xlu0 %v835, 92
      %v884 = vpop.permute.xlu0 %883
      %v885 = vsel %vm534, %v880, %v882
      %v886 = vsel %vm534, %v882, %v884
      %887 = vrot.lane.b32.xlu0 %v833, 91
      %v888 = vpop.permute.xlu0 %887
      %889 = vrot.lane.b32.xlu0 %v834, 91
      %v890 = vpop.permute.xlu0 %889
      %891 = vrot.lane.b32.xlu0 %v835, 91
      %v892 = vpop.permute.xlu0 %891
      %v893 = vsel %vm546, %v888, %v890
      %v894 = vsel %vm546, %v890, %v892
      %895 = vrot.lane.b32.xlu0 %v833, 90
      %v896 = vpop.permute.xlu0 %895
      %897 = vrot.lane.b32.xlu0 %v834, 90
      %v898 = vpop.permute.xlu0 %897
      %899 = vrot.lane.b32.xlu0 %v835, 90
      %v900 = vpop.permute.xlu0 %899
      %v901 = vsel %vm558, %v896, %v898
      %v902 = vsel %vm558, %v898, %v900
      %v903 = vld [vmem:[%s2] sm:$0xff]
      %904 = vrot.lane.b32.xlu0 %v833, 115
      %v905 = vpop.permute.xlu0 %904
      %906 = vrot.lane.b32.xlu0 %v834, 115
      %v907 = vpop.permute.xlu0 %906
      %908 = vrot.lane.b32.xlu0 %v835, 115
      %v909 = vpop.permute.xlu0 %908
      %910 = vrot.lane.b32.xlu0 %v845, 115
      %v911 = vpop.permute.xlu0 %910
      %912 = vrot.lane.b32.xlu0 %v846, 115
      %v913 = vpop.permute.xlu0 %912
      %914 = vrot.lane.b32.xlu0 %v844, 115
      %v915 = vpop.permute.xlu0 %914
      %916 = vrot.lane.b32.xlu0 %v853, 115
      %v917 = vpop.permute.xlu0 %916
      %918 = vrot.lane.b32.xlu0 %v854, 115
      %v919 = vpop.permute.xlu0 %918
      %920 = vrot.lane.b32.xlu0 %v852, 115
      %v921 = vpop.permute.xlu0 %920
      %922 = vrot.lane.b32.xlu0 %v861, 115
      %v923 = vpop.permute.xlu0 %922
      %924 = vrot.lane.b32.xlu0 %v862, 115
      %v925 = vpop.permute.xlu0 %924
      %926 = vrot.lane.b32.xlu0 %v860, 115
      %v927 = vpop.permute.xlu0 %926
      %928 = vrot.lane.b32.xlu0 %v869, 115
      %v929 = vpop.permute.xlu0 %928
      %930 = vrot.lane.b32.xlu0 %v870, 115
      %v931 = vpop.permute.xlu0 %930
      %932 = vrot.lane.b32.xlu0 %v868, 115
      %v933 = vpop.permute.xlu0 %932
      %934 = vrot.lane.b32.xlu0 %v877, 115
      %v935 = vpop.permute.xlu0 %934
      %936 = vrot.lane.b32.xlu0 %v878, 115
      %v937 = vpop.permute.xlu0 %936
      %938 = vrot.lane.b32.xlu0 %v876, 115
      %v939 = vpop.permute.xlu0 %938
      %940 = vrot.lane.b32.xlu0 %v885, 115
      %v941 = vpop.permute.xlu0 %940
      %942 = vrot.lane.b32.xlu0 %v886, 115
      %v943 = vpop.permute.xlu0 %942
      %944 = vrot.lane.b32.xlu0 %v884, 115
      %v945 = vpop.permute.xlu0 %944
      %946 = vrot.lane.b32.xlu0 %v893, 115
      %v947 = vpop.permute.xlu0 %946
      %948 = vrot.lane.b32.xlu0 %v894, 115
      %v949 = vpop.permute.xlu0 %948
      %950 = vrot.lane.b32.xlu0 %v892, 115
      %v951 = vpop.permute.xlu0 %950
      %952 = vrot.lane.b32.xlu0 %v901, 115
      %v953 = vpop.permute.xlu0 %952
      %954 = vrot.lane.b32.xlu0 %v902, 115
      %v955 = vpop.permute.xlu0 %954
      %956 = vrot.lane.b32.xlu0 %v900, 115
      %v957 = vpop.permute.xlu0 %956
      %v958 = vsel %vm605, %v905, %v907
      %v959 = vsel %vm605, %v907, %v909
      %v960 = vsel %vm605, %v911, %v913
      %v961 = vsel %vm605, %v913, %v915
      %v962 = vsel %vm605, %v917, %v919
      %v963 = vsel %vm605, %v919, %v921
      %v964 = vsel %vm605, %v923, %v925
      %v965 = vsel %vm605, %v925, %v927
      %v966 = vsel %vm605, %v929, %v931
      %v967 = vsel %vm605, %v931, %v933
      %v968 = vsel %vm605, %v935, %v937
      %v969 = vsel %vm605, %v937, %v939
      %v970 = vsel %vm605, %v941, %v943
      %v971 = vsel %vm605, %v943, %v945
      %v972 = vsel %vm605, %v947, %v949
      %v973 = vsel %vm605, %v949, %v951
      %v974 = vsel %vm605, %v953, %v955
      %v975 = vsel %vm605, %v955, %v957
      %vm1003 = vcmask 588800
      %v1005 = vsel %vm1003, %v903, 0
      %1007 = vmatprep.subr.mxu0 %v959
      %1008 = vmatpush1.msra.mxu0 %v958
      %1009 = vmatprep.subr.mxu0 %v961
      %1010 = vmatpush1.msra.mxu0 %v960
      %1011 = vmatprep.subr.mxu0 %v963
      %1012 = vmatpush1.msra.mxu0 %v962
      %1013 = vmatprep.subr.mxu0 %v965
      %1014 = vmatpush1.msra.mxu0 %v964
      %1015 = vmatprep.subr.mxu0 %v967
      %1016 = vmatpush1.msra.mxu0 %v966
      %1017 = vmatprep.subr.mxu0 %v969
      %1018 = vmatpush1.msra.mxu0 %v968
      %1019 = vmatprep.subr.mxu0 %v971
      %1020 = vmatpush1.msra.mxu0 %v970
      %1021 = vmatprep.subr.mxu0 %v973
      %1022 = vmatpush1.msra.mxu0 %v972
      %1023 = vmatprep.subr.mxu0 %v975
      %1024 = vmatpush1.msra.mxu0 %v974
      %1025 = vmatprep.subr.mxu0 0.0
      %1026 = vmatpush1.msra.mxu0 0.0
      %1027 = vmatprep.subr.mxu0 0.0
      %1028 = vmatpush1.msra.mxu0 0.0
      %1029 = vmatprep.subr.mxu0 0.0
      %1030 = vmatpush1.msra.mxu0 0.0
      %1031 = vmatprep.subr.mxu0 0.0
      %1032 = vmatpush1.msra.mxu0 0.0
      %1033 = vmatprep.subr.mxu0 0.0
      %1034 = vmatpush1.msra.mxu0 0.0
      %1035 = vmatprep.subr.mxu0 0.0
      %1036 = vmatpush1.msra.mxu0 0.0
      %1037 = vmatprep.subr.mxu0 0.0
      %1038 = vmatpush1.msra.mxu0 0.0
      %1039 = vmatprep.subr.mxu0 0.0
      %1040 = vmatpush1.msra.mxu0 0.0
      %1041 = vmatprep.subr.mxu0 0.0
      %1042 = vmatpush1.msra.mxu0 0.0
      %1043 = vmatprep.subr.mxu0 0.0
      %1044 = vmatpush1.msra.mxu0 0.0
      %1045 = vmatprep.subr.mxu0 0.0
      %1046 = vmatpush1.msra.mxu0 0.0
      %1047 = vmatprep.subr.mxu0 0.0
      %1048 = vmatpush1.msra.mxu0 0.0
      %1049 = vmatprep.subr.mxu0 0.0
      %1050 = vmatpush1.msra.mxu0 0.0
      %1051 = vmatprep.subr.mxu0 0.0
      %1052 = vmatpush1.msra.mxu0 0.0
      %1053 = vmatprep.subr.mxu0 0.0
      %1054 = vmatpush1.msra.mxu0 0.0
      %1055 = vmatprep.subr.mxu0 0.0
      %1056 = vmatpush1.msra.mxu0 0.0
      %1057 = vmatprep.subr.mxu0 0.0
      %1058 = vmatpush1.msra.mxu0 0.0
      %1059 = vmatprep.subr.mxu0 0.0
      %1060 = vmatpush1.msra.mxu0 0.0
      %1061 = vmatprep.subr.mxu0 0.0
      %1062 = vmatpush1.msra.mxu0 0.0
      %1063 = vmatprep.subr.mxu0 0.0
      %1064 = vmatpush1.msra.mxu0 0.0
      %1065 = vmatprep.subr.mxu0 0.0
      %1066 = vmatpush1.msra.mxu0 0.0
      %1067 = vmatprep.subr.mxu0 0.0
      %1068 = vmatpush1.msra.mxu0 0.0
      %1069 = vmatprep.subr.mxu0 0.0
      %1070 = vmatpush1.msra.mxu0 0.0
      %1071 = vmatprep.mubr.f32.mxu0 0.0
      %1072 = vmatmul.mubr.f32.gmra.mrb[0].mxu0 %v1005
      %v1073 = vpop.f32.mrb[0].mxu0
      %v1074 = vadd.f32 0.0, %v1073
      %v1075 = vpop.f32.mrb[0].mxu0
      %v1076 = vadd.f32 0.0, %v1075
      %1077 = vdwg.mxu0
      %1078 = vmatprep.subr.mxu0 0.0
      %1079 = vmatpush1.msra.mxu0 %v909
      %1080 = vmatprep.subr.mxu0 0.0
      %1081 = vmatpush1.msra.mxu0 %v915
      %1082 = vmatprep.subr.mxu0 0.0
      %1083 = vmatpush1.msra.mxu0 %v921
      %1084 = vmatprep.subr.mxu0 0.0
      %1085 = vmatpush1.msra.mxu0 %v927
      %1086 = vmatprep.subr.mxu0 0.0
      %1087 = vmatpush1.msra.mxu0 %v933
      %1088 = vmatprep.subr.mxu0 0.0
      %1089 = vmatpush1.msra.mxu0 %v939
      %1090 = vmatprep.subr.mxu0 0.0
      %1091 = vmatpush1.msra.mxu0 %v945
      %1092 = vmatprep.subr.mxu0 0.0
      %1093 = vmatpush1.msra.mxu0 %v951
      %1094 = vmatprep.subr.mxu0 0.0
      %1095 = vmatpush1.msra.mxu0 %v957
      %1096 = vmatprep.subr.mxu0 0.0
      %1097 = vmatpush1.msra.mxu0 0.0
      %1098 = vmatprep.subr.mxu0 0.0
      %1099 = vmatpush1.msra.mxu0 0.0
      %1100 = vmatprep.subr.mxu0 0.0
      %1101 = vmatpush1.msra.mxu0 0.0
      %1102 = vmatprep.subr.mxu0 0.0
      %1103 = vmatpush1.msra.mxu0 0.0
      %1104 = vmatprep.subr.mxu0 0.0
      %1105 = vmatpush1.msra.mxu0 0.0
      %1106 = vmatprep.subr.mxu0 0.0
      %1107 = vmatpush1.msra.mxu0 0.0
      %1108 = vmatprep.subr.mxu0 0.0
      %1109 = vmatpush1.msra.mxu0 0.0
      %1110 = vmatprep.subr.mxu0 0.0
      %1111 = vmatpush1.msra.mxu0 0.0
      %1112 = vmatprep.subr.mxu0 0.0
      %1113 = vmatpush1.msra.mxu0 0.0
      %1114 = vmatprep.subr.mxu0 0.0
      %1115 = vmatpush1.msra.mxu0 0.0
      %1116 = vmatprep.subr.mxu0 0.0
      %1117 = vmatpush1.msra.mxu0 0.0
      %1118 = vmatprep.subr.mxu0 0.0
      %1119 = vmatpush1.msra.mxu0 0.0
      %1120 = vmatprep.subr.mxu0 0.0
      %1121 = vmatpush1.msra.mxu0 0.0
      %1122 = vmatprep.subr.mxu0 0.0
      %1123 = vmatpush1.msra.mxu0 0.0
      %1124 = vmatprep.subr.mxu0 0.0
      %1125 = vmatpush1.msra.mxu0 0.0
      %1126 = vmatprep.subr.mxu0 0.0
      %1127 = vmatpush1.msra.mxu0 0.0
      %1128 = vmatprep.subr.mxu0 0.0
      %1129 = vmatpush1.msra.mxu0 0.0
      %1130 = vmatprep.subr.mxu0 0.0
      %1131 = vmatpush1.msra.mxu0 0.0
      %1132 = vmatprep.subr.mxu0 0.0
      %1133 = vmatpush1.msra.mxu0 0.0
      %1134 = vmatprep.subr.mxu0 0.0
      %1135 = vmatpush1.msra.mxu0 0.0
      %1136 = vmatprep.subr.mxu0 0.0
      %1137 = vmatpush1.msra.mxu0 0.0
      %1138 = vmatprep.subr.mxu0 0.0
      %1139 = vmatpush1.msra.mxu0 0.0
      %1140 = vmatprep.subr.mxu0 0.0
      %1141 = vmatpush1.msra.mxu0 0.0
      %1142 = vmatprep.mubr.f32.mxu0 0.0
      %1143 = vmatmul.mubr.f32.gmra.mrb[0].mxu0 %v1005
      %v1144 = vpop.f32.mrb[0].mxu0
      %v1145 = vadd.f32 0.0, %v1144
      %v1146 = vpop.f32.mrb[0].mxu0
      %1147 = vdwg.mxu0
      %v1148 = vsel %vm777, %v1074, 0.0
      %v1149 = vsel %vm778, %v1076, 0.0
      %v1150 = vsel %vm779, %v1145, 0.0
      %v1151 = vadd.f32 %v1148, %v1149
      %v1152 = vsel %vm784, %v1150, 0.0
      %v1153 = vadd.f32 %v1151, %v1152
      %1154 = vadd.xlane.f32.xlu0 %v1153
      %v1155 = vpop.xlane.xlu0 %1154
      %v1156 = vmul.f32 %v1155, 0.00390625
      %v1157 = vsub.f32 %v1074, %v1156
      %v1158 = vsub.f32 %v1076, %v1156
      %v1159 = vsub.f32 %v1145, %v1156
      %v1160 = vsel %vm777, %v1157, 0.0
      %v1161 = vsel %vm778, %v1158, 0.0
      %v1162 = vsel %vm779, %v1159, 0.0
      %v1163 = vmul.f32 %v1160, %v1160
      %v1164 = vmul.f32 %v1161, %v1161
      %v1165 = vmul.f32 %v1162, %v1162
      %v1166 = vadd.f32 %v1163, %v1164
      %v1167 = vsel %vm784, %v1165, 0.0
      %v1168 = vadd.f32 %v1166, %v1167
      %1169 = vadd.xlane.f32.xlu0 %v1168
      %v1170 = vpop.xlane.xlu0 %1169
      %v1171 = vmul.f32 %v1170, 0.00390625
      %v1172 = vadd.f32 %v1171, 1e-05
      %v1173 = vrsqrt.pop %v1172
      %v1174 = vmul.f32 %v1160, %v1173
      %v1175 = vmul.f32 %v1161, %v1173
      %v1176 = vmul.f32 %v1162, %v1173
      %v1177 = vmax.f32 %v1174, 0.0
      %v1178 = vmax.f32 %v1175, 0.0
      %v1179 = vmax.f32 %v1176, 0.0
      %v1180 = vld [vmem:[%s4] sm:$0xff]
      %v1181 = vld [vmem:[%s4 + $0x8] sm:$0xff]
      %v1182 = vld [vmem:[%s4 + $0x10] sm:$0xff]
      %v1183 = vld [vmem:[%s4 + $0x18] sm:$0xff]
      %v1184 = vld [vmem:[%s4 + $0x20] sm:$0xff]
      %v1185 = vld [vmem:[%s4 + $0x28] sm:$0xff]
      %v1186 = vld [vmem:[%s4 + $0x30] sm:$0xff]
      %v1187 = vld [vmem:[%s4 + $0x38] sm:$0xff]
      %v1188 = vld [vmem:[%s4 + $0x40] sm:$0xff]
      %v1189 = vld [vmem:[%s4 + $0x48] sm:$0xff]
      %v1190 = vld [vmem:[%s4 + $0x50] sm:$0xff]
      %v1191 = vld [vmem:[%s4 + $0x58] sm:$0xff]
      %v1192 = vld [vmem:[%s4 + $0x60] sm:$0xff]
      %v1193 = vld [vmem:[%s4 + $0x68] sm:$0xff]
      %v1194 = vld [vmem:[%s4 + $0x70] sm:$0xff]
      %v1195 = vld [vmem:[%s4 + $0x78] sm:$0xff]
      %v1196 = vld [vmem:[%s4 + $0x80] sm:$0xff]
      %v1197 = vld [vmem:[%s4 + $0x88] sm:$0xff]
      %v1198 = vld [vmem:[%s4 + $0x90] sm:$0xff]
      %v1199 = vld [vmem:[%s4 + $0x98] sm:$0xff]
      %v1200 = vld [vmem:[%s4 + $0xa0] sm:$0xff]
      %v1201 = vld [vmem:[%s4 + $0xa8] sm:$0xff]
      %v1202 = vld [vmem:[%s4 + $0xb0] sm:$0xff]
      %v1203 = vld [vmem:[%s4 + $0xb8] sm:$0xff]
      %v1204 = vld [vmem:[%s4 + $0xc0] sm:$0xff]
      %v1205 = vld [vmem:[%s4 + $0xc8] sm:$0xff]
      %v1206 = vld [vmem:[%s4 + $0xd0] sm:$0xff]
      %v1207 = vld [vmem:[%s4 + $0xd8] sm:$0xff]
      %v1208 = vld [vmem:[%s4 + $0xe0] sm:$0xff]
      %v1209 = vld [vmem:[%s4 + $0xe8] sm:$0xff]
      %v1210 = vld [vmem:[%s4 + $0xf0] sm:$0xff]
      %v1211 = vld [vmem:[%s4 + $0xf8] sm:$0xff]
      %v1212 = vld [vmem:[%s4 + $0x100] sm:$0xff]
      %v1213 = vld [vmem:[%s4 + $0x108] sm:$0xff]
      %v1214 = vld [vmem:[%s4 + $0x110] sm:$0xff]
      %v1215 = vld [vmem:[%s4 + $0x118] sm:$0xff]
      %v1216 = vld [vmem:[%s4 + $0x120] sm:$0xff]
      %v1217 = vld [vmem:[%s4 + $0x128] sm:$0xff]
      %v1218 = vld [vmem:[%s4 + $0x130] sm:$0xff]
      %v1219 = vld [vmem:[%s4 + $0x138] sm:$0xff]
      %v1220 = vld [vmem:[%s4 + $0x140] sm:$0xff]
      %v1221 = vld [vmem:[%s4 + $0x148] sm:$0xff]
      %v1222 = vld [vmem:[%s4 + $0x150] sm:$0xff]
      %v1223 = vld [vmem:[%s4 + $0x158] sm:$0xff]
      %v1224 = vld [vmem:[%s4 + $0x160] sm:$0xff]
      %v1225 = vld [vmem:[%s4 + $0x168] sm:$0xff]
      %v1226 = vld [vmem:[%s4 + $0x170] sm:$0xff]
      %v1227 = vld [vmem:[%s4 + $0x178] sm:$0xff]
      %v1228 = vld [vmem:[%s4 + $0x180] sm:$0xff]
      %v1229 = vld [vmem:[%s4 + $0x188] sm:$0xff]
      %v1230 = vld [vmem:[%s4 + $0x190] sm:$0xff]
      %v1231 = vld [vmem:[%s4 + $0x198] sm:$0xff]
      %v1232 = vld [vmem:[%s4 + $0x1a0] sm:$0xff]
      %v1233 = vld [vmem:[%s4 + $0x1a8] sm:$0xff]
      %v1234 = vld [vmem:[%s4 + $0x1b0] sm:$0xff]
      %v1235 = vld [vmem:[%s4 + $0x1b8] sm:$0xff]
      %v1236 = vld [vmem:[%s4 + $0x1c0] sm:$0xff]
      %v1237 = vld [vmem:[%s4 + $0x1c8] sm:$0xff]
      %v1238 = vld [vmem:[%s4 + $0x1d0] sm:$0xff]
      %v1239 = vld [vmem:[%s4 + $0x1d8] sm:$0xff]
      %v1240 = vld [vmem:[%s4 + $0x1e0] sm:$0xff]
      %v1241 = vld [vmem:[%s4 + $0x1e8] sm:$0xff]
      %v1242 = vld [vmem:[%s4 + $0x1f0] sm:$0xff]
      %v1243 = vld [vmem:[%s4 + $0x1f8] sm:$0xff]
      %v1244 = vld [vmem:[%s4 + $0x200] sm:$0xff]
      %v1245 = vld [vmem:[%s4 + $0x208] sm:$0xff]
      %v1246 = vld [vmem:[%s4 + $0x210] sm:$0xff]
      %v1247 = vld [vmem:[%s4 + $0x218] sm:$0xff]
      %v1248 = vld [vmem:[%s4 + $0x220] sm:$0xff]
      %v1249 = vld [vmem:[%s4 + $0x228] sm:$0xff]
      %v1250 = vld [vmem:[%s4 + $0x230] sm:$0xff]
      %v1251 = vld [vmem:[%s4 + $0x238] sm:$0xff]
      %v1252 = vld [vmem:[%s4 + $0x240] sm:$0xff]
      %v1253 = vld [vmem:[%s4 + $0x248] sm:$0xff]
      %v1254 = vld [vmem:[%s4 + $0x250] sm:$0xff]
      %v1255 = vld [vmem:[%s4 + $0x258] sm:$0xff]
      %v1256 = vld [vmem:[%s4 + $0x260] sm:$0xff]
      %v1257 = vld [vmem:[%s4 + $0x268] sm:$0xff]
      %v1258 = vld [vmem:[%s4 + $0x270] sm:$0xff]
      %v1259 = vld [vmem:[%s4 + $0x278] sm:$0xff]
      %v1260 = vld [vmem:[%s4 + $0x280] sm:$0xf]
      %v1261 = vld [vmem:[%s4 + $0x288] sm:$0xf]
      %v1263 = vsel %vm784, %v1179, 0
      %v1266 = vsel %vm573, %v1260, 0
      %v1269 = vsel %vm573, %v1261, 0
      %1271 = vmatprep.subr.mxu0 %v1181
      %1272 = vmatpush1.msra.mxu0 %v1180
      %1273 = vmatprep.subr.mxu0 %v1183
      %1274 = vmatpush1.msra.mxu0 %v1182
      %1275 = vmatprep.subr.mxu0 %v1185
      %1276 = vmatpush1.msra.mxu0 %v1184
      %1277 = vmatprep.subr.mxu0 %v1187
      %1278 = vmatpush1.msra.mxu0 %v1186
      %1279 = vmatprep.subr.mxu0 %v1189
      %1280 = vmatpush1.msra.mxu0 %v1188
      %1281 = vmatprep.subr.mxu0 %v1191
      %1282 = vmatpush1.msra.mxu0 %v1190
      %1283 = vmatprep.subr.mxu0 %v1193
      %1284 = vmatpush1.msra.mxu0 %v1192
      %1285 = vmatprep.subr.mxu0 %v1195
      %1286 = vmatpush1.msra.mxu0 %v1194
      %1287 = vmatprep.subr.mxu0 %v1197
      %1288 = vmatpush1.msra.mxu0 %v1196
      %1289 = vmatprep.subr.mxu0 %v1199
      %1290 = vmatpush1.msra.mxu0 %v1198
      %1291 = vmatprep.subr.mxu0 %v1201
      %1292 = vmatpush1.msra.mxu0 %v1200
      %1293 = vmatprep.subr.mxu0 %v1203
      %1294 = vmatpush1.msra.mxu0 %v1202
      %1295 = vmatprep.subr.mxu0 %v1205
      %1296 = vmatpush1.msra.mxu0 %v1204
      %1297 = vmatprep.subr.mxu0 %v1207
      %1298 = vmatpush1.msra.mxu0 %v1206
      %1299 = vmatprep.subr.mxu0 %v1209
      %1300 = vmatpush1.msra.mxu0 %v1208
      %1301 = vmatprep.subr.mxu0 %v1211
      %1302 = vmatpush1.msra.mxu0 %v1210
      %1303 = vmatprep.subr.mxu0 %v1213
      %1304 = vmatpush1.msra.mxu0 %v1212
      %1305 = vmatprep.subr.mxu0 %v1215
      %1306 = vmatpush1.msra.mxu0 %v1214
      %1307 = vmatprep.subr.mxu0 %v1217
      %1308 = vmatpush1.msra.mxu0 %v1216
      %1309 = vmatprep.subr.mxu0 %v1219
      %1310 = vmatpush1.msra.mxu0 %v1218
      %1311 = vmatprep.subr.mxu0 %v1221
      %1312 = vmatpush1.msra.mxu0 %v1220
      %1313 = vmatprep.subr.mxu0 %v1223
      %1314 = vmatpush1.msra.mxu0 %v1222
      %1315 = vmatprep.subr.mxu0 %v1225
      %1316 = vmatpush1.msra.mxu0 %v1224
      %1317 = vmatprep.subr.mxu0 %v1227
      %1318 = vmatpush1.msra.mxu0 %v1226
      %1319 = vmatprep.subr.mxu0 %v1229
      %1320 = vmatpush1.msra.mxu0 %v1228
      %1321 = vmatprep.subr.mxu0 %v1231
      %1322 = vmatpush1.msra.mxu0 %v1230
      %1323 = vmatprep.subr.mxu0 %v1233
      %1324 = vmatpush1.msra.mxu0 %v1232
      %1325 = vmatprep.subr.mxu0 %v1235
      %1326 = vmatpush1.msra.mxu0 %v1234
      %1327 = vmatprep.subr.mxu0 %v1237
      %1328 = vmatpush1.msra.mxu0 %v1236
      %1329 = vmatprep.subr.mxu0 %v1239
      %1330 = vmatpush1.msra.mxu0 %v1238
      %1331 = vmatprep.subr.mxu0 %v1241
      %1332 = vmatpush1.msra.mxu0 %v1240
      %1333 = vmatprep.subr.mxu0 %v1243
      %1334 = vmatpush1.msra.mxu0 %v1242
      %1335 = vmatprep.mubr.f32.mxu0 %v1178
      %1336 = vmatmul.mubr.f32.gmra.mrb[0].mxu0 %v1177
      %v1337 = vpop.f32.mrb[0].mxu0
      %v1338 = vadd.f32 0.0, %v1337
      %v1339 = vpop.f32.mrb[0].mxu0
      %v1340 = vadd.f32 0.0, %v1339
      %1341 = vdwg.mxu0
      %1342 = vmatprep.subr.mxu0 %v1245
      %1343 = vmatpush1.msra.mxu0 %v1244
      %1344 = vmatprep.subr.mxu0 %v1247
      %1345 = vmatpush1.msra.mxu0 %v1246
      %1346 = vmatprep.subr.mxu0 %v1249
      %1347 = vmatpush1.msra.mxu0 %v1248
      %1348 = vmatprep.subr.mxu0 %v1251
      %1349 = vmatpush1.msra.mxu0 %v1250
      %1350 = vmatprep.subr.mxu0 %v1253
      %1351 = vmatpush1.msra.mxu0 %v1252
      %1352 = vmatprep.subr.mxu0 %v1255
      %1353 = vmatpush1.msra.mxu0 %v1254
      %1354 = vmatprep.subr.mxu0 %v1257
      %1355 = vmatpush1.msra.mxu0 %v1256
      %1356 = vmatprep.subr.mxu0 %v1259
      %1357 = vmatpush1.msra.mxu0 %v1258
      %1358 = vmatprep.subr.mxu0 %v1269
      %1359 = vmatpush1.msra.mxu0 %v1266
      %1360 = vmatprep.subr.mxu0 0.0
      %1361 = vmatpush1.msra.mxu0 0.0
      %1362 = vmatprep.subr.mxu0 0.0
      %1363 = vmatpush1.msra.mxu0 0.0
      %1364 = vmatprep.subr.mxu0 0.0
      %1365 = vmatpush1.msra.mxu0 0.0
      %1366 = vmatprep.subr.mxu0 0.0
      %1367 = vmatpush1.msra.mxu0 0.0
      %1368 = vmatprep.subr.mxu0 0.0
      %1369 = vmatpush1.msra.mxu0 0.0
      %1370 = vmatprep.subr.mxu0 0.0
      %1371 = vmatpush1.msra.mxu0 0.0
      %1372 = vmatprep.subr.mxu0 0.0
      %1373 = vmatpush1.msra.mxu0 0.0
      %1374 = vmatprep.subr.mxu0 0.0
      %1375 = vmatpush1.msra.mxu0 0.0
      %1376 = vmatprep.subr.mxu0 0.0
      %1377 = vmatpush1.msra.mxu0 0.0
      %1378 = vmatprep.subr.mxu0 0.0
      %1379 = vmatpush1.msra.mxu0 0.0
      %1380 = vmatprep.subr.mxu0 0.0
      %1381 = vmatpush1.msra.mxu0 0.0
      %1382 = vmatprep.subr.mxu0 0.0
      %1383 = vmatpush1.msra.mxu0 0.0
      %1384 = vmatprep.subr.mxu0 0.0
      %1385 = vmatpush1.msra.mxu0 0.0
      %1386 = vmatprep.subr.mxu0 0.0
      %1387 = vmatpush1.msra.mxu0 0.0
      %1388 = vmatprep.subr.mxu0 0.0
      %1389 = vmatpush1.msra.mxu0 0.0
      %1390 = vmatprep.subr.mxu0 0.0
      %1391 = vmatpush1.msra.mxu0 0.0
      %1392 = vmatprep.subr.mxu0 0.0
      %1393 = vmatpush1.msra.mxu0 0.0
      %1394 = vmatprep.subr.mxu0 0.0
      %1395 = vmatpush1.msra.mxu0 0.0
      %1396 = vmatprep.subr.mxu0 0.0
      %1397 = vmatpush1.msra.mxu0 0.0
      %1398 = vmatprep.subr.mxu0 0.0
      %1399 = vmatpush1.msra.mxu0 0.0
      %1400 = vmatprep.subr.mxu0 0.0
      %1401 = vmatpush1.msra.mxu0 0.0
      %1402 = vmatprep.subr.mxu0 0.0
      %1403 = vmatpush1.msra.mxu0 0.0
      %1404 = vmatprep.subr.mxu0 0.0
      %1405 = vmatpush1.msra.mxu0 0.0
      %1406 = vmatprep.mubr.f32.mxu0 0.0
      %1407 = vmatmul.mubr.f32.gmra.mrb[0].mxu0 %v1263
      %v1408 = vpop.f32.mrb[0].mxu0
      %v1409 = vadd.f32 %v1338, %v1408
      %v1410 = vpop.f32.mrb[0].mxu0
      %v1411 = vadd.f32 %v1340, %v1410
      %1412 = vdwg.mxu0
      %1415 = vrot.lane.b32.xlu0 %v1177, 127
      %v1416 = vpop.permute.xlu0 %1415
      %1417 = vrot.lane.b32.xlu0 %v1178, 127
      %v1418 = vpop.permute.xlu0 %1417
      %1419 = vrot.lane.b32.xlu0 %v1179, 127
      %v1420 = vpop.permute.xlu0 %1419
      %v1421 = vsel %vm474, %v1416, %v1418
      %v1422 = vsel %vm474, %v1418, %v1420
      %v1426 = vmax.f32 %v1177, %v1421
      %v1427 = vmax.f32 %v1178, %v1422
      %v1428 = vmax.f32 %v1179, %v1420
      %1432 = vrot.lane.b32.xlu0 %v1426, 110
      %v1433 = vpop.permute.xlu0 %1432
      %1434 = vrot.lane.b32.xlu0 %v1427, 110
      %v1435 = vpop.permute.xlu0 %1434
      %1436 = vrot.lane.b32.xlu0 %v1428, 110
      %v1437 = vpop.permute.xlu0 %1436
      %v1438 = vsel %vm498, %v1433, %v1435
      %v1439 = vsel %vm498, %v1435, %v1437
      %v1443 = vmax.f32 %v1426, %v1438
      %v1444 = vmax.f32 %v1427, %v1439
      %v1445 = vmax.f32 %v1428, %v1437
      %1446 = vst [vmem:[%s444] sm:$0xff] %v1409
      %1447 = vst [vmem:[%s444 + $0x8] sm:$0xff] %v1411
      %v1448 = vld [vmem:[%s5] sm:$0xff]
      %v1449 = vld [vmem:[%s5 + $0x8] sm:$0xff]
      %v1450 = vld [vmem:[%s5 + $0x10] sm:$0xff]
      %v1451 = vld [vmem:[%s5 + $0x18] sm:$0xff]
      %v1452 = vld [vmem:[%s5 + $0x20] sm:$0xff]
      %v1453 = vld [vmem:[%s5 + $0x28] sm:$0xff]
      %v1454 = vld [vmem:[%s5 + $0x30] sm:$0xff]
      %v1455 = vld [vmem:[%s5 + $0x38] sm:$0xff]
      %v1456 = vld [vmem:[%s5 + $0x40] sm:$0xff]
      %v1457 = vld [vmem:[%s5 + $0x48] sm:$0xff]
      %v1458 = vld [vmem:[%s5 + $0x50] sm:$0xff]
      %v1459 = vld [vmem:[%s5 + $0x58] sm:$0xff]
      %v1460 = vld [vmem:[%s5 + $0x60] sm:$0xff]
      %v1461 = vld [vmem:[%s5 + $0x68] sm:$0xff]
      %v1462 = vld [vmem:[%s5 + $0x70] sm:$0xff]
      %v1463 = vld [vmem:[%s5 + $0x78] sm:$0xff]
      %v1464 = vld [vmem:[%s5 + $0x80] sm:$0xff]
      %v1465 = vld [vmem:[%s5 + $0x88] sm:$0xff]
      %v1466 = vld [vmem:[%s5 + $0x90] sm:$0xff]
      %v1467 = vld [vmem:[%s5 + $0x98] sm:$0xff]
      %v1468 = vld [vmem:[%s5 + $0xa0] sm:$0xff]
      %v1469 = vld [vmem:[%s5 + $0xa8] sm:$0xff]
      %v1470 = vld [vmem:[%s5 + $0xb0] sm:$0xff]
      %v1471 = vld [vmem:[%s5 + $0xb8] sm:$0xff]
      %v1472 = vld [vmem:[%s5 + $0xc0] sm:$0xff]
      %v1473 = vld [vmem:[%s5 + $0xc8] sm:$0xff]
      %v1474 = vld [vmem:[%s5 + $0xd0] sm:$0xff]
      %v1475 = vld [vmem:[%s5 + $0xd8] sm:$0xff]
      %v1476 = vld [vmem:[%s5 + $0xe0] sm:$0xff]
      %v1477 = vld [vmem:[%s5 + $0xe8] sm:$0xff]
      %v1478 = vld [vmem:[%s5 + $0xf0] sm:$0xff]
      %v1479 = vld [vmem:[%s5 + $0xf8] sm:$0xff]
      %v1480 = vld [vmem:[%s5 + $0x100] sm:$0xff]
      %v1481 = vld [vmem:[%s5 + $0x108] sm:$0xff]
      %v1482 = vld [vmem:[%s5 + $0x110] sm:$0xff]
      %v1483 = vld [vmem:[%s5 + $0x118] sm:$0xff]
      %v1484 = vld [vmem:[%s5 + $0x120] sm:$0xff]
      %v1485 = vld [vmem:[%s5 + $0x128] sm:$0xff]
      %v1486 = vld [vmem:[%s5 + $0x130] sm:$0x1]
      %vm1487 = vcmask 400384
      %v1489 = vsel %vm1487, %v1445, 0
      %v1492 = vsel %vm561, %v1486, 0
      %1494 = vmatprep.subr.mxu0 0.0
      %1495 = vmatpush1.msra.mxu0 %v1448
      %1496 = vmatprep.subr.mxu0 0.0
      %1497 = vmatpush1.msra.mxu0 %v1449
      %1498 = vmatprep.subr.mxu0 0.0
      %1499 = vmatpush1.msra.mxu0 %v1450
      %1500 = vmatprep.subr.mxu0 0.0
      %1501 = vmatpush1.msra.mxu0 %v1451
      %1502 = vmatprep.subr.mxu0 0.0
      %1503 = vmatpush1.msra.mxu0 %v1452
      %1504 = vmatprep.subr.mxu0 0.0
      %1505 = vmatpush1.msra.mxu0 %v1453
      %1506 = vmatprep.subr.mxu0 0.0
      %1507 = vmatpush1.msra.mxu0 %v1454
      %1508 = vmatprep.subr.mxu0 0.0
      %1509 = vmatpush1.msra.mxu0 %v1455
      %1510 = vmatprep.subr.mxu0 0.0
      %1511 = vmatpush1.msra.mxu0 %v1456
      %1512 = vmatprep.subr.mxu0 0.0
      %1513 = vmatpush1.msra.mxu0 %v1457
      %1514 = vmatprep.subr.mxu0 0.0
      %1515 = vmatpush1.msra.mxu0 %v1458
      %1516 = vmatprep.subr.mxu0 0.0
      %1517 = vmatpush1.msra.mxu0 %v1459
      %1518 = vmatprep.subr.mxu0 0.0
      %1519 = vmatpush1.msra.mxu0 %v1460
      %1520 = vmatprep.subr.mxu0 0.0
      %1521 = vmatpush1.msra.mxu0 %v1461
      %1522 = vmatprep.subr.mxu0 0.0
      %1523 = vmatpush1.msra.mxu0 %v1462
      %1524 = vmatprep.subr.mxu0 0.0
      %1525 = vmatpush1.msra.mxu0 %v1463
      %1526 = vmatprep.subr.mxu0 0.0
      %1527 = vmatpush1.msra.mxu0 %v1464
      %1528 = vmatprep.subr.mxu0 0.0
      %1529 = vmatpush1.msra.mxu0 %v1465
      %1530 = vmatprep.subr.mxu0 0.0
      %1531 = vmatpush1.msra.mxu0 %v1466
      %1532 = vmatprep.subr.mxu0 0.0
      %1533 = vmatpush1.msra.mxu0 %v1467
      %1534 = vmatprep.subr.mxu0 0.0
      %1535 = vmatpush1.msra.mxu0 %v1468
      %1536 = vmatprep.subr.mxu0 0.0
      %1537 = vmatpush1.msra.mxu0 %v1469
      %1538 = vmatprep.subr.mxu0 0.0
      %1539 = vmatpush1.msra.mxu0 %v1470
      %1540 = vmatprep.subr.mxu0 0.0
      %1541 = vmatpush1.msra.mxu0 %v1471
      %1542 = vmatprep.subr.mxu0 0.0
      %1543 = vmatpush1.msra.mxu0 %v1472
      %1544 = vmatprep.subr.mxu0 0.0
      %1545 = vmatpush1.msra.mxu0 %v1473
      %1546 = vmatprep.subr.mxu0 0.0
      %1547 = vmatpush1.msra.mxu0 %v1474
      %1548 = vmatprep.subr.mxu0 0.0
      %1549 = vmatpush1.msra.mxu0 %v1475
      %1550 = vmatprep.subr.mxu0 0.0
      %1551 = vmatpush1.msra.mxu0 %v1476
      %1552 = vmatprep.subr.mxu0 0.0
      %1553 = vmatpush1.msra.mxu0 %v1477
      %1554 = vmatprep.subr.mxu0 0.0
      %1555 = vmatpush1.msra.mxu0 %v1478
      %1556 = vmatprep.subr.mxu0 0.0
      %1557 = vmatpush1.msra.mxu0 %v1479
      %1558 = vmatprep.mubr.f32.mxu0 %v1444
      %1559 = vmatmul.mubr.f32.gmra.mrb[0].mxu0 %v1443
      %v1560 = vpop.f32.mrb[0].mxu0
      %v1561 = vadd.f32 0.0, %v1560
      %v1562 = vpop.f32.mrb[0].mxu0
      %1563 = vdwg.mxu0
      %1564 = vmatprep.subr.mxu0 0.0
      %1565 = vmatpush1.msra.mxu0 %v1480
      %1566 = vmatprep.subr.mxu0 0.0
      %1567 = vmatpush1.msra.mxu0 %v1481
      %1568 = vmatprep.subr.mxu0 0.0
      %1569 = vmatpush1.msra.mxu0 %v1482
      %1570 = vmatprep.subr.mxu0 0.0
      %1571 = vmatpush1.msra.mxu0 %v1483
      %1572 = vmatprep.subr.mxu0 0.0
      %1573 = vmatpush1.msra.mxu0 %v1484
      %1574 = vmatprep.subr.mxu0 0.0
      %1575 = vmatpush1.msra.mxu0 %v1485
      %1576 = vmatprep.subr.mxu0 0.0
      %1577 = vmatpush1.msra.mxu0 %v1492
      %1578 = vmatprep.subr.mxu0 0.0
      %1579 = vmatpush1.msra.mxu0 0.0
      %1580 = vmatprep.subr.mxu0 0.0
      %1581 = vmatpush1.msra.mxu0 0.0
      %1582 = vmatprep.subr.mxu0 0.0
      %1583 = vmatpush1.msra.mxu0 0.0
      %1584 = vmatprep.subr.mxu0 0.0
      %1585 = vmatpush1.msra.mxu0 0.0
      %1586 = vmatprep.subr.mxu0 0.0
      %1587 = vmatpush1.msra.mxu0 0.0
      %1588 = vmatprep.subr.mxu0 0.0
      %1589 = vmatpush1.msra.mxu0 0.0
      %1590 = vmatprep.subr.mxu0 0.0
      %1591 = vmatpush1.msra.mxu0 0.0
      %1592 = vmatprep.subr.mxu0 0.0
      %1593 = vmatpush1.msra.mxu0 0.0
      %1594 = vmatprep.subr.mxu0 0.0
      %1595 = vmatpush1.msra.mxu0 0.0
      %1596 = vmatprep.subr.mxu0 0.0
      %1597 = vmatpush1.msra.mxu0 0.0
      %1598 = vmatprep.subr.mxu0 0.0
      %1599 = vmatpush1.msra.mxu0 0.0
      %1600 = vmatprep.subr.mxu0 0.0
      %1601 = vmatpush1.msra.mxu0 0.0
      %1602 = vmatprep.subr.mxu0 0.0
      %1603 = vmatpush1.msra.mxu0 0.0
      %1604 = vmatprep.subr.mxu0 0.0
      %1605 = vmatpush1.msra.mxu0 0.0
      %1606 = vmatprep.subr.mxu0 0.0
      %1607 = vmatpush1.msra.mxu0 0.0
      %1608 = vmatprep.subr.mxu0 0.0
      %1609 = vmatpush1.msra.mxu0 0.0
      %1610 = vmatprep.subr.mxu0 0.0
      %1611 = vmatpush1.msra.mxu0 0.0
      %1612 = vmatprep.subr.mxu0 0.0
      %1613 = vmatpush1.msra.mxu0 0.0
      %1614 = vmatprep.subr.mxu0 0.0
      %1615 = vmatpush1.msra.mxu0 0.0
      %1616 = vmatprep.subr.mxu0 0.0
      %1617 = vmatpush1.msra.mxu0 0.0
      %1618 = vmatprep.subr.mxu0 0.0
      %1619 = vmatpush1.msra.mxu0 0.0
      %1620 = vmatprep.subr.mxu0 0.0
      %1621 = vmatpush1.msra.mxu0 0.0
      %1622 = vmatprep.subr.mxu0 0.0
      %1623 = vmatpush1.msra.mxu0 0.0
      %1624 = vmatprep.subr.mxu0 0.0
      %1625 = vmatpush1.msra.mxu0 0.0
      %1626 = vmatprep.subr.mxu0 0.0
      %1627 = vmatpush1.msra.mxu0 0.0
      %1628 = vmatprep.mubr.f32.mxu0 0.0
      %1629 = vmatmul.mubr.f32.gmra.mrb[0].mxu0 %v1489
      %v1630 = vpop.f32.mrb[0].mxu0
      %v1631 = vadd.f32 %v1561, %v1630
      %v1632 = vpop.f32.mrb[0].mxu0
      %1633 = vdwg.mxu0
      %1635 = vrot.lane.b32.xlu0 %v1631, 32
      %v1636 = vpop.permute.xlu0 %1635
      %1638 = vst.msk [vmem:[#allocation4] sm:$0xff] %vm828, %v1636
      %vm1639 = vcmask 31744
      %1640 = vst.msk [vmem:[#allocation4 + $0x8] sm:$0xff] %vm1639, %v1636
      %v1641 = vld [vmem:[%s8] sm:$0x1]
      %vm1642 = vcmp.gt.f32.partialorder %v1641, 0.5
      %v1643 = vld [vmem:[#allocation4] sm:$0xff]
      %v1644 = vld [vmem:[#allocation4 + $0x8] sm:$0xff]
      %1646 = vrot.lane.b32.xlu0 %v1643, 127
      %v1647 = vpop.permute.xlu0 %1646
      %1648 = vrot.lane.b32.xlu0 %v1643, 126
      %v1649 = vpop.permute.xlu0 %1648
      %1651 = vrot.lane.b32.xlu0 %v1643, 118
      %v1652 = vpop.permute.xlu0 %1651
      %1653 = vrot.lane.b32.xlu0 %v1644, 118
      %v1654 = vpop.permute.xlu0 %1653
      %vm1655 = vcmask 965632
      %v1656 = vsel %vm1655, %v1652, %v1654
      %1657 = vrot.lane.b32.xlu0 %v1643, 117
      %v1658 = vpop.permute.xlu0 %1657
      %1659 = vrot.lane.b32.xlu0 %v1644, 117
      %v1660 = vpop.permute.xlu0 %1659
      %vm1661 = vcmask 957440
      %v1662 = vsel %vm1661, %v1658, %v1660
      %1663 = vrot.lane.b32.xlu0 %v1643, 116
      %v1664 = vpop.permute.xlu0 %1663
      %1665 = vrot.lane.b32.xlu0 %v1644, 116
      %v1666 = vpop.permute.xlu0 %1665
      %vm1667 = vcmask 949248
      %v1668 = vsel %vm1667, %v1664, %v1666
      %1669 = vrot.lane.b32.xlu0 %v1643, 108
      %v1670 = vpop.permute.xlu0 %1669
      %1671 = vrot.lane.b32.xlu0 %v1644, 108
      %v1672 = vpop.permute.xlu0 %1671
      %v1673 = vsel %vm522, %v1670, %v1672
      %1674 = vrot.lane.b32.xlu0 %v1643, 107
      %v1675 = vpop.permute.xlu0 %1674
      %1676 = vrot.lane.b32.xlu0 %v1644, 107
      %v1677 = vpop.permute.xlu0 %1676
      %vm1678 = vcmask 875520
      %v1679 = vsel %vm1678, %v1675, %v1677
      %1680 = vrot.lane.b32.xlu0 %v1643, 106
      %v1681 = vpop.permute.xlu0 %1680
      %1682 = vrot.lane.b32.xlu0 %v1644, 106
      %v1683 = vpop.permute.xlu0 %1682
      %vm1684 = vcmask 867328
      %v1685 = vsel %vm1684, %v1681, %v1683
      %v1686 = vld [vmem:[%s6] sm:$0xf]
      %1687 = vrot.lane.b32.xlu0 %v1647, 107
      %v1688 = vpop.permute.xlu0 %1687
      %1689 = vrot.lane.b32.xlu0 %v1649, 107
      %v1690 = vpop.permute.xlu0 %1689
      %1691 = vrot.lane.b32.xlu0 %v1656, 107
      %v1692 = vpop.permute.xlu0 %1691
      %1693 = vrot.lane.b32.xlu0 %v1662, 107
      %v1694 = vpop.permute.xlu0 %1693
      %1695 = vrot.lane.b32.xlu0 %v1668, 107
      %v1696 = vpop.permute.xlu0 %1695
      %1697 = vrot.lane.b32.xlu0 %v1673, 107
      %v1698 = vpop.permute.xlu0 %1697
      %1699 = vrot.lane.b32.xlu0 %v1679, 107
      %v1700 = vpop.permute.xlu0 %1699
      %1701 = vrot.lane.b32.xlu0 %v1685, 107
      %v1702 = vpop.permute.xlu0 %1701
      %v1713 = vsel %vm1003, %v1686, 0
      %1715 = vmatprep.subr.mxu0 0.0
      %1716 = vmatpush1.msra.mxu0 %v1675
      %1717 = vmatprep.subr.mxu0 0.0
      %1718 = vmatpush1.msra.mxu0 %v1688
      %1719 = vmatprep.subr.mxu0 0.0
      %1720 = vmatpush1.msra.mxu0 %v1690
      %1721 = vmatprep.subr.mxu0 0.0
      %1722 = vmatpush1.msra.mxu0 %v1692
      %1723 = vmatprep.subr.mxu0 0.0
      %1724 = vmatpush1.msra.mxu0 %v1694
      %1725 = vmatprep.subr.mxu0 0.0
      %1726 = vmatpush1.msra.mxu0 %v1696
      %1727 = vmatprep.subr.mxu0 0.0
      %1728 = vmatpush1.msra.mxu0 %v1698
      %1729 = vmatprep.subr.mxu0 0.0
      %1730 = vmatpush1.msra.mxu0 %v1700
      %1731 = vmatprep.subr.mxu0 0.0
      %1732 = vmatpush1.msra.mxu0 %v1702
      %1733 = vmatprep.subr.mxu0 0.0
      %1734 = vmatpush1.msra.mxu0 0.0
      %1735 = vmatprep.subr.mxu0 0.0
      %1736 = vmatpush1.msra.mxu0 0.0
      %1737 = vmatprep.subr.mxu0 0.0
      %1738 = vmatpush1.msra.mxu0 0.0
      %1739 = vmatprep.subr.mxu0 0.0
      %1740 = vmatpush1.msra.mxu0 0.0
      %1741 = vmatprep.subr.mxu0 0.0
      %1742 = vmatpush1.msra.mxu0 0.0
      %1743 = vmatprep.subr.mxu0 0.0
      %1744 = vmatpush1.msra.mxu0 0.0
      %1745 = vmatprep.subr.mxu0 0.0
      %1746 = vmatpush1.msra.mxu0 0.0
      %1747 = vmatprep.subr.mxu0 0.0
      %1748 = vmatpush1.msra.mxu0 0.0
      %1749 = vmatprep.subr.mxu0 0.0
      %1750 = vmatpush1.msra.mxu0 0.0
      %1751 = vmatprep.subr.mxu0 0.0
      %1752 = vmatpush1.msra.mxu0 0.0
      %1753 = vmatprep.subr.mxu0 0.0
      %1754 = vmatpush1.msra.mxu0 0.0
      %1755 = vmatprep.subr.mxu0 0.0
      %1756 = vmatpush1.msra.mxu0 0.0
      %1757 = vmatprep.subr.mxu0 0.0
      %1758 = vmatpush1.msra.mxu0 0.0
      %1759 = vmatprep.subr.mxu0 0.0
      %1760 = vmatpush1.msra.mxu0 0.0
      %1761 = vmatprep.subr.mxu0 0.0
      %1762 = vmatpush1.msra.mxu0 0.0
      %1763 = vmatprep.subr.mxu0 0.0
      %1764 = vmatpush1.msra.mxu0 0.0
      %1765 = vmatprep.subr.mxu0 0.0
      %1766 = vmatpush1.msra.mxu0 0.0
      %1767 = vmatprep.subr.mxu0 0.0
      %1768 = vmatpush1.msra.mxu0 0.0
      %1769 = vmatprep.subr.mxu0 0.0
      %1770 = vmatpush1.msra.mxu0 0.0
      %1771 = vmatprep.subr.mxu0 0.0
      %1772 = vmatpush1.msra.mxu0 0.0
      %1773 = vmatprep.subr.mxu0 0.0
      %1774 = vmatpush1.msra.mxu0 0.0
      %1775 = vmatprep.subr.mxu0 0.0
      %1776 = vmatpush1.msra.mxu0 0.0
      %1777 = vmatprep.subr.mxu0 0.0
      %1778 = vmatpush1.msra.mxu0 0.0
      %1779 = vmatprep.mubr.f32.mxu0 0.0
      %1780 = vmatmul.mubr.f32.gmra.mrb[0].mxu0 %v1713
      %v1781 = vpop.f32.mrb[0].mxu0
      %v1782 = vadd.f32 0.0, %v1781
      %v1783 = vpop.f32.mrb[0].mxu0
      %1784 = vdwg.mxu0
      %v1785 = vsel %vm1642, 1, 0
      %v1786 = vlaneseq
      %v1787 = vshrl.u32 %v1786, 7
      %v1788 = vsub.s32 0, %v1787
      %v1789 = vrot.slane %v1785, %v1788
      %vm1790 = vcmp.eq.s32.totalorder %v1789, 1
      %v1791 = vsel %vm1790, %v1782, 0.0
      %vm1792 = vcmask 814080
      %v1793 = vsel %vm1792, %v1791, 0.0
      %1794 = vadd.xlane.f32.xlu0 %v1793
      %v1795 = vpop.xlane.xlu0 %1794
      %v1796 = vmul.f32 %v1795, 0.015625
      %v1797 = vsub.f32 %v1782, %v1796
      %v1798 = vsel %vm1790, %v1797, 0.0
      %v1799 = vmul.f32 %v1798, %v1798
      %v1800 = vsel %vm1792, %v1799, 0.0
      %1801 = vadd.xlane.f32.xlu0 %v1800
      %v1802 = vpop.xlane.xlu0 %1801
      %v1803 = vmul.f32 %v1802, 0.015625
      %v1804 = vadd.f32 %v1803, 1e-05
      %v1805 = vrsqrt.pop %v1804
      %v1806 = vmul.f32 %v1798, %v1805
      %v1807 = vmax.f32 %v1806, 0.0
      %1809 = vrot.lane.b32.xlu0 %v1807, 32
      %v1810 = vpop.permute.xlu0 %1809
      %v1811 = vrot.slane %v1810, 4
      %v1812 = vsel %vm822, %v1811, %v1810
      %vm1814 = vcmask 1043712
      %vm1815 = vcmask 31748
      %vm1816 = vmor %vm1815, %vm1814
      %1817 = vst.msk [vmem:[#allocation3] sm:$0xff] %vm1816, %v1812
      %v1818 = vld [vmem:[#allocation3] sm:$0xf]
      %v1819 = vld [vmem:[#allocation3] sm:$0xff]
      %v1821 = vcombine.low %v1818, %v1818
      %1822 = vrot.lane.b32.xlu0 %v1821, 127
      %v1823 = vpop.permute.xlu0 %1822
      %1825 = vrot.lane.b32.xlu0 %v1818, 126
      %v1826 = vpop.permute.xlu0 %1825
      %v1829 = vcombine.low %v1819, %v1819
      %1830 = vrot.lane.b32.xlu0 %v1829, 118
      %v1831 = vpop.permute.xlu0 %1830
      %1832 = vrot.lane.b32.xlu0 %v1819, 118
      %v1833 = vpop.permute.xlu0 %1832
      %v1834 = vsel %vm1655, %v1831, %v1833
      %v1836 = vcombine.high %v1819, %v1819
      %1837 = vrot.lane.b32.xlu0 %v1819, 117
      %v1838 = vpop.permute.xlu0 %1837
      %1839 = vrot.lane.b32.xlu0 %v1836, 117
      %v1840 = vpop.permute.xlu0 %1839
      %v1841 = vsel %vm1661, %v1838, %v1840
      %1843 = vrot.lane.b32.xlu0 %v1829, 116
      %v1844 = vpop.permute.xlu0 %1843
      %1845 = vrot.lane.b32.xlu0 %v1819, 116
      %v1846 = vpop.permute.xlu0 %1845
      %v1847 = vsel %vm1667, %v1844, %v1846
      %1849 = vrot.lane.b32.xlu0 %v1819, 108
      %v1850 = vpop.permute.xlu0 %1849
      %1851 = vrot.lane.b32.xlu0 %v1836, 108
      %v1852 = vpop.permute.xlu0 %1851
      %v1853 = vsel %vm522, %v1850, %v1852
      %1855 = vrot.lane.b32.xlu0 %v1829, 107
      %v1856 = vpop.permute.xlu0 %1855
      %1857 = vrot.lane.b32.xlu0 %v1819, 107
      %v1858 = vpop.permute.xlu0 %1857
      %v1859 = vsel %vm1678, %v1856, %v1858
      %1861 = vrot.lane.b32.xlu0 %v1819, 106
      %v1862 = vpop.permute.xlu0 %1861
      %1863 = vrot.lane.b32.xlu0 %v1836, 106
      %v1864 = vpop.permute.xlu0 %1863
      %v1865 = vsel %vm1684, %v1862, %v1864
      %v1866 = vsel %vm573, %v1818, %v1823
      %v1867 = vsel %vm573, %v1826, %v1834
      %v1868 = vsel %vm573, %v1841, %v1847
      %v1869 = vsel %vm573, %v1853, %v1859
      %v1870 = vld [vmem:[%s7] sm:$0xf]
      %1875 = vrot.lane.b32.xlu0 %v1866, 107
      %v1876 = vpop.permute.xlu0 %1875
      %1877 = vrot.lane.b32.xlu0 %v1867, 107
      %v1878 = vpop.permute.xlu0 %1877
      %1879 = vrot.lane.b32.xlu0 %v1868, 107
      %v1880 = vpop.permute.xlu0 %1879
      %1881 = vrot.lane.b32.xlu0 %v1869, 107
      %v1882 = vpop.permute.xlu0 %1881
      %1883 = vrot.lane.b32.xlu0 %v1865, 107
      %v1884 = vpop.permute.xlu0 %1883
      %vm1889 = vcmask 293888
      %v1891 = vsel %vm1889, %v1870, 0
      %v1893 = vsel %vm573, %v1884, 0
      %1895 = vmatprep.subr.mxu0 0.0
      %1896 = vmatpush1.msra.mxu0 %v1876
      %1897 = vmatprep.subr.mxu0 0.0
      %1898 = vmatpush1.msra.mxu0 %v1878
      %1899 = vmatprep.subr.mxu0 0.0
      %1900 = vmatpush1.msra.mxu0 %v1880
      %1901 = vmatprep.subr.mxu0 0.0
      %1902 = vmatpush1.msra.mxu0 %v1882
      %1903 = vmatprep.subr.mxu0 0.0
      %1904 = vmatpush1.msra.mxu0 %v1893
      %1905 = vmatprep.subr.mxu0 0.0
      %1906 = vmatpush1.msra.mxu0 0.0
      %1907 = vmatprep.subr.mxu0 0.0
      %1908 = vmatpush1.msra.mxu0 0.0
      %1909 = vmatprep.subr.mxu0 0.0
      %1910 = vmatpush1.msra.mxu0 0.0
      %1911 = vmatprep.subr.mxu0 0.0
      %1912 = vmatpush1.msra.mxu0 0.0
      %1913 = vmatprep.subr.mxu0 0.0
      %1914 = vmatpush1.msra.mxu0 0.0
      %1915 = vmatprep.subr.mxu0 0.0
      %1916 = vmatpush1.msra.mxu0 0.0
      %1917 = vmatprep.subr.mxu0 0.0
      %1918 = vmatpush1.msra.mxu0 0.0
      %1919 = vmatprep.subr.mxu0 0.0
      %1920 = vmatpush1.msra.mxu0 0.0
      %1921 = vmatprep.subr.mxu0 0.0
      %1922 = vmatpush1.msra.mxu0 0.0
      %1923 = vmatprep.subr.mxu0 0.0
      %1924 = vmatpush1.msra.mxu0 0.0
      %1925 = vmatprep.subr.mxu0 0.0
      %1926 = vmatpush1.msra.mxu0 0.0
      %1927 = vmatprep.subr.mxu0 0.0
      %1928 = vmatpush1.msra.mxu0 0.0
      %1929 = vmatprep.subr.mxu0 0.0
      %1930 = vmatpush1.msra.mxu0 0.0
      %1931 = vmatprep.subr.mxu0 0.0
      %1932 = vmatpush1.msra.mxu0 0.0
      %1933 = vmatprep.subr.mxu0 0.0
      %1934 = vmatpush1.msra.mxu0 0.0
      %1935 = vmatprep.subr.mxu0 0.0
      %1936 = vmatpush1.msra.mxu0 0.0
      %1937 = vmatprep.subr.mxu0 0.0
      %1938 = vmatpush1.msra.mxu0 0.0
      %1939 = vmatprep.subr.mxu0 0.0
      %1940 = vmatpush1.msra.mxu0 0.0
      %1941 = vmatprep.subr.mxu0 0.0
      %1942 = vmatpush1.msra.mxu0 0.0
      %1943 = vmatprep.subr.mxu0 0.0
      %1944 = vmatpush1.msra.mxu0 0.0
      %1945 = vmatprep.subr.mxu0 0.0
      %1946 = vmatpush1.msra.mxu0 0.0
      %1947 = vmatprep.subr.mxu0 0.0
      %1948 = vmatpush1.msra.mxu0 0.0
      %1949 = vmatprep.subr.mxu0 0.0
      %1950 = vmatpush1.msra.mxu0 0.0
      %1951 = vmatprep.subr.mxu0 0.0
      %1952 = vmatpush1.msra.mxu0 0.0
      %1953 = vmatprep.subr.mxu0 0.0
      %1954 = vmatpush1.msra.mxu0 0.0
      %1955 = vmatprep.subr.mxu0 0.0
      %1956 = vmatpush1.msra.mxu0 0.0
      %1957 = vmatprep.subr.mxu0 0.0
      %1958 = vmatpush1.msra.mxu0 0.0
      %1959 = vmatprep.mubr.f32.mxu0 0.0
      %1960 = vmatmul.mubr.f32.gmra.mrb[0].mxu0 %v1891
      %v1961 = vpop.f32.mrb[0].mxu0
      %v1962 = vadd.f32 0.0, %v1961
      %v1963 = vpop.f32.mrb[0].mxu0
      %1964 = vdwg.mxu0
      %v1965 = vsel %vm1790, %v1962, 0.0
      %v1966 = vsel %vm1792, %v1965, 0.0
      %1967 = vadd.xlane.f32.xlu0 %v1966
      %v1968 = vpop.xlane.xlu0 %1967
      %v1969 = vmul.f32 %v1968, 0.015625
      %v1970 = vsub.f32 %v1962, %v1969
      %v1971 = vsel %vm1790, %v1970, 0.0
      %v1972 = vmul.f32 %v1971, %v1971
      %v1973 = vsel %vm1792, %v1972, 0.0
      %1974 = vadd.xlane.f32.xlu0 %v1973
      %v1975 = vpop.xlane.xlu0 %1974
      %v1976 = vmul.f32 %v1975, 0.015625
      %v1977 = vadd.f32 %v1976, 1e-05
      %v1978 = vrsqrt.pop %v1977
      %v1979 = vmul.f32 %v1971, %v1978
      %v1980 = vmax.f32 %v1979, 0.0
      %v1981 = vld [vmem:[%s9] sm:$0xff]
      %v1982 = vld [vmem:[%s9 + $0x8] sm:$0xff]
      %v1983 = vld [vmem:[%s9 + $0x10] sm:$0xff]
      %v1984 = vld [vmem:[%s9 + $0x18] sm:$0xff]
      %v1985 = vld [vmem:[%s9 + $0x20] sm:$0xff]
      %v1986 = vld [vmem:[%s9 + $0x28] sm:$0xff]
      %v1987 = vld [vmem:[%s9 + $0x30] sm:$0xff]
      %v1988 = vld [vmem:[%s9 + $0x38] sm:$0xff]
      %v1989 = vld [vmem:[%s9 + $0x40] sm:$0xff]
      %v1990 = vld [vmem:[%s9 + $0x48] sm:$0xff]
      %v1991 = vld [vmem:[%s9 + $0x50] sm:$0xff]
      %v1992 = vld [vmem:[%s9 + $0x58] sm:$0xff]
      %v1993 = vld [vmem:[%s9 + $0x60] sm:$0xf]
      %v1995 = vsel %vm831, %v1980, 0
      %v1998 = vsel %vm573, %v1993, 0
      %2000 = vmatprep.subr.mxu0 0.0
      %2001 = vmatpush1.msra.mxu0 %v1981
      %2002 = vmatprep.subr.mxu0 0.0
      %2003 = vmatpush1.msra.mxu0 %v1982
      %2004 = vmatprep.subr.mxu0 0.0
      %2005 = vmatpush1.msra.mxu0 %v1983
      %2006 = vmatprep.subr.mxu0 0.0
      %2007 = vmatpush1.msra.mxu0 %v1984
      %2008 = vmatprep.subr.mxu0 0.0
      %2009 = vmatpush1.msra.mxu0 %v1985
      %2010 = vmatprep.subr.mxu0 0.0
      %2011 = vmatpush1.msra.mxu0 %v1986
      %2012 = vmatprep.subr.mxu0 0.0
      %2013 = vmatpush1.msra.mxu0 %v1987
      %2014 = vmatprep.subr.mxu0 0.0
      %2015 = vmatpush1.msra.mxu0 %v1988
      %2016 = vmatprep.subr.mxu0 0.0
      %2017 = vmatpush1.msra.mxu0 %v1989
      %2018 = vmatprep.subr.mxu0 0.0
      %2019 = vmatpush1.msra.mxu0 %v1990
      %2020 = vmatprep.subr.mxu0 0.0
      %2021 = vmatpush1.msra.mxu0 %v1991
      %2022 = vmatprep.subr.mxu0 0.0
      %2023 = vmatpush1.msra.mxu0 %v1992
      %2024 = vmatprep.subr.mxu0 0.0
      %2025 = vmatpush1.msra.mxu0 %v1998
      %2026 = vmatprep.subr.mxu0 0.0
      %2027 = vmatpush1.msra.mxu0 0.0
      %2028 = vmatprep.subr.mxu0 0.0
      %2029 = vmatpush1.msra.mxu0 0.0
      %2030 = vmatprep.subr.mxu0 0.0
      %2031 = vmatpush1.msra.mxu0 0.0
      %2032 = vmatprep.subr.mxu0 0.0
      %2033 = vmatpush1.msra.mxu0 0.0
      %2034 = vmatprep.subr.mxu0 0.0
      %2035 = vmatpush1.msra.mxu0 0.0
      %2036 = vmatprep.subr.mxu0 0.0
      %2037 = vmatpush1.msra.mxu0 0.0
      %2038 = vmatprep.subr.mxu0 0.0
      %2039 = vmatpush1.msra.mxu0 0.0
      %2040 = vmatprep.subr.mxu0 0.0
      %2041 = vmatpush1.msra.mxu0 0.0
      %2042 = vmatprep.subr.mxu0 0.0
      %2043 = vmatpush1.msra.mxu0 0.0
      %2044 = vmatprep.subr.mxu0 0.0
      %2045 = vmatpush1.msra.mxu0 0.0
      %2046 = vmatprep.subr.mxu0 0.0
      %2047 = vmatpush1.msra.mxu0 0.0
      %2048 = vmatprep.subr.mxu0 0.0
      %2049 = vmatpush1.msra.mxu0 0.0
      %2050 = vmatprep.subr.mxu0 0.0
      %2051 = vmatpush1.msra.mxu0 0.0
      %2052 = vmatprep.subr.mxu0 0.0
      %2053 = vmatpush1.msra.mxu0 0.0
      %2054 = vmatprep.subr.mxu0 0.0
      %2055 = vmatpush1.msra.mxu0 0.0
      %2056 = vmatprep.subr.mxu0 0.0
      %2057 = vmatpush1.msra.mxu0 0.0
      %2058 = vmatprep.subr.mxu0 0.0
      %2059 = vmatpush1.msra.mxu0 0.0
      %2060 = vmatprep.subr.mxu0 0.0
      %2061 = vmatpush1.msra.mxu0 0.0
      %2062 = vmatprep.subr.mxu0 0.0
      %2063 = vmatpush1.msra.mxu0 0.0
      %2064 = vmatprep.mubr.f32.mxu0 0.0
      %2065 = vmatmul.mubr.f32.gmra.mrb[0].mxu0 %v1995
      %v2066 = vpop.f32.mrb[0].mxu0
      %v2067 = vadd.f32 0.0, %v2066
      %v2068 = vpop.f32.mrb[0].mxu0
      %2069 = vdwg.mxu0
      %2070 = vrot.lane.b32.xlu0 %v1980, 127
      %v2071 = vpop.permute.xlu0 %2070
      %v2073 = vmax.f32 %v1980, %v2071
      %2075 = vrot.lane.b32.xlu0 %v2073, 118
      %v2076 = vpop.permute.xlu0 %2075
      %v2078 = vmax.f32 %v2073, %v2076
      %v2079 = vlaneseq
      %vm2080 = vcmp.ge.s32.totalorder %v2079, 0
      %vm2081 = vcmp.lt.s32.totalorder %v2079, 64
      %vm2082 = vmand %vm2080, %vm2081
      %2083 = vst.msk [vmem:[%s448] sm:$0x1] %vm2082, %v2067
      %v2086 = vunpack.c.l.s4 1966171168
      %v2087 = vunpack.c.0.s8 %v2086
      %v2088 = vlaneseq
      %v2089 = vshrl.u32 %v2088, 7
      %v2090 = vsub.s32 %v2087, %v2089
      %v2091 = vrot.slane %v2067, %v2090
      %v2092 = vcombine.high %v2091, %v2091
      %v2094 = vunpack.c.l.s4 1966171168
      %v2095 = vunpack.c.0.s8 %v2094
      %v2096 = vlaneseq
      %v2097 = vshrl.u32 %v2096, 7
      %v2098 = vsub.s32 %v2095, %v2097
      %v2099 = vrot.slane %v2091, %v2098
      %v2101 = vunpack.c.l.s4 1966171168
      %v2102 = vunpack.c.0.s8 %v2101
      %v2103 = vlaneseq
      %v2104 = vshrl.u32 %v2103, 7
      %v2105 = vsub.s32 %v2102, %v2104
      %v2106 = vrot.slane %v2092, %v2105
      %2107 = vrot.lane.b32.xlu0 %v2106, 64
      %v2108 = vpop.permute.xlu0 %2107
      %vm2110 = vcmp.ge.s32.totalorder %v2079, 64
      %vm2111 = vcmp.lt.s32.totalorder %v2079, 128
      %vm2112 = vmand %vm2110, %vm2111
      %2113 = vst.msk [vmem:[%s448] sm:$0x1] %vm2112, %v2108
      %v2114 = vcombine.high %v2099, %v2099
      %2116 = vst.msk [vmem:[%s448 + $0x1] sm:$0x1] %vm2082, %v2114
      %v2117 = vcombine.high %v2106, %v2106
      %2118 = vrot.lane.b32.xlu0 %v2117, 64
      %v2119 = vpop.permute.xlu0 %2118
      %2121 = vst.msk [vmem:[%s448 + $0x1] sm:$0x1] %vm2112, %v2119
      %v2123 = vrot.slane %v2078, 1
      %2124 = vrot.lane.b32.xlu0 %v2123, 89
      %v2125 = vpop.permute.xlu0 %2124
      %v2127 = vrot.slane %v2078, 2
      %2128 = vrot.lane.b32.xlu0 %v2127, 50
      %v2129 = vpop.permute.xlu0 %2128
      %v2131 = vrot.slane %v2078, 3
      %2132 = vrot.lane.b32.xlu0 %v2131, 11
      %v2133 = vpop.permute.xlu0 %2132
      %vm2135 = vcmask 728064
      %v2136 = vsel %vm2135, %v2078, %v2125
      %vm2137 = vcmask 408576
      %v2138 = vsel %vm2137, %v2125, %v2129
      %vm2139 = vcmask 89088
      %v2140 = vsel %vm2139, %v2129, %v2133
      %v2141 = vld [vmem:[%s10] sm:$0xff]
      %v2142 = vld [vmem:[%s10 + $0x8] sm:$0xff]
      %v2143 = vld [vmem:[%s10 + $0x10] sm:$0xff]
      %v2144 = vld [vmem:[%s10 + $0x18] sm:$0xff]
      %v2145 = vld [vmem:[%s10 + $0x20] sm:$0xff]
      %v2146 = vld [vmem:[%s10 + $0x28] sm:$0xff]
      %v2147 = vld [vmem:[%s10 + $0x30] sm:$0xff]
      %v2148 = vld [vmem:[%s10 + $0x38] sm:$0xff]
      %v2149 = vld [vmem:[%s10 + $0x40] sm:$0xff]
      %v2150 = vld [vmem:[%s10 + $0x48] sm:$0xff]
      %v2151 = vld [vmem:[%s10 + $0x50] sm:$0xff]
      %v2152 = vld [vmem:[%s10 + $0x58] sm:$0xff]
      %v2153 = vld [vmem:[%s10 + $0x60] sm:$0xff]
      %v2154 = vld [vmem:[%s10 + $0x68] sm:$0xff]
      %v2155 = vld [vmem:[%s10 + $0x70] sm:$0xff]
      %v2156 = vld [vmem:[%s10 + $0x78] sm:$0xff]
      %v2157 = vld [vmem:[%s10 + $0x80] sm:$0xff]
      %v2158 = vld [vmem:[%s10 + $0x88] sm:$0xff]
      %v2159 = vld [vmem:[%s10 + $0x90] sm:$0xff]
      %v2160 = vld [vmem:[%s10 + $0x98] sm:$0xff]
      %v2161 = vld [vmem:[%s10 + $0xa0] sm:$0xff]
      %v2162 = vld [vmem:[%s10 + $0xa8] sm:$0xff]
      %v2163 = vld [vmem:[%s10 + $0xb0] sm:$0xff]
      %v2164 = vld [vmem:[%s10 + $0xb8] sm:$0xff]
      %v2165 = vld [vmem:[%s10 + $0xc0] sm:$0xff]
      %v2166 = vld [vmem:[%s10 + $0xc8] sm:$0xff]
      %v2167 = vld [vmem:[%s10 + $0xd0] sm:$0xff]
      %v2168 = vld [vmem:[%s10 + $0xd8] sm:$0xff]
      %v2169 = vld [vmem:[%s10 + $0xe0] sm:$0xff]
      %v2170 = vld [vmem:[%s10 + $0xe8] sm:$0xff]
      %v2171 = vld [vmem:[%s10 + $0xf0] sm:$0xff]
      %v2172 = vld [vmem:[%s10 + $0xf8] sm:$0xff]
      %v2173 = vld [vmem:[%s10 + $0x100] sm:$0xff]
      %v2174 = vld [vmem:[%s10 + $0x108] sm:$0xff]
      %v2175 = vld [vmem:[%s10 + $0x110] sm:$0xff]
      %v2176 = vld [vmem:[%s10 + $0x118] sm:$0xff]
      %v2177 = vld [vmem:[%s10 + $0x120] sm:$0xff]
      %v2178 = vld [vmem:[%s10 + $0x128] sm:$0xff]
      %v2179 = vld [vmem:[%s10 + $0x130] sm:$0xff]
      %v2180 = vld [vmem:[%s10 + $0x138] sm:$0xff]
      %v2181 = vld [vmem:[%s10 + $0x140] sm:$0xff]
      %v2182 = vld [vmem:[%s10 + $0x148] sm:$0xff]
      %v2183 = vld [vmem:[%s10 + $0x150] sm:$0xff]
      %v2184 = vld [vmem:[%s10 + $0x158] sm:$0xff]
      %v2185 = vld [vmem:[%s10 + $0x160] sm:$0xf]
      %v2186 = vld [vmem:[%s11] sm:$0x1]
      %v2188 = vsel %vm831, %v2140, 0
      %v2191 = vsel %vm573, %v2185, 0
      %2193 = vmatprep.subr.mxu0 0.0
      %2194 = vmatpush1.msra.mxu0 %v2141
      %2195 = vmatprep.subr.mxu0 0.0
      %2196 = vmatpush1.msra.mxu0 %v2142
      %2197 = vmatprep.subr.mxu0 0.0
      %2198 = vmatpush1.msra.mxu0 %v2143
      %2199 = vmatprep.subr.mxu0 0.0
      %2200 = vmatpush1.msra.mxu0 %v2144
      %2201 = vmatprep.subr.mxu0 0.0
      %2202 = vmatpush1.msra.mxu0 %v2145
      %2203 = vmatprep.subr.mxu0 0.0
      %2204 = vmatpush1.msra.mxu0 %v2146
      %2205 = vmatprep.subr.mxu0 0.0
      %2206 = vmatpush1.msra.mxu0 %v2147
      %2207 = vmatprep.subr.mxu0 0.0
      %2208 = vmatpush1.msra.mxu0 %v2148
      %2209 = vmatprep.subr.mxu0 0.0
      %2210 = vmatpush1.msra.mxu0 %v2149
      %2211 = vmatprep.subr.mxu0 0.0
      %2212 = vmatpush1.msra.mxu0 %v2150
      %2213 = vmatprep.subr.mxu0 0.0
      %2214 = vmatpush1.msra.mxu0 %v2151
      %2215 = vmatprep.subr.mxu0 0.0
      %2216 = vmatpush1.msra.mxu0 %v2152
      %2217 = vmatprep.subr.mxu0 0.0
      %2218 = vmatpush1.msra.mxu0 %v2153
      %2219 = vmatprep.subr.mxu0 0.0
      %2220 = vmatpush1.msra.mxu0 %v2154
      %2221 = vmatprep.subr.mxu0 0.0
      %2222 = vmatpush1.msra.mxu0 %v2155
      %2223 = vmatprep.subr.mxu0 0.0
      %2224 = vmatpush1.msra.mxu0 %v2156
      %2225 = vmatprep.subr.mxu0 0.0
      %2226 = vmatpush1.msra.mxu0 %v2157
      %2227 = vmatprep.subr.mxu0 0.0
      %2228 = vmatpush1.msra.mxu0 %v2158
      %2229 = vmatprep.subr.mxu0 0.0
      %2230 = vmatpush1.msra.mxu0 %v2159
      %2231 = vmatprep.subr.mxu0 0.0
      %2232 = vmatpush1.msra.mxu0 %v2160
      %2233 = vmatprep.subr.mxu0 0.0
      %2234 = vmatpush1.msra.mxu0 %v2161
      %2235 = vmatprep.subr.mxu0 0.0
      %2236 = vmatpush1.msra.mxu0 %v2162
      %2237 = vmatprep.subr.mxu0 0.0
      %2238 = vmatpush1.msra.mxu0 %v2163
      %2239 = vmatprep.subr.mxu0 0.0
      %2240 = vmatpush1.msra.mxu0 %v2164
      %2241 = vmatprep.subr.mxu0 0.0
      %2242 = vmatpush1.msra.mxu0 %v2165
      %2243 = vmatprep.subr.mxu0 0.0
      %2244 = vmatpush1.msra.mxu0 %v2166
      %2245 = vmatprep.subr.mxu0 0.0
      %2246 = vmatpush1.msra.mxu0 %v2167
      %2247 = vmatprep.subr.mxu0 0.0
      %2248 = vmatpush1.msra.mxu0 %v2168
      %2249 = vmatprep.subr.mxu0 0.0
      %2250 = vmatpush1.msra.mxu0 %v2169
      %2251 = vmatprep.subr.mxu0 0.0
      %2252 = vmatpush1.msra.mxu0 %v2170
      %2253 = vmatprep.subr.mxu0 0.0
      %2254 = vmatpush1.msra.mxu0 %v2171
      %2255 = vmatprep.subr.mxu0 0.0
      %2256 = vmatpush1.msra.mxu0 %v2172
      %2257 = vmatprep.mubr.f32.mxu0 %v2138
      %2258 = vmatmul.mubr.f32.gmra.mrb[0].mxu0 %v2136
      %v2259 = vpop.f32.mrb[0].mxu0
      %v2260 = vadd.f32 %v2186, %v2259
      %v2261 = vpop.f32.mrb[0].mxu0
      %2262 = vdwg.mxu0
      %2263 = vmatprep.subr.mxu0 0.0
      %2264 = vmatpush1.msra.mxu0 %v2173
      %2265 = vmatprep.subr.mxu0 0.0
      %2266 = vmatpush1.msra.mxu0 %v2174
      %2267 = vmatprep.subr.mxu0 0.0
      %2268 = vmatpush1.msra.mxu0 %v2175
      %2269 = vmatprep.subr.mxu0 0.0
      %2270 = vmatpush1.msra.mxu0 %v2176
      %2271 = vmatprep.subr.mxu0 0.0
      %2272 = vmatpush1.msra.mxu0 %v2177
      %2273 = vmatprep.subr.mxu0 0.0
      %2274 = vmatpush1.msra.mxu0 %v2178
      %2275 = vmatprep.subr.mxu0 0.0
      %2276 = vmatpush1.msra.mxu0 %v2179
      %2277 = vmatprep.subr.mxu0 0.0
      %2278 = vmatpush1.msra.mxu0 %v2180
      %2279 = vmatprep.subr.mxu0 0.0
      %2280 = vmatpush1.msra.mxu0 %v2181
      %2281 = vmatprep.subr.mxu0 0.0
      %2282 = vmatpush1.msra.mxu0 %v2182
      %2283 = vmatprep.subr.mxu0 0.0
      %2284 = vmatpush1.msra.mxu0 %v2183
      %2285 = vmatprep.subr.mxu0 0.0
      %2286 = vmatpush1.msra.mxu0 %v2184
      %2287 = vmatprep.subr.mxu0 0.0
      %2288 = vmatpush1.msra.mxu0 %v2191
      %2289 = vmatprep.subr.mxu0 0.0
      %2290 = vmatpush1.msra.mxu0 0.0
      %2291 = vmatprep.subr.mxu0 0.0
      %2292 = vmatpush1.msra.mxu0 0.0
      %2293 = vmatprep.subr.mxu0 0.0
      %2294 = vmatpush1.msra.mxu0 0.0
      %2295 = vmatprep.subr.mxu0 0.0
      %2296 = vmatpush1.msra.mxu0 0.0
      %2297 = vmatprep.subr.mxu0 0.0
      %2298 = vmatpush1.msra.mxu0 0.0
      %2299 = vmatprep.subr.mxu0 0.0
      %2300 = vmatpush1.msra.mxu0 0.0
      %2301 = vmatprep.subr.mxu0 0.0
      %2302 = vmatpush1.msra.mxu0 0.0
      %2303 = vmatprep.subr.mxu0 0.0
      %2304 = vmatpush1.msra.mxu0 0.0
      %2305 = vmatprep.subr.mxu0 0.0
      %2306 = vmatpush1.msra.mxu0 0.0
      %2307 = vmatprep.subr.mxu0 0.0
      %2308 = vmatpush1.msra.mxu0 0.0
      %2309 = vmatprep.subr.mxu0 0.0
      %2310 = vmatpush1.msra.mxu0 0.0
      %2311 = vmatprep.subr.mxu0 0.0
      %2312 = vmatpush1.msra.mxu0 0.0
      %2313 = vmatprep.subr.mxu0 0.0
      %2314 = vmatpush1.msra.mxu0 0.0
      %2315 = vmatprep.subr.mxu0 0.0
      %2316 = vmatpush1.msra.mxu0 0.0
      %2317 = vmatprep.subr.mxu0 0.0
      %2318 = vmatpush1.msra.mxu0 0.0
      %2319 = vmatprep.subr.mxu0 0.0
      %2320 = vmatpush1.msra.mxu0 0.0
      %2321 = vmatprep.subr.mxu0 0.0
      %2322 = vmatpush1.msra.mxu0 0.0
      %2323 = vmatprep.subr.mxu0 0.0
      %2324 = vmatpush1.msra.mxu0 0.0
      %2325 = vmatprep.subr.mxu0 0.0
      %2326 = vmatpush1.msra.mxu0 0.0
      %2327 = vmatprep.mubr.f32.mxu0 0.0
      %2328 = vmatmul.mubr.f32.gmra.mrb[0].mxu0 %v2188
      %v2329 = vpop.f32.mrb[0].mxu0
      %v2330 = vadd.f32 %v2260, %v2329
      %v2331 = vpop.f32.mrb[0].mxu0
      %2332 = vdwg.mxu0
      %vm2333 = vcmp.lt.s32.totalorder %v2079, 4
      %vm2334 = vmand %vm2080, %vm2333
      %2335 = vst.msk [vmem:[%s448 + $0x2] sm:$0x1] %vm2334, %v2330
      %p2336 = scmp.lt.s32.totalorder %s25, 1
      %s2337 = scalar_select %p2336, %s25, 1
      %s2338 = smul.addr %s2337, 2
      %s2339 = smul.addr %s2338, 8
      %s2340 = scalar_lea.vmem %s12, %s2339
      %p2341 = scmp.lt.s32.totalorder %s25, 1
      %s2342 = scalar_select %p2341, %s25, 1
      %s2343 = smul.addr %s2342, 3
      %s2344 = scalar_lea.vmem %s13, %s2343
      // Predicated region
      $region69: #{encoder_forward.1} parent=67 // pred_check
        %p2345 = pneg %p300
      $region70: #{encoder_forward.1} parent=67 // pred_check_branch
        %2347 = sbr.rel (%p2345) target = $region72
      $region71: #{encoder_forward.1} parent=67 // pred_region
        _
      $region72: #{encoder_forward.1} parent=67 // pred_fallthru
        _
      // Predicated region
      $region73: #{encoder_forward.1} parent=67 // pred_check
        %p2348 = pneg %p326
      $region74: #{encoder_forward.1} parent=67 // pred_check_branch
        %2350 = sbr.rel (%p2348) target = $region76
      $region75: #{encoder_forward.1} parent=67 // pred_region
        _
      $region76: #{encoder_forward.1} parent=67 // pred_fallthru
        _
    $region68: #{encoder_forward.1} parent=5 // pred_fallthru
      _
    %p2351 = scmp.le.s32.totalorder 2, %s20
    // Predicated region
    $region77: #{encoder_forward.1} parent=5 // pred_check
      %p2352 = pneg %p2351
    $region78: #{encoder_forward.1} parent=5 // pred_check_branch
      %2354 = sbr.rel (%p2352) target = $region80
    $region79: #{encoder_forward.1} parent=5 // pred_region
      %s2355 = ssub.s32 %s20, 2
      // Predicated region
      $region81: #{encoder_forward.1} parent=79 // pred_check
        %p2356 = pneg %p306
      $region82: #{encoder_forward.1} parent=79 // pred_check_branch
        %2358 = sbr.rel (%p2356) target = $region84
      $region83: #{encoder_forward.1} parent=79 // pred_region
        %p2359 = scmp.lt.s32.totalorder %s26, 1
        %s2360 = scalar_select %p2359, %s26, 1
        %s2361 = smul.addr %s2360, 2
        %s2362 = smul.addr %s2361, 8
        %s2363 = scalar_lea.vmem %s12, %s2362
      $region84: #{encoder_forward.1} parent=79 // pred_fallthru
        _
      // Predicated region
      $region85: #{encoder_forward.1} parent=79 // pred_check
        %p2364 = pneg %p332
      $region86: #{encoder_forward.1} parent=79 // pred_check_branch
        %2366 = sbr.rel (%p2364) target = $region88
      $region87: #{encoder_forward.1} parent=79 // pred_region
        %p2367 = scmp.lt.s32.totalorder %s26, 1
        %s2368 = scalar_select %p2367, %s26, 1
        %s2369 = smul.addr %s2368, 3
        %s2370 = scalar_lea.vmem %s13, %s2369
      $region88: #{encoder_forward.1} parent=79 // pred_fallthru
        _
    $region80: #{encoder_forward.1} parent=5 // pred_fallthru
      _
  $region6: #{encoder_forward.1} parent=0 // loop_footer
    %s24 = sadd.s32 1, %s20
  $region7: #{encoder_forward.1} parent=0 // loop_footer_branch
    %19 = sbr.rel target = $region3
  $region8: #{encoder_forward.1} parent=0 // loop_exit
    _

</llo_original>
